<compile_context>
chip_gen: v7x
topology: tpu7x:2x2x1
jax: 0.10.0
libtpu: 0.0.40
codegen_flags: <defaults>
</compile_context>

<pallas_src>
import numpy as np

import jax
import jax.numpy as jnp
from jax.experimental import pallas as pl

# ----------------------------- hyper-params (small) -----------------------------
D_MODEL = 32
NHEAD = 4
HEAD_DIM = D_MODEL // NHEAD
DIM_FF = 64
ADAPTER_DIM = 16
NUM_LAYERS = 2
T_TGT = 8     # target sequence length
T_SRC = 8     # memory sequence length
BATCH = 2
LN_EPS = 1e-5

# --------------------- packed-parameter layout (static offsets) ------------------
# Weight slab A ("wd"): all matrices whose input dim is D.  Each segment occupies
# its own 128-lane slot so every slice starts on a lane-tile boundary.
WD_SLOT = 128
(S_SA_QKV, S_CA_Q, S_CA_KV, S_FF1, S_SA_OUT, S_CA_OUT,
 S_A1W1, S_A2W1, S_A3W1) = range(9)
NUM_WD_SLOTS = 9
# Weight slab B ("wr"): ff2 + adapter up-projections, concatenated along rows
# (row offsets are multiples of 16 -> bf16 sublane-tile aligned).
WR_FF2 = 0
WR_A1W2 = DIM_FF
WR_A2W2 = DIM_FF + ADAPTER_DIM
WR_A3W2 = DIM_FF + 2 * ADAPTER_DIM
WR_ROWS = DIM_FF + 3 * ADAPTER_DIM
# Bias / LayerNorm slab ("bv"): one vector per row, padded to 3*D columns.
(B_SA_QKV, B_CA_Q, B_CA_KV, B_FF1, B_SA_OUT, B_CA_OUT, B_FF2,
 B_N1G, B_N1B, B_N2G, B_N2B, B_N3G, B_N3B,
 B_A1B1, B_A1B2, B_A2B1, B_A2B2, B_A3B1, B_A3B2) = range(19)
BV_ROWS = 19
BV_WIDTH = 3 * D_MODEL


# ----------------------------- the fused Pallas kernel ---------------------------
def _fused_decoder_kernel(x_ref, mem_ref, mself_ref, mcross_ref,
                          wd_ref, wr_ref, bv_ref, out_ref):
    D = D_MODEL
    HD = HEAD_DIM
    A = ADAPTER_DIM

    # Hoisted loads: mem / masks loaded once for the whole stack.
    x = x_ref[...]               # (R, D)        f32, lives in values across layers
    mem_bf = mem_ref[...]        # (RS, D)       bf16 (pre-cast in the wrapper)
    m_self = mself_ref[...]      # (NHEAD*R, R)  f32 additive mask, tiled over heads
    m_cross = mcross_ref[...]    # (NHEAD*R, RS) f32 additive mask, tiled over heads

    def mm(a, b):                # MXU matmul, bf16 operands, f32 accumulation
        return jax.lax.dot_general(
            a.astype(jnp.bfloat16), b.astype(jnp.bfloat16),
            (((a.ndim - 1,), (0,)), ((), ())),
            preferred_element_type=jnp.float32)

    def mm_nt(a, b):             # a @ b.T without an XLU transpose
        return jax.lax.dot_general(
            a.astype(jnp.bfloat16), b.astype(jnp.bfloat16),
            (((1,), (1,)), ((), ())),
            preferred_element_type=jnp.float32)

    def layer_norm(v, g, b):     # f32 element-wise math (v5e-safe)
        mu = jnp.mean(v, axis=-1, keepdims=True)
        vc = v - mu
        var = jnp.mean(vc * vc, axis=-1, keepdims=True)
        return vc * jax.lax.rsqrt(var + LN_EPS) * g + b

    def adapter(v, w1, b1, w2, b2):
        h = jnp.maximum(mm(v, w1) + b1, 0.0)
        return mm(h, w2) + b2 + v

    def attention(q, k, v, w_out, b_out, mask_tiled):
        # q/k/v already projected; the 1/sqrt(HD) scale is folded into the Q weights.
        nq = q.shape[0]
        # Per-head raw scores stacked along the sublane axis -> ONE batched softmax.
        s = jnp.concatenate(
            [mm_nt(q[:, h * HD:(h + 1) * HD], k[:, h * HD:(h + 1) * HD])
             for h in range(NHEAD)], axis=0) + mask_tiled          # (NHEAD*nq, nk)
        s = s - jnp.max(s, axis=-1, keepdims=True)
        p = jnp.exp(s)
        p = p * pl.reciprocal(jnp.sum(p, axis=-1, keepdims=True), approx=True)
        # Per-head out-projection accumulation (no lane-axis concatenate).
        acc = b_out + jnp.zeros((nq, D), jnp.float32)
        for h in range(NHEAD):                                     # static unroll
            ph = p[h * nq:(h + 1) * nq, :]
            acc = acc + mm(mm(ph, v[:, h * HD:(h + 1) * HD]),
                           w_out[h * HD:(h + 1) * HD, :])
        return acc

    # ---- statically unrolled layer stack (grid dropped: only 2 layers) ----
    for l in range(NUM_LAYERS):
        wd_l = wd_ref[l]         # (D, 9*128) bf16, 128-lane aligned segments
        wr_l = wr_ref[l]         # (112, D)   bf16
        bv_l = bv_ref[l]         # (19, 3D)   f32

        def seg(slot, width):
            return wd_l[:, slot * WD_SLOT: slot * WD_SLOT + width]

        def brow(i, w):
            return bv_l[i:i + 1, 0:w]

        # ---- self-attention (fused QKV) + Adapter1 + norm1 ----
        x_bf = x.astype(jnp.bfloat16)
        qkv = mm(x_bf, seg(S_SA_QKV, 3 * D)) + brow(B_SA_QKV, 3 * D)
        sa = attention(qkv[:, 0:D], qkv[:, D:2 * D], qkv[:, 2 * D:3 * D],
                       seg(S_SA_OUT, D), brow(B_SA_OUT, D), m_self)
        x = layer_norm(
            x + adapter(sa, seg(S_A1W1, A), brow(B_A1B1, A),
                        wr_l[WR_A1W2:WR_A1W2 + A, :], brow(B_A1B2, D)),
            brow(B_N1G, D), brow(B_N1B, D))

        # ---- cross-attention (Q from x, fused K|V from memory) + Adapter2 + norm2 ----
        x_bf = x.astype(jnp.bfloat16)
        q = mm(x_bf, seg(S_CA_Q, D)) + brow(B_CA_Q, D)
        kv = mm(mem_bf, seg(S_CA_KV, 2 * D)) + brow(B_CA_KV, 2 * D)
        ca = attention(q, kv[:, 0:D], kv[:, D:2 * D],
                       seg(S_CA_OUT, D), brow(B_CA_OUT, D), m_cross)
        x = layer_norm(
            x + adapter(ca, seg(S_A2W1, A), brow(B_A2B1, A),
                        wr_l[WR_A2W2:WR_A2W2 + A, :], brow(B_A2B2, D)),
            brow(B_N2G, D), brow(B_N2B, D))

        # ---- feed-forward + Adapter3 + norm3 ----
        x_bf = x.astype(jnp.bfloat16)
        ff = mm(jnp.maximum(mm(x_bf, seg(S_FF1, DIM_FF)) + brow(B_FF1, DIM_FF), 0.0),
                wr_l[WR_FF2:WR_FF2 + DIM_FF, :]) + brow(B_FF2, D)
        x = layer_norm(
            x + adapter(ff, seg(S_A3W1, A), brow(B_A3B1, A),
                        wr_l[WR_A3W2:WR_A3W2 + A, :], brow(B_A3B2, D)),
            brow(B_N3G, D), brow(B_N3B, D))

    out_ref[...] = x


def decoder_with_adapter(src_tbd, memory_sbd, tgt_mask, wd, wr, bv):
    """Full decoder stack in one un-gridded pallas_call. src (T,B,D), memory (S,B,D)."""
    T, B, D = src_tbd.shape
    S = memory_sbd.shape[0]
    R, RS = T * B, S * B

    # (T,B,D) -> (T*B, D) is a free, contiguous reshape (no transpose kernels).
    x = src_tbd.reshape(R, D).astype(jnp.float32)
    mem = memory_sbd.reshape(RS, D).astype(jnp.bfloat16)   # pre-cast once (halves DMA)

    # Fold the per-batch constraint (and tgt_mask) into flat additive masks, then
    # tile over heads so the in-kernel softmax is one batched (NHEAD*R, .) pass.
    rb = jnp.arange(R) % B          # batch id of each target row
    rt = jnp.arange(R) // B         # time id of each target row
    cb = jnp.arange(RS) % B         # batch id of each memory row
    neg = jnp.float32(-1e9)
    m_self = jnp.where(rb[:, None] == rb[None, :],
                       tgt_mask[rt[:, None], rt[None, :]], neg).astype(jnp.float32)
    m_cross = jnp.where(rb[:, None] == cb[None, :], 0.0, neg).astype(jnp.float32)
    m_self = jnp.tile(m_self, (NHEAD, 1))      # (NHEAD*R, R)
    m_cross = jnp.tile(m_cross, (NHEAD, 1))    # (NHEAD*R, RS)

    # Whole-array VMEM blocks, no grid: total resident footprint < 0.2 MiB, so this
    # fits every generation (incl. v7x's 64 MiB VMEM) with no pipelining needed.
    # TODO(synk): at larger B*T add a row-tile grid axis marked "parallel" so v7x's
    # second TensorCore is used; pointless at B*T=16.
    out = pl.pallas_call(
        _fused_decoder_kernel,
        out_shape=jax.ShapeDtypeStruct((R, D), jnp.float32),
    )(x, mem, m_self, m_cross, wd, wr, bv)
    return out.reshape(T, B, D)


# ----------------------------- deterministic parameter init ----------------------
def init_layer_params(key, d_model, dff, adim):
    ks = jax.random.split(key, 24)

    def w(k, shape, scale=0.05):
        return (scale * jax.random.normal(k, shape)).astype(jnp.float32)

    ones = jnp.ones((1, d_model), jnp.float32)
    zeros = jnp.zeros((1, d_model), jnp.float32)
    return (
        # self-attention: in_proj (pre-transposed to (D, 3D)), out_proj (D, D)
        w(ks[0], (d_model, 3 * d_model)), w(ks[1], (1, 3 * d_model), 0.02),
        w(ks[2], (d_model, d_model)),     w(ks[3], (1, d_model), 0.02),
        # cross-attention
        w(ks[4], (d_model, 3 * d_model)), w(ks[5], (1, 3 * d_model), 0.02),
        w(ks[6], (d_model, d_model)),     w(ks[7], (1, d_model), 0.02),
        # feed-forward linear1 / linear2
        w(ks[8], (d_model, dff)),  w(ks[9], (1, dff), 0.02),
        w(ks[10], (dff, d_model)), w(ks[11], (1, d_model), 0.02),
        # norm1/2/3 (PyTorch default gamma=1, beta=0)
        ones, zeros, ones, zeros, ones, zeros,
        # Adapter1
        w(ks[12], (d_model, adim)), w(ks[13], (1, adim), 0.02),
        w(ks[14], (adim, d_model)), w(ks[15], (1, d_model), 0.02),
        # Adapter2
        w(ks[16], (d_model, adim)), w(ks[17], (1, adim), 0.02),
        w(ks[18], (adim, d_model)), w(ks[19], (1, d_model), 0.02),
        # Adapter3
        w(ks[20], (d_model, adim)), w(ks[21], (1, adim), 0.02),
        w(ks[22], (adim, d_model)), w(ks[23], (1, d_model), 0.02),
    )


def pack_layer_params(p):
    """Pack the 31 per-layer arrays into 128-lane-aligned (wd, wr, bv) slabs."""
    (sa_w, sa_b, sa_ow, sa_ob, ca_w, ca_b, ca_ow, ca_ob,
     ff1w, ff1b, ff2w, ff2b, n1g, n1b, n2g, n2b, n3g, n3b,
     a1w1, a1b1, a1w2, a1b2, a2w1, a2b1, a2w2, a2b2, a3w1, a3b1, a3w2, a3b2) = p
    D = D_MODEL
    scale = 1.0 / float(HEAD_DIM) ** 0.5
    # Fold the 1/sqrt(head_dim) score scale into the Q projections (weights + bias).
    sa_qkv_w = jnp.concatenate([sa_w[:, :D] * scale, sa_w[:, D:]], axis=1)
    sa_qkv_b = jnp.concatenate([sa_b[:, :D] * scale, sa_b[:, D:]], axis=1)
    ca_q_w, ca_q_b = ca_w[:, :D] * scale, ca_b[:, :D] * scale
    ca_kv_w, ca_kv_b = ca_w[:, D:], ca_b[:, D:]

    def slot(wmat):                              # pad each segment to its 128-lane slot
        return jnp.pad(wmat, ((0, 0), (0, WD_SLOT - wmat.shape[1])))

    wd = jnp.concatenate([slot(sa_qkv_w), slot(ca_q_w), slot(ca_kv_w), slot(ff1w),
                          slot(sa_ow), slot(ca_ow), slot(a1w1), slot(a2w1), slot(a3w1)],
                         axis=1)                                    # (D, 9*128)
    wr = jnp.concatenate([ff2w, a1w2, a2w2, a3w2], axis=0)          # (112, D)

    def row(v):
        v = v.reshape(-1)
        return jnp.pad(v, (0, BV_WIDTH - v.shape[0]))

    bv = jnp.stack([row(sa_qkv_b), row(ca_q_b), row(ca_kv_b), row(ff1b),
                    row(sa_ob), row(ca_ob), row(ff2b),
                    row(n1g), row(n1b), row(n2g), row(n2b), row(n3g), row(n3b),
                    row(a1b1), row(a1b2), row(a2b1), row(a2b2), row(a3b1), row(a3b2)])
    return wd.astype(jnp.bfloat16), wr.astype(jnp.bfloat16), bv.astype(jnp.float32)


def pack_all_layers(layers_params):
    packed = [pack_layer_params(p) for p in layers_params]
    wd = jnp.stack([q[0] for q in packed])   # (L, D, 9*128)  bf16
    wr = jnp.stack([q[1] for q in packed])   # (L, 112, D)    bf16
    bv = jnp.stack([q[2] for q in packed])   # (L, 19, 3D)    f32
    return wd, wr, bv


# ----------------------------- pure-JAX reference (for verification) -------------
def _ref_layer(x, mem, mask, p, nhead):
    (sa_w, sa_b, sa_ow, sa_ob, ca_w, ca_b, ca_ow, ca_ob,
     ff1w, ff1b, ff2w, ff2b, n1g, n1b, n2g, n2b, n3g, n3b,
     a1w1, a1b1, a1w2, a1b2, a2w1, a2b1, a2w2, a2b2, a3w1, a3b1, a3w2, a3b2) = p

    def ln(v, g, b):
        mu = v.mean(-1, keepdims=True)
        vc = v - mu
        var = (vc * vc).mean(-1, keepdims=True)
        return vc / jnp.sqrt(var + LN_EPS) * g + b

    def adapter(v, w1, b1, w2, b2):
        return jnp.maximum(v @ w1 + b1, 0.0) @ w2 + b2 + v

    def mha(q_in, kv_in, w, b, ow, ob, m):
        B, Tq, D = q_in.shape
        Tk = kv_in.shape[1]
        hd = D // nhead
        q = (q_in @ w[:, :D] + b[:, :D]).reshape(B, Tq, nhead, hd).transpose(0, 2, 1, 3)
        k = (kv_in @ w[:, D:2 * D] + b[:, D:2 * D]).reshape(B, Tk, nhead, hd).transpose(0, 2, 1, 3)
        v = (kv_in @ w[:, 2 * D:] + b[:, 2 * D:]).reshape(B, Tk, nhead, hd).transpose(0, 2, 1, 3)
        s = jnp.einsum('bhqd,bhkd->bhqk', q, k) / (hd ** 0.5)
        if m is not None:
            s = s + m[None, None]
        a = jax.nn.softmax(s, axis=-1)
        o = jnp.einsum('bhqk,bhkd->bhqd', a, v).transpose(0, 2, 1, 3).reshape(B, Tq, D)
        return o @ ow + ob

    x = ln(x + adapter(mha(x, x, sa_w, sa_b, sa_ow, sa_ob, mask), a1w1, a1b1, a1w2, a1b2), n1g, n1b)
    x = ln(x + adapter(mha(x, mem, ca_w, ca_b, ca_ow, ca_ob, None), a2w1, a2b1, a2w2, a2b2), n2g, n2b)
    ff = jnp.maximum(x @ ff1w + ff1b, 0.0) @ ff2w + ff2b
    x = ln(x + adapter(ff, a3w1, a3b1, a3w2, a3b2), n3g, n3b)
    return x


def _ref_decoder(src, memory, mask, layers_params, nhead):
    x = jnp.transpose(src, (1, 0, 2))
    mem = jnp.transpose(memory, (1, 0, 2))
    for p in layers_params:
        x = _ref_layer(x, mem, mask, p, nhead)
    return jnp.transpose(x, (1, 0, 2))


# ----------------------------- main ----------------------------------------------
if __name__ == "__main__":
    root = jax.random.PRNGKey(0)
    k_src, k_mem, k_params = jax.random.split(root, 3)

    # PyTorch seq-major inputs: src (T, B, D), memory (S, B, D), tgt_mask (T, T)
    src = jax.random.normal(k_src, (T_TGT, BATCH, D_MODEL), jnp.float32)
    memory = jax.random.normal(k_mem, (T_SRC, BATCH, D_MODEL), jnp.float32)
    rows = jnp.arange(T_TGT)[:, None]
    cols = jnp.arange(T_TGT)[None, :]
    tgt_mask = jnp.where(rows >= cols, 0.0, -1e9).astype(jnp.float32)

    layer_keys = jax.random.split(k_params, NUM_LAYERS)
    layers_params = [init_layer_params(k, D_MODEL, DIM_FF, ADAPTER_DIM) for k in layer_keys]
    wd, wr, bv = pack_all_layers(layers_params)

    fwd = jax.jit(decoder_with_adapter)
    out = jax.block_until_ready(fwd(src, memory, tgt_mask, wd, wr, bv))
    assert out.shape == (T_TGT, BATCH, D_MODEL) and out.dtype == jnp.float32

    # verify against a pure-JAX f32 reference of the same math
    with jax.default_matmul_precision("float32"):
        ref = jax.block_until_ready(_ref_decoder(src, memory, tgt_mask, layers_params, NHEAD))
    assert np.allclose(np.asarray(out), np.asarray(ref), rtol=5e-2, atol=5e-2), (
        np.abs(np.asarray(out) - np.asarray(ref)).max())

    print("KERNEL_OK")
</pallas_src>

<mosaic_0001>
module attributes {stable_mosaic.version = 11 : i64} {
  func.func @_fused_decoder_kernel(%arg0: memref<16x32xf32, #tpu.memory_space<vmem>>, %arg1: memref<16x32xbf16, #tpu.memory_space<vmem>>, %arg2: memref<64x16xf32, #tpu.memory_space<vmem>>, %arg3: memref<64x16xf32, #tpu.memory_space<vmem>>, %arg4: memref<2x32x1152xbf16, #tpu.memory_space<vmem>>, %arg5: memref<2x112x32xbf16, #tpu.memory_space<vmem>>, %arg6: memref<2x19x96xf32, #tpu.memory_space<vmem>>, %arg7: memref<16x32xf32, #tpu.memory_space<vmem>>) attributes {dimension_semantics = [], scalar_prefetch = 0 : i64, scratch_operands = 0 : i64, tpu.core_type = #tpu.core_type<tc>} {
    %c0 = arith.constant 0 : index
    %c0_0 = arith.constant 0 : index
    %0 = vector.load %arg0[%c0, %c0_0] : memref<16x32xf32, #tpu.memory_space<vmem>>, vector<16x32xf32>
    %c0_1 = arith.constant 0 : index
    %c0_2 = arith.constant 0 : index
    %1 = vector.load %arg1[%c0_1, %c0_2] : memref<16x32xbf16, #tpu.memory_space<vmem>>, vector<16x32xbf16>
    %c0_3 = arith.constant 0 : index
    %c0_4 = arith.constant 0 : index
    %2 = vector.load %arg2[%c0_3, %c0_4] : memref<64x16xf32, #tpu.memory_space<vmem>>, vector<64x16xf32>
    %c0_5 = arith.constant 0 : index
    %c0_6 = arith.constant 0 : index
    %3 = vector.load %arg3[%c0_5, %c0_6] : memref<64x16xf32, #tpu.memory_space<vmem>>, vector<64x16xf32>
    %c0_7 = arith.constant 0 : index
    %c0_8 = arith.constant 0 : index
    %c0_9 = arith.constant 0 : index
    %4 = vector.load %arg4[%c0_7, %c0_8, %c0_9] : memref<2x32x1152xbf16, #tpu.memory_space<vmem>>, vector<1x32x1152xbf16>
    %5 = vector.shape_cast %4 : vector<1x32x1152xbf16> to vector<32x1152xbf16>
    %c0_10 = arith.constant 0 : index
    %c0_11 = arith.constant 0 : index
    %c0_12 = arith.constant 0 : index
    %6 = vector.load %arg5[%c0_10, %c0_11, %c0_12] : memref<2x112x32xbf16, #tpu.memory_space<vmem>>, vector<1x112x32xbf16>
    %7 = vector.shape_cast %6 : vector<1x112x32xbf16> to vector<112x32xbf16>
    %c0_13 = arith.constant 0 : index
    %c0_14 = arith.constant 0 : index
    %c0_15 = arith.constant 0 : index
    %8 = vector.load %arg6[%c0_13, %c0_14, %c0_15] : memref<2x19x96xf32, #tpu.memory_space<vmem>>, vector<1x19x96xf32>
    %9 = vector.shape_cast %8 : vector<1x19x96xf32> to vector<19x96xf32>
    %10 = arith.truncf %0 : vector<16x32xf32> to vector<16x32xbf16>
    %11 = vector.extract_strided_slice %5 {offsets = [0, 0], sizes = [32, 96], strides = [1, 1]} : vector<32x1152xbf16> to vector<32x96xbf16>
    %cst = arith.constant dense<0.000000e+00> : vector<16x96xf32>
    %12 = tpu.matmul %10, %11, %cst {dimension_numbers = #tpu.dot_dimension_numbers<[1], [0], [0], [1], [0, 0, 1, 1], [], []>} : vector<16x32xbf16>, vector<32x96xbf16>, vector<16x96xf32> -> vector<16x96xf32>
    %13 = vector.extract_strided_slice %9 {offsets = [0, 0], sizes = [1, 96], strides = [1, 1]} : vector<19x96xf32> to vector<1x96xf32>
    %14 = vector.broadcast %13 : vector<1x96xf32> to vector<16x96xf32>
    %15 = arith.addf %12, %14 : vector<16x96xf32>
    %16 = vector.extract_strided_slice %15 {offsets = [0, 0], sizes = [16, 32], strides = [1, 1]} : vector<16x96xf32> to vector<16x32xf32>
    %17 = vector.extract_strided_slice %15 {offsets = [0, 32], sizes = [16, 32], strides = [1, 1]} : vector<16x96xf32> to vector<16x32xf32>
    %18 = vector.extract_strided_slice %15 {offsets = [0, 64], sizes = [16, 32], strides = [1, 1]} : vector<16x96xf32> to vector<16x32xf32>
    %19 = vector.extract_strided_slice %5 {offsets = [0, 512], sizes = [32, 32], strides = [1, 1]} : vector<32x1152xbf16> to vector<32x32xbf16>
    %20 = vector.extract_strided_slice %9 {offsets = [4, 0], sizes = [1, 32], strides = [1, 1]} : vector<19x96xf32> to vector<1x32xf32>
    %21 = vector.extract_strided_slice %16 {offsets = [0, 0], sizes = [16, 8], strides = [1, 1]} : vector<16x32xf32> to vector<16x8xf32>
    %22 = vector.extract_strided_slice %17 {offsets = [0, 0], sizes = [16, 8], strides = [1, 1]} : vector<16x32xf32> to vector<16x8xf32>
    %23 = arith.truncf %21 : vector<16x8xf32> to vector<16x8xbf16>
    %24 = arith.truncf %22 : vector<16x8xf32> to vector<16x8xbf16>
    %cst_16 = arith.constant dense<0.000000e+00> : vector<16x16xf32>
    %25 = tpu.matmul %23, %24, %cst_16 {dimension_numbers = #tpu.dot_dimension_numbers<[1], [1], [0], [0], [0, 0, 1, 0], [], []>} : vector<16x8xbf16>, vector<16x8xbf16>, vector<16x16xf32> -> vector<16x16xf32>
    %26 = vector.extract_strided_slice %16 {offsets = [0, 8], sizes = [16, 8], strides = [1, 1]} : vector<16x32xf32> to vector<16x8xf32>
    %27 = vector.extract_strided_slice %17 {offsets = [0, 8], sizes = [16, 8], strides = [1, 1]} : vector<16x32xf32> to vector<16x8xf32>
    %28 = arith.truncf %26 : vector<16x8xf32> to vector<16x8xbf16>
    %29 = arith.truncf %27 : vector<16x8xf32> to vector<16x8xbf16>
    %cst_17 = arith.constant dense<0.000000e+00> : vector<16x16xf32>
    %30 = tpu.matmul %28, %29, %cst_17 {dimension_numbers = #tpu.dot_dimension_numbers<[1], [1], [0], [0], [0, 0, 1, 0], [], []>} : vector<16x8xbf16>, vector<16x8xbf16>, vector<16x16xf32> -> vector<16x16xf32>
    %31 = vector.extract_strided_slice %16 {offsets = [0, 16], sizes = [16, 8], strides = [1, 1]} : vector<16x32xf32> to vector<16x8xf32>
    %32 = vector.extract_strided_slice %17 {offsets = [0, 16], sizes = [16, 8], strides = [1, 1]} : vector<16x32xf32> to vector<16x8xf32>
    %33 = arith.truncf %31 : vector<16x8xf32> to vector<16x8xbf16>
    %34 = arith.truncf %32 : vector<16x8xf32> to vector<16x8xbf16>
    %cst_18 = arith.constant dense<0.000000e+00> : vector<16x16xf32>
    %35 = tpu.matmul %33, %34, %cst_18 {dimension_numbers = #tpu.dot_dimension_numbers<[1], [1], [0], [0], [0, 0, 1, 0], [], []>} : vector<16x8xbf16>, vector<16x8xbf16>, vector<16x16xf32> -> vector<16x16xf32>
    %36 = vector.extract_strided_slice %16 {offsets = [0, 24], sizes = [16, 8], strides = [1, 1]} : vector<16x32xf32> to vector<16x8xf32>
    %37 = vector.extract_strided_slice %17 {offsets = [0, 24], sizes = [16, 8], strides = [1, 1]} : vector<16x32xf32> to vector<16x8xf32>
    %38 = arith.truncf %36 : vector<16x8xf32> to vector<16x8xbf16>
    %39 = arith.truncf %37 : vector<16x8xf32> to vector<16x8xbf16>
    %cst_19 = arith.constant dense<0.000000e+00> : vector<16x16xf32>
    %40 = tpu.matmul %38, %39, %cst_19 {dimension_numbers = #tpu.dot_dimension_numbers<[1], [1], [0], [0], [0, 0, 1, 0], [], []>} : vector<16x8xbf16>, vector<16x8xbf16>, vector<16x16xf32> -> vector<16x16xf32>
    %41 = tpu.concatenate %25, %30, %35, %40 in 0 : vector<16x16xf32>, vector<16x16xf32>, vector<16x16xf32>, vector<16x16xf32> -> vector<64x16xf32>
    %42 = arith.addf %41, %2 : vector<64x16xf32>
    %cst_20 = arith.constant dense<0xFF800000> : vector<64xf32>
    %43 = vector.multi_reduction <maximumf>, %42, %cst_20 [1] : vector<64x16xf32> to vector<64xf32>
    %44 = vector.shape_cast %43 : vector<64xf32> to vector<64x1xf32>
    %45 = vector.broadcast %44 : vector<64x1xf32> to vector<64x16xf32>
    %46 = arith.subf %42, %45 : vector<64x16xf32>
    %47 = math.exp %46 : vector<64x16xf32>
    %cst_21 = arith.constant dense<0.000000e+00> : vector<64xf32>
    %48 = vector.multi_reduction <add>, %47, %cst_21 [1] : vector<64x16xf32> to vector<64xf32>
    %49 = vector.shape_cast %48 : vector<64xf32> to vector<64x1xf32>
    %50 = tpu.reciprocal %49 {approx = true} : vector<64x1xf32> -> vector<64x1xf32>
    %51 = vector.broadcast %50 : vector<64x1xf32> to vector<64x16xf32>
    %52 = arith.mulf %47, %51 : vector<64x16xf32>
    %cst_22 = arith.constant 0.000000e+00 : f32
    %53 = vector.broadcast %cst_22 : f32 to vector<16x32xf32>
    %54 = vector.broadcast %20 : vector<1x32xf32> to vector<16x32xf32>
    %55 = arith.addf %54, %53 : vector<16x32xf32>
    %56 = vector.extract_strided_slice %52 {offsets = [0, 0], sizes = [16, 16], strides = [1, 1]} : vector<64x16xf32> to vector<16x16xf32>
    %57 = vector.extract_strided_slice %18 {offsets = [0, 0], sizes = [16, 8], strides = [1, 1]} : vector<16x32xf32> to vector<16x8xf32>
    %58 = arith.truncf %56 : vector<16x16xf32> to vector<16x16xbf16>
    %59 = arith.truncf %57 : vector<16x8xf32> to vector<16x8xbf16>
    %cst_23 = arith.constant dense<0.000000e+00> : vector<16x8xf32>
    %60 = tpu.matmul %58, %59, %cst_23 {dimension_numbers = #tpu.dot_dimension_numbers<[1], [0], [0], [1], [0, 0, 1, 1], [], []>} : vector<16x16xbf16>, vector<16x8xbf16>, vector<16x8xf32> -> vector<16x8xf32>
    %61 = vector.extract_strided_slice %19 {offsets = [0, 0], sizes = [8, 32], strides = [1, 1]} : vector<32x32xbf16> to vector<8x32xbf16>
    %62 = arith.truncf %60 : vector<16x8xf32> to vector<16x8xbf16>
    %cst_24 = arith.constant dense<0.000000e+00> : vector<16x32xf32>
    %63 = tpu.matmul %62, %61, %cst_24 {dimension_numbers = #tpu.dot_dimension_numbers<[1], [0], [0], [1], [0, 0, 1, 1], [], []>} : vector<16x8xbf16>, vector<8x32xbf16>, vector<16x32xf32> -> vector<16x32xf32>
    %64 = arith.addf %55, %63 : vector<16x32xf32>
    %65 = vector.extract_strided_slice %52 {offsets = [16, 0], sizes = [16, 16], strides = [1, 1]} : vector<64x16xf32> to vector<16x16xf32>
    %66 = vector.extract_strided_slice %18 {offsets = [0, 8], sizes = [16, 8], strides = [1, 1]} : vector<16x32xf32> to vector<16x8xf32>
    %67 = arith.truncf %65 : vector<16x16xf32> to vector<16x16xbf16>
    %68 = arith.truncf %66 : vector<16x8xf32> to vector<16x8xbf16>
    %cst_25 = arith.constant dense<0.000000e+00> : vector<16x8xf32>
    %69 = tpu.matmul %67, %68, %cst_25 {dimension_numbers = #tpu.dot_dimension_numbers<[1], [0], [0], [1], [0, 0, 1, 1], [], []>} : vector<16x16xbf16>, vector<16x8xbf16>, vector<16x8xf32> -> vector<16x8xf32>
    %70 = vector.extract_strided_slice %19 {offsets = [8, 0], sizes = [8, 32], strides = [1, 1]} : vector<32x32xbf16> to vector<8x32xbf16>
    %71 = arith.truncf %69 : vector<16x8xf32> to vector<16x8xbf16>
    %cst_26 = arith.constant dense<0.000000e+00> : vector<16x32xf32>
    %72 = tpu.matmul %71, %70, %cst_26 {dimension_numbers = #tpu.dot_dimension_numbers<[1], [0], [0], [1], [0, 0, 1, 1], [], []>} : vector<16x8xbf16>, vector<8x32xbf16>, vector<16x32xf32> -> vector<16x32xf32>
    %73 = arith.addf %64, %72 : vector<16x32xf32>
    %74 = vector.extract_strided_slice %52 {offsets = [32, 0], sizes = [16, 16], strides = [1, 1]} : vector<64x16xf32> to vector<16x16xf32>
    %75 = vector.extract_strided_slice %18 {offsets = [0, 16], sizes = [16, 8], strides = [1, 1]} : vector<16x32xf32> to vector<16x8xf32>
    %76 = arith.truncf %74 : vector<16x16xf32> to vector<16x16xbf16>
    %77 = arith.truncf %75 : vector<16x8xf32> to vector<16x8xbf16>
    %cst_27 = arith.constant dense<0.000000e+00> : vector<16x8xf32>
    %78 = tpu.matmul %76, %77, %cst_27 {dimension_numbers = #tpu.dot_dimension_numbers<[1], [0], [0], [1], [0, 0, 1, 1], [], []>} : vector<16x16xbf16>, vector<16x8xbf16>, vector<16x8xf32> -> vector<16x8xf32>
    %79 = vector.extract_strided_slice %19 {offsets = [16, 0], sizes = [8, 32], strides = [1, 1]} : vector<32x32xbf16> to vector<8x32xbf16>
    %80 = arith.truncf %78 : vector<16x8xf32> to vector<16x8xbf16>
    %cst_28 = arith.constant dense<0.000000e+00> : vector<16x32xf32>
    %81 = tpu.matmul %80, %79, %cst_28 {dimension_numbers = #tpu.dot_dimension_numbers<[1], [0], [0], [1], [0, 0, 1, 1], [], []>} : vector<16x8xbf16>, vector<8x32xbf16>, vector<16x32xf32> -> vector<16x32xf32>
    %82 = arith.addf %73, %81 : vector<16x32xf32>
    %83 = vector.extract_strided_slice %52 {offsets = [48, 0], sizes = [16, 16], strides = [1, 1]} : vector<64x16xf32> to vector<16x16xf32>
    %84 = vector.extract_strided_slice %18 {offsets = [0, 24], sizes = [16, 8], strides = [1, 1]} : vector<16x32xf32> to vector<16x8xf32>
    %85 = arith.truncf %83 : vector<16x16xf32> to vector<16x16xbf16>
    %86 = arith.truncf %84 : vector<16x8xf32> to vector<16x8xbf16>
    %cst_29 = arith.constant dense<0.000000e+00> : vector<16x8xf32>
    %87 = tpu.matmul %85, %86, %cst_29 {dimension_numbers = #tpu.dot_dimension_numbers<[1], [0], [0], [1], [0, 0, 1, 1], [], []>} : vector<16x16xbf16>, vector<16x8xbf16>, vector<16x8xf32> -> vector<16x8xf32>
    %88 = vector.extract_strided_slice %19 {offsets = [24, 0], sizes = [8, 32], strides = [1, 1]} : vector<32x32xbf16> to vector<8x32xbf16>
    %89 = arith.truncf %87 : vector<16x8xf32> to vector<16x8xbf16>
    %cst_30 = arith.constant dense<0.000000e+00> : vector<16x32xf32>
    %90 = tpu.matmul %89, %88, %cst_30 {dimension_numbers = #tpu.dot_dimension_numbers<[1], [0], [0], [1], [0, 0, 1, 1], [], []>} : vector<16x8xbf16>, vector<8x32xbf16>, vector<16x32xf32> -> vector<16x32xf32>
    %91 = arith.addf %82, %90 : vector<16x32xf32>
    %92 = vector.extract_strided_slice %5 {offsets = [0, 768], sizes = [32, 16], strides = [1, 1]} : vector<32x1152xbf16> to vector<32x16xbf16>
    %93 = vector.extract_strided_slice %9 {offsets = [13, 0], sizes = [1, 16], strides = [1, 1]} : vector<19x96xf32> to vector<1x16xf32>
    %94 = vector.extract_strided_slice %7 {offsets = [64, 0], sizes = [16, 32], strides = [1, 1]} : vector<112x32xbf16> to vector<16x32xbf16>
    %95 = vector.extract_strided_slice %9 {offsets = [14, 0], sizes = [1, 32], strides = [1, 1]} : vector<19x96xf32> to vector<1x32xf32>
    %96 = arith.truncf %91 : vector<16x32xf32> to vector<16x32xbf16>
    %cst_31 = arith.constant dense<0.000000e+00> : vector<16x16xf32>
    %97 = tpu.matmul %96, %92, %cst_31 {dimension_numbers = #tpu.dot_dimension_numbers<[1], [0], [0], [1], [0, 0, 1, 1], [], []>} : vector<16x32xbf16>, vector<32x16xbf16>, vector<16x16xf32> -> vector<16x16xf32>
    %98 = vector.broadcast %93 : vector<1x16xf32> to vector<16x16xf32>
    %99 = arith.addf %97, %98 : vector<16x16xf32>
    %cst_32 = arith.constant 0.000000e+00 : f32
    %100 = vector.broadcast %cst_32 : f32 to vector<16x16xf32>
    %101 = arith.maximumf %99, %100 : vector<16x16xf32>
    %102 = arith.truncf %101 : vector<16x16xf32> to vector<16x16xbf16>
    %cst_33 = arith.constant dense<0.000000e+00> : vector<16x32xf32>
    %103 = tpu.matmul %102, %94, %cst_33 {dimension_numbers = #tpu.dot_dimension_numbers<[1], [0], [0], [1], [0, 0, 1, 1], [], []>} : vector<16x16xbf16>, vector<16x32xbf16>, vector<16x32xf32> -> vector<16x32xf32>
    %104 = vector.broadcast %95 : vector<1x32xf32> to vector<16x32xf32>
    %105 = arith.addf %103, %104 : vector<16x32xf32>
    %106 = arith.addf %105, %91 : vector<16x32xf32>
    %107 = arith.addf %0, %106 : vector<16x32xf32>
    %108 = vector.extract_strided_slice %9 {offsets = [7, 0], sizes = [1, 32], strides = [1, 1]} : vector<19x96xf32> to vector<1x32xf32>
    %109 = vector.extract_strided_slice %9 {offsets = [8, 0], sizes = [1, 32], strides = [1, 1]} : vector<19x96xf32> to vector<1x32xf32>
    %cst_34 = arith.constant dense<0.000000e+00> : vector<16xf32>
    %110 = vector.multi_reduction <add>, %107, %cst_34 [1] : vector<16x32xf32> to vector<16xf32>
    %111 = vector.shape_cast %110 : vector<16xf32> to vector<16x1xf32>
    %cst_35 = arith.constant 3.200000e+01 : f32
    %112 = vector.broadcast %cst_35 : f32 to vector<16x1xf32>
    %113 = arith.divf %111, %112 : vector<16x1xf32>
    %114 = vector.broadcast %113 : vector<16x1xf32> to vector<16x32xf32>
    %115 = arith.subf %107, %114 : vector<16x32xf32>
    %116 = arith.mulf %115, %115 : vector<16x32xf32>
    %cst_36 = arith.constant dense<0.000000e+00> : vector<16xf32>
    %117 = vector.multi_reduction <add>, %116, %cst_36 [1] : vector<16x32xf32> to vector<16xf32>
    %118 = vector.shape_cast %117 : vector<16xf32> to vector<16x1xf32>
    %cst_37 = arith.constant 3.200000e+01 : f32
    %119 = vector.broadcast %cst_37 : f32 to vector<16x1xf32>
    %120 = arith.divf %118, %119 : vector<16x1xf32>
    %cst_38 = arith.constant 9.99999974E-6 : f32
    %121 = vector.broadcast %cst_38 : f32 to vector<16x1xf32>
    %122 = arith.addf %120, %121 : vector<16x1xf32>
    %123 = math.rsqrt %122 : vector<16x1xf32>
    %124 = vector.broadcast %123 : vector<16x1xf32> to vector<16x32xf32>
    %125 = arith.mulf %115, %124 : vector<16x32xf32>
    %126 = vector.broadcast %108 : vector<1x32xf32> to vector<16x32xf32>
    %127 = arith.mulf %125, %126 : vector<16x32xf32>
    %128 = vector.broadcast %109 : vector<1x32xf32> to vector<16x32xf32>
    %129 = arith.addf %127, %128 : vector<16x32xf32>
    %130 = arith.truncf %129 : vector<16x32xf32> to vector<16x32xbf16>
    %131 = vector.extract_strided_slice %5 {offsets = [0, 128], sizes = [32, 32], strides = [1, 1]} : vector<32x1152xbf16> to vector<32x32xbf16>
    %cst_39 = arith.constant dense<0.000000e+00> : vector<16x32xf32>
    %132 = tpu.matmul %130, %131, %cst_39 {dimension_numbers = #tpu.dot_dimension_numbers<[1], [0], [0], [1], [0, 0, 1, 1], [], []>} : vector<16x32xbf16>, vector<32x32xbf16>, vector<16x32xf32> -> vector<16x32xf32>
    %133 = vector.extract_strided_slice %9 {offsets = [1, 0], sizes = [1, 32], strides = [1, 1]} : vector<19x96xf32> to vector<1x32xf32>
    %134 = vector.broadcast %133 : vector<1x32xf32> to vector<16x32xf32>
    %135 = arith.addf %132, %134 : vector<16x32xf32>
    %136 = vector.extract_strided_slice %5 {offsets = [0, 256], sizes = [32, 64], strides = [1, 1]} : vector<32x1152xbf16> to vector<32x64xbf16>
    %cst_40 = arith.constant dense<0.000000e+00> : vector<16x64xf32>
    %137 = tpu.matmul %1, %136, %cst_40 {dimension_numbers = #tpu.dot_dimension_numbers<[1], [0], [0], [1], [0, 0, 1, 1], [], []>} : vector<16x32xbf16>, vector<32x64xbf16>, vector<16x64xf32> -> vector<16x64xf32>
    %138 = vector.extract_strided_slice %9 {offsets = [2, 0], sizes = [1, 64], strides = [1, 1]} : vector<19x96xf32> to vector<1x64xf32>
    %139 = vector.broadcast %138 : vector<1x64xf32> to vector<16x64xf32>
    %140 = arith.addf %137, %139 : vector<16x64xf32>
    %141 = vector.extract_strided_slice %140 {offsets = [0, 0], sizes = [16, 32], strides = [1, 1]} : vector<16x64xf32> to vector<16x32xf32>
    %142 = vector.extract_strided_slice %140 {offsets = [0, 32], sizes = [16, 32], strides = [1, 1]} : vector<16x64xf32> to vector<16x32xf32>
    %143 = vector.extract_strided_slice %5 {offsets = [0, 640], sizes = [32, 32], strides = [1, 1]} : vector<32x1152xbf16> to vector<32x32xbf16>
    %144 = vector.extract_strided_slice %9 {offsets = [5, 0], sizes = [1, 32], strides = [1, 1]} : vector<19x96xf32> to vector<1x32xf32>
    %145 = vector.extract_strided_slice %135 {offsets = [0, 0], sizes = [16, 8], strides = [1, 1]} : vector<16x32xf32> to vector<16x8xf32>
    %146 = vector.extract_strided_slice %141 {offsets = [0, 0], sizes = [16, 8], strides = [1, 1]} : vector<16x32xf32> to vector<16x8xf32>
    %147 = arith.truncf %145 : vector<16x8xf32> to vector<16x8xbf16>
    %148 = arith.truncf %146 : vector<16x8xf32> to vector<16x8xbf16>
    %cst_41 = arith.constant dense<0.000000e+00> : vector<16x16xf32>
    %149 = tpu.matmul %147, %148, %cst_41 {dimension_numbers = #tpu.dot_dimension_numbers<[1], [1], [0], [0], [0, 0, 1, 0], [], []>} : vector<16x8xbf16>, vector<16x8xbf16>, vector<16x16xf32> -> vector<16x16xf32>
    %150 = vector.extract_strided_slice %135 {offsets = [0, 8], sizes = [16, 8], strides = [1, 1]} : vector<16x32xf32> to vector<16x8xf32>
    %151 = vector.extract_strided_slice %141 {offsets = [0, 8], sizes = [16, 8], strides = [1, 1]} : vector<16x32xf32> to vector<16x8xf32>
    %152 = arith.truncf %150 : vector<16x8xf32> to vector<16x8xbf16>
    %153 = arith.truncf %151 : vector<16x8xf32> to vector<16x8xbf16>
    %cst_42 = arith.constant dense<0.000000e+00> : vector<16x16xf32>
    %154 = tpu.matmul %152, %153, %cst_42 {dimension_numbers = #tpu.dot_dimension_numbers<[1], [1], [0], [0], [0, 0, 1, 0], [], []>} : vector<16x8xbf16>, vector<16x8xbf16>, vector<16x16xf32> -> vector<16x16xf32>
    %155 = vector.extract_strided_slice %135 {offsets = [0, 16], sizes = [16, 8], strides = [1, 1]} : vector<16x32xf32> to vector<16x8xf32>
    %156 = vector.extract_strided_slice %141 {offsets = [0, 16], sizes = [16, 8], strides = [1, 1]} : vector<16x32xf32> to vector<16x8xf32>
    %157 = arith.truncf %155 : vector<16x8xf32> to vector<16x8xbf16>
    %158 = arith.truncf %156 : vector<16x8xf32> to vector<16x8xbf16>
    %cst_43 = arith.constant dense<0.000000e+00> : vector<16x16xf32>
    %159 = tpu.matmul %157, %158, %cst_43 {dimension_numbers = #tpu.dot_dimension_numbers<[1], [1], [0], [0], [0, 0, 1, 0], [], []>} : vector<16x8xbf16>, vector<16x8xbf16>, vector<16x16xf32> -> vector<16x16xf32>
    %160 = vector.extract_strided_slice %135 {offsets = [0, 24], sizes = [16, 8], strides = [1, 1]} : vector<16x32xf32> to vector<16x8xf32>
    %161 = vector.extract_strided_slice %141 {offsets = [0, 24], sizes = [16, 8], strides = [1, 1]} : vector<16x32xf32> to vector<16x8xf32>
    %162 = arith.truncf %160 : vector<16x8xf32> to vector<16x8xbf16>
    %163 = arith.truncf %161 : vector<16x8xf32> to vector<16x8xbf16>
    %cst_44 = arith.constant dense<0.000000e+00> : vector<16x16xf32>
    %164 = tpu.matmul %162, %163, %cst_44 {dimension_numbers = #tpu.dot_dimension_numbers<[1], [1], [0], [0], [0, 0, 1, 0], [], []>} : vector<16x8xbf16>, vector<16x8xbf16>, vector<16x16xf32> -> vector<16x16xf32>
    %165 = tpu.concatenate %149, %154, %159, %164 in 0 : vector<16x16xf32>, vector<16x16xf32>, vector<16x16xf32>, vector<16x16xf32> -> vector<64x16xf32>
    %166 = arith.addf %165, %3 : vector<64x16xf32>
    %cst_45 = arith.constant dense<0xFF800000> : vector<64xf32>
    %167 = vector.multi_reduction <maximumf>, %166, %cst_45 [1] : vector<64x16xf32> to vector<64xf32>
    %168 = vector.shape_cast %167 : vector<64xf32> to vector<64x1xf32>
    %169 = vector.broadcast %168 : vector<64x1xf32> to vector<64x16xf32>
    %170 = arith.subf %166, %169 : vector<64x16xf32>
    %171 = math.exp %170 : vector<64x16xf32>
    %cst_46 = arith.constant dense<0.000000e+00> : vector<64xf32>
    %172 = vector.multi_reduction <add>, %171, %cst_46 [1] : vector<64x16xf32> to vector<64xf32>
    %173 = vector.shape_cast %172 : vector<64xf32> to vector<64x1xf32>
    %174 = tpu.reciprocal %173 {approx = true} : vector<64x1xf32> -> vector<64x1xf32>
    %175 = vector.broadcast %174 : vector<64x1xf32> to vector<64x16xf32>
    %176 = arith.mulf %171, %175 : vector<64x16xf32>
    %cst_47 = arith.constant 0.000000e+00 : f32
    %177 = vector.broadcast %cst_47 : f32 to vector<16x32xf32>
    %178 = vector.broadcast %144 : vector<1x32xf32> to vector<16x32xf32>
    %179 = arith.addf %178, %177 : vector<16x32xf32>
    %180 = vector.extract_strided_slice %176 {offsets = [0, 0], sizes = [16, 16], strides = [1, 1]} : vector<64x16xf32> to vector<16x16xf32>
    %181 = vector.extract_strided_slice %142 {offsets = [0, 0], sizes = [16, 8], strides = [1, 1]} : vector<16x32xf32> to vector<16x8xf32>
    %182 = arith.truncf %180 : vector<16x16xf32> to vector<16x16xbf16>
    %183 = arith.truncf %181 : vector<16x8xf32> to vector<16x8xbf16>
    %cst_48 = arith.constant dense<0.000000e+00> : vector<16x8xf32>
    %184 = tpu.matmul %182, %183, %cst_48 {dimension_numbers = #tpu.dot_dimension_numbers<[1], [0], [0], [1], [0, 0, 1, 1], [], []>} : vector<16x16xbf16>, vector<16x8xbf16>, vector<16x8xf32> -> vector<16x8xf32>
    %185 = vector.extract_strided_slice %143 {offsets = [0, 0], sizes = [8, 32], strides = [1, 1]} : vector<32x32xbf16> to vector<8x32xbf16>
    %186 = arith.truncf %184 : vector<16x8xf32> to vector<16x8xbf16>
    %cst_49 = arith.constant dense<0.000000e+00> : vector<16x32xf32>
    %187 = tpu.matmul %186, %185, %cst_49 {dimension_numbers = #tpu.dot_dimension_numbers<[1], [0], [0], [1], [0, 0, 1, 1], [], []>} : vector<16x8xbf16>, vector<8x32xbf16>, vector<16x32xf32> -> vector<16x32xf32>
    %188 = arith.addf %179, %187 : vector<16x32xf32>
    %189 = vector.extract_strided_slice %176 {offsets = [16, 0], sizes = [16, 16], strides = [1, 1]} : vector<64x16xf32> to vector<16x16xf32>
    %190 = vector.extract_strided_slice %142 {offsets = [0, 8], sizes = [16, 8], strides = [1, 1]} : vector<16x32xf32> to vector<16x8xf32>
    %191 = arith.truncf %189 : vector<16x16xf32> to vector<16x16xbf16>
    %192 = arith.truncf %190 : vector<16x8xf32> to vector<16x8xbf16>
    %cst_50 = arith.constant dense<0.000000e+00> : vector<16x8xf32>
    %193 = tpu.matmul %191, %192, %cst_50 {dimension_numbers = #tpu.dot_dimension_numbers<[1], [0], [0], [1], [0, 0, 1, 1], [], []>} : vector<16x16xbf16>, vector<16x8xbf16>, vector<16x8xf32> -> vector<16x8xf32>
    %194 = vector.extract_strided_slice %143 {offsets = [8, 0], sizes = [8, 32], strides = [1, 1]} : vector<32x32xbf16> to vector<8x32xbf16>
    %195 = arith.truncf %193 : vector<16x8xf32> to vector<16x8xbf16>
    %cst_51 = arith.constant dense<0.000000e+00> : vector<16x32xf32>
    %196 = tpu.matmul %195, %194, %cst_51 {dimension_numbers = #tpu.dot_dimension_numbers<[1], [0], [0], [1], [0, 0, 1, 1], [], []>} : vector<16x8xbf16>, vector<8x32xbf16>, vector<16x32xf32> -> vector<16x32xf32>
    %197 = arith.addf %188, %196 : vector<16x32xf32>
    %198 = vector.extract_strided_slice %176 {offsets = [32, 0], sizes = [16, 16], strides = [1, 1]} : vector<64x16xf32> to vector<16x16xf32>
    %199 = vector.extract_strided_slice %142 {offsets = [0, 16], sizes = [16, 8], strides = [1, 1]} : vector<16x32xf32> to vector<16x8xf32>
    %200 = arith.truncf %198 : vector<16x16xf32> to vector<16x16xbf16>
    %201 = arith.truncf %199 : vector<16x8xf32> to vector<16x8xbf16>
    %cst_52 = arith.constant dense<0.000000e+00> : vector<16x8xf32>
    %202 = tpu.matmul %200, %201, %cst_52 {dimension_numbers = #tpu.dot_dimension_numbers<[1], [0], [0], [1], [0, 0, 1, 1], [], []>} : vector<16x16xbf16>, vector<16x8xbf16>, vector<16x8xf32> -> vector<16x8xf32>
    %203 = vector.extract_strided_slice %143 {offsets = [16, 0], sizes = [8, 32], strides = [1, 1]} : vector<32x32xbf16> to vector<8x32xbf16>
    %204 = arith.truncf %202 : vector<16x8xf32> to vector<16x8xbf16>
    %cst_53 = arith.constant dense<0.000000e+00> : vector<16x32xf32>
    %205 = tpu.matmul %204, %203, %cst_53 {dimension_numbers = #tpu.dot_dimension_numbers<[1], [0], [0], [1], [0, 0, 1, 1], [], []>} : vector<16x8xbf16>, vector<8x32xbf16>, vector<16x32xf32> -> vector<16x32xf32>
    %206 = arith.addf %197, %205 : vector<16x32xf32>
    %207 = vector.extract_strided_slice %176 {offsets = [48, 0], sizes = [16, 16], strides = [1, 1]} : vector<64x16xf32> to vector<16x16xf32>
    %208 = vector.extract_strided_slice %142 {offsets = [0, 24], sizes = [16, 8], strides = [1, 1]} : vector<16x32xf32> to vector<16x8xf32>
    %209 = arith.truncf %207 : vector<16x16xf32> to vector<16x16xbf16>
    %210 = arith.truncf %208 : vector<16x8xf32> to vector<16x8xbf16>
    %cst_54 = arith.constant dense<0.000000e+00> : vector<16x8xf32>
    %211 = tpu.matmul %209, %210, %cst_54 {dimension_numbers = #tpu.dot_dimension_numbers<[1], [0], [0], [1], [0, 0, 1, 1], [], []>} : vector<16x16xbf16>, vector<16x8xbf16>, vector<16x8xf32> -> vector<16x8xf32>
    %212 = vector.extract_strided_slice %143 {offsets = [24, 0], sizes = [8, 32], strides = [1, 1]} : vector<32x32xbf16> to vector<8x32xbf16>
    %213 = arith.truncf %211 : vector<16x8xf32> to vector<16x8xbf16>
    %cst_55 = arith.constant dense<0.000000e+00> : vector<16x32xf32>
    %214 = tpu.matmul %213, %212, %cst_55 {dimension_numbers = #tpu.dot_dimension_numbers<[1], [0], [0], [1], [0, 0, 1, 1], [], []>} : vector<16x8xbf16>, vector<8x32xbf16>, vector<16x32xf32> -> vector<16x32xf32>
    %215 = arith.addf %206, %214 : vector<16x32xf32>
    %216 = vector.extract_strided_slice %5 {offsets = [0, 896], sizes = [32, 16], strides = [1, 1]} : vector<32x1152xbf16> to vector<32x16xbf16>
    %217 = vector.extract_strided_slice %9 {offsets = [15, 0], sizes = [1, 16], strides = [1, 1]} : vector<19x96xf32> to vector<1x16xf32>
    %218 = vector.extract_strided_slice %7 {offsets = [80, 0], sizes = [16, 32], strides = [1, 1]} : vector<112x32xbf16> to vector<16x32xbf16>
    %219 = vector.extract_strided_slice %9 {offsets = [16, 0], sizes = [1, 32], strides = [1, 1]} : vector<19x96xf32> to vector<1x32xf32>
    %220 = arith.truncf %215 : vector<16x32xf32> to vector<16x32xbf16>
    %cst_56 = arith.constant dense<0.000000e+00> : vector<16x16xf32>
    %221 = tpu.matmul %220, %216, %cst_56 {dimension_numbers = #tpu.dot_dimension_numbers<[1], [0], [0], [1], [0, 0, 1, 1], [], []>} : vector<16x32xbf16>, vector<32x16xbf16>, vector<16x16xf32> -> vector<16x16xf32>
    %222 = vector.broadcast %217 : vector<1x16xf32> to vector<16x16xf32>
    %223 = arith.addf %221, %222 : vector<16x16xf32>
    %cst_57 = arith.constant 0.000000e+00 : f32
    %224 = vector.broadcast %cst_57 : f32 to vector<16x16xf32>
    %225 = arith.maximumf %223, %224 : vector<16x16xf32>
    %226 = arith.truncf %225 : vector<16x16xf32> to vector<16x16xbf16>
    %cst_58 = arith.constant dense<0.000000e+00> : vector<16x32xf32>
    %227 = tpu.matmul %226, %218, %cst_58 {dimension_numbers = #tpu.dot_dimension_numbers<[1], [0], [0], [1], [0, 0, 1, 1], [], []>} : vector<16x16xbf16>, vector<16x32xbf16>, vector<16x32xf32> -> vector<16x32xf32>
    %228 = vector.broadcast %219 : vector<1x32xf32> to vector<16x32xf32>
    %229 = arith.addf %227, %228 : vector<16x32xf32>
    %230 = arith.addf %229, %215 : vector<16x32xf32>
    %231 = arith.addf %129, %230 : vector<16x32xf32>
    %232 = vector.extract_strided_slice %9 {offsets = [9, 0], sizes = [1, 32], strides = [1, 1]} : vector<19x96xf32> to vector<1x32xf32>
    %233 = vector.extract_strided_slice %9 {offsets = [10, 0], sizes = [1, 32], strides = [1, 1]} : vector<19x96xf32> to vector<1x32xf32>
    %cst_59 = arith.constant dense<0.000000e+00> : vector<16xf32>
    %234 = vector.multi_reduction <add>, %231, %cst_59 [1] : vector<16x32xf32> to vector<16xf32>
    %235 = vector.shape_cast %234 : vector<16xf32> to vector<16x1xf32>
    %cst_60 = arith.constant 3.200000e+01 : f32
    %236 = vector.broadcast %cst_60 : f32 to vector<16x1xf32>
    %237 = arith.divf %235, %236 : vector<16x1xf32>
    %238 = vector.broadcast %237 : vector<16x1xf32> to vector<16x32xf32>
    %239 = arith.subf %231, %238 : vector<16x32xf32>
    %240 = arith.mulf %239, %239 : vector<16x32xf32>
    %cst_61 = arith.constant dense<0.000000e+00> : vector<16xf32>
    %241 = vector.multi_reduction <add>, %240, %cst_61 [1] : vector<16x32xf32> to vector<16xf32>
    %242 = vector.shape_cast %241 : vector<16xf32> to vector<16x1xf32>
    %cst_62 = arith.constant 3.200000e+01 : f32
    %243 = vector.broadcast %cst_62 : f32 to vector<16x1xf32>
    %244 = arith.divf %242, %243 : vector<16x1xf32>
    %cst_63 = arith.constant 9.99999974E-6 : f32
    %245 = vector.broadcast %cst_63 : f32 to vector<16x1xf32>
    %246 = arith.addf %244, %245 : vector<16x1xf32>
    %247 = math.rsqrt %246 : vector<16x1xf32>
    %248 = vector.broadcast %247 : vector<16x1xf32> to vector<16x32xf32>
    %249 = arith.mulf %239, %248 : vector<16x32xf32>
    %250 = vector.broadcast %232 : vector<1x32xf32> to vector<16x32xf32>
    %251 = arith.mulf %249, %250 : vector<16x32xf32>
    %252 = vector.broadcast %233 : vector<1x32xf32> to vector<16x32xf32>
    %253 = arith.addf %251, %252 : vector<16x32xf32>
    %254 = arith.truncf %253 : vector<16x32xf32> to vector<16x32xbf16>
    %255 = vector.extract_strided_slice %5 {offsets = [0, 384], sizes = [32, 64], strides = [1, 1]} : vector<32x1152xbf16> to vector<32x64xbf16>
    %cst_64 = arith.constant dense<0.000000e+00> : vector<16x64xf32>
    %256 = tpu.matmul %254, %255, %cst_64 {dimension_numbers = #tpu.dot_dimension_numbers<[1], [0], [0], [1], [0, 0, 1, 1], [], []>} : vector<16x32xbf16>, vector<32x64xbf16>, vector<16x64xf32> -> vector<16x64xf32>
    %257 = vector.extract_strided_slice %9 {offsets = [3, 0], sizes = [1, 64], strides = [1, 1]} : vector<19x96xf32> to vector<1x64xf32>
    %258 = vector.broadcast %257 : vector<1x64xf32> to vector<16x64xf32>
    %259 = arith.addf %256, %258 : vector<16x64xf32>
    %cst_65 = arith.constant 0.000000e+00 : f32
    %260 = vector.broadcast %cst_65 : f32 to vector<16x64xf32>
    %261 = arith.maximumf %259, %260 : vector<16x64xf32>
    %262 = vector.extract_strided_slice %7 {offsets = [0, 0], sizes = [64, 32], strides = [1, 1]} : vector<112x32xbf16> to vector<64x32xbf16>
    %263 = arith.truncf %261 : vector<16x64xf32> to vector<16x64xbf16>
    %cst_66 = arith.constant dense<0.000000e+00> : vector<16x32xf32>
    %264 = tpu.matmul %263, %262, %cst_66 {dimension_numbers = #tpu.dot_dimension_numbers<[1], [0], [0], [1], [0, 0, 1, 1], [], []>} : vector<16x64xbf16>, vector<64x32xbf16>, vector<16x32xf32> -> vector<16x32xf32>
    %265 = vector.extract_strided_slice %9 {offsets = [6, 0], sizes = [1, 32], strides = [1, 1]} : vector<19x96xf32> to vector<1x32xf32>
    %266 = vector.broadcast %265 : vector<1x32xf32> to vector<16x32xf32>
    %267 = arith.addf %264, %266 : vector<16x32xf32>
    %268 = vector.extract_strided_slice %5 {offsets = [0, 1024], sizes = [32, 16], strides = [1, 1]} : vector<32x1152xbf16> to vector<32x16xbf16>
    %269 = vector.extract_strided_slice %9 {offsets = [17, 0], sizes = [1, 16], strides = [1, 1]} : vector<19x96xf32> to vector<1x16xf32>
    %270 = vector.extract_strided_slice %7 {offsets = [96, 0], sizes = [16, 32], strides = [1, 1]} : vector<112x32xbf16> to vector<16x32xbf16>
    %271 = vector.extract_strided_slice %9 {offsets = [18, 0], sizes = [1, 32], strides = [1, 1]} : vector<19x96xf32> to vector<1x32xf32>
    %272 = arith.truncf %267 : vector<16x32xf32> to vector<16x32xbf16>
    %cst_67 = arith.constant dense<0.000000e+00> : vector<16x16xf32>
    %273 = tpu.matmul %272, %268, %cst_67 {dimension_numbers = #tpu.dot_dimension_numbers<[1], [0], [0], [1], [0, 0, 1, 1], [], []>} : vector<16x32xbf16>, vector<32x16xbf16>, vector<16x16xf32> -> vector<16x16xf32>
    %274 = vector.broadcast %269 : vector<1x16xf32> to vector<16x16xf32>
    %275 = arith.addf %273, %274 : vector<16x16xf32>
    %cst_68 = arith.constant 0.000000e+00 : f32
    %276 = vector.broadcast %cst_68 : f32 to vector<16x16xf32>
    %277 = arith.maximumf %275, %276 : vector<16x16xf32>
    %278 = arith.truncf %277 : vector<16x16xf32> to vector<16x16xbf16>
    %cst_69 = arith.constant dense<0.000000e+00> : vector<16x32xf32>
    %279 = tpu.matmul %278, %270, %cst_69 {dimension_numbers = #tpu.dot_dimension_numbers<[1], [0], [0], [1], [0, 0, 1, 1], [], []>} : vector<16x16xbf16>, vector<16x32xbf16>, vector<16x32xf32> -> vector<16x32xf32>
    %280 = vector.broadcast %271 : vector<1x32xf32> to vector<16x32xf32>
    %281 = arith.addf %279, %280 : vector<16x32xf32>
    %282 = arith.addf %281, %267 : vector<16x32xf32>
    %283 = arith.addf %253, %282 : vector<16x32xf32>
    %284 = vector.extract_strided_slice %9 {offsets = [11, 0], sizes = [1, 32], strides = [1, 1]} : vector<19x96xf32> to vector<1x32xf32>
    %285 = vector.extract_strided_slice %9 {offsets = [12, 0], sizes = [1, 32], strides = [1, 1]} : vector<19x96xf32> to vector<1x32xf32>
    %cst_70 = arith.constant dense<0.000000e+00> : vector<16xf32>
    %286 = vector.multi_reduction <add>, %283, %cst_70 [1] : vector<16x32xf32> to vector<16xf32>
    %287 = vector.shape_cast %286 : vector<16xf32> to vector<16x1xf32>
    %cst_71 = arith.constant 3.200000e+01 : f32
    %288 = vector.broadcast %cst_71 : f32 to vector<16x1xf32>
    %289 = arith.divf %287, %288 : vector<16x1xf32>
    %290 = vector.broadcast %289 : vector<16x1xf32> to vector<16x32xf32>
    %291 = arith.subf %283, %290 : vector<16x32xf32>
    %292 = arith.mulf %291, %291 : vector<16x32xf32>
    %cst_72 = arith.constant dense<0.000000e+00> : vector<16xf32>
    %293 = vector.multi_reduction <add>, %292, %cst_72 [1] : vector<16x32xf32> to vector<16xf32>
    %294 = vector.shape_cast %293 : vector<16xf32> to vector<16x1xf32>
    %cst_73 = arith.constant 3.200000e+01 : f32
    %295 = vector.broadcast %cst_73 : f32 to vector<16x1xf32>
    %296 = arith.divf %294, %295 : vector<16x1xf32>
    %cst_74 = arith.constant 9.99999974E-6 : f32
    %297 = vector.broadcast %cst_74 : f32 to vector<16x1xf32>
    %298 = arith.addf %296, %297 : vector<16x1xf32>
    %299 = math.rsqrt %298 : vector<16x1xf32>
    %300 = vector.broadcast %299 : vector<16x1xf32> to vector<16x32xf32>
    %301 = arith.mulf %291, %300 : vector<16x32xf32>
    %302 = vector.broadcast %284 : vector<1x32xf32> to vector<16x32xf32>
    %303 = arith.mulf %301, %302 : vector<16x32xf32>
    %304 = vector.broadcast %285 : vector<1x32xf32> to vector<16x32xf32>
    %305 = arith.addf %303, %304 : vector<16x32xf32>
    %c1 = arith.constant 1 : index
    %c0_75 = arith.constant 0 : index
    %c0_76 = arith.constant 0 : index
    %306 = vector.load %arg4[%c1, %c0_75, %c0_76] : memref<2x32x1152xbf16, #tpu.memory_space<vmem>>, vector<1x32x1152xbf16>
    %307 = vector.shape_cast %306 : vector<1x32x1152xbf16> to vector<32x1152xbf16>
    %c1_77 = arith.constant 1 : index
    %c0_78 = arith.constant 0 : index
    %c0_79 = arith.constant 0 : index
    %308 = vector.load %arg5[%c1_77, %c0_78, %c0_79] : memref<2x112x32xbf16, #tpu.memory_space<vmem>>, vector<1x112x32xbf16>
    %309 = vector.shape_cast %308 : vector<1x112x32xbf16> to vector<112x32xbf16>
    %c1_80 = arith.constant 1 : index
    %c0_81 = arith.constant 0 : index
    %c0_82 = arith.constant 0 : index
    %310 = vector.load %arg6[%c1_80, %c0_81, %c0_82] : memref<2x19x96xf32, #tpu.memory_space<vmem>>, vector<1x19x96xf32>
    %311 = vector.shape_cast %310 : vector<1x19x96xf32> to vector<19x96xf32>
    %312 = arith.truncf %305 : vector<16x32xf32> to vector<16x32xbf16>
    %313 = vector.extract_strided_slice %307 {offsets = [0, 0], sizes = [32, 96], strides = [1, 1]} : vector<32x1152xbf16> to vector<32x96xbf16>
    %cst_83 = arith.constant dense<0.000000e+00> : vector<16x96xf32>
    %314 = tpu.matmul %312, %313, %cst_83 {dimension_numbers = #tpu.dot_dimension_numbers<[1], [0], [0], [1], [0, 0, 1, 1], [], []>} : vector<16x32xbf16>, vector<32x96xbf16>, vector<16x96xf32> -> vector<16x96xf32>
    %315 = vector.extract_strided_slice %311 {offsets = [0, 0], sizes = [1, 96], strides = [1, 1]} : vector<19x96xf32> to vector<1x96xf32>
    %316 = vector.broadcast %315 : vector<1x96xf32> to vector<16x96xf32>
    %317 = arith.addf %314, %316 : vector<16x96xf32>
    %318 = vector.extract_strided_slice %317 {offsets = [0, 0], sizes = [16, 32], strides = [1, 1]} : vector<16x96xf32> to vector<16x32xf32>
    %319 = vector.extract_strided_slice %317 {offsets = [0, 32], sizes = [16, 32], strides = [1, 1]} : vector<16x96xf32> to vector<16x32xf32>
    %320 = vector.extract_strided_slice %317 {offsets = [0, 64], sizes = [16, 32], strides = [1, 1]} : vector<16x96xf32> to vector<16x32xf32>
    %321 = vector.extract_strided_slice %307 {offsets = [0, 512], sizes = [32, 32], strides = [1, 1]} : vector<32x1152xbf16> to vector<32x32xbf16>
    %322 = vector.extract_strided_slice %311 {offsets = [4, 0], sizes = [1, 32], strides = [1, 1]} : vector<19x96xf32> to vector<1x32xf32>
    %323 = vector.extract_strided_slice %318 {offsets = [0, 0], sizes = [16, 8], strides = [1, 1]} : vector<16x32xf32> to vector<16x8xf32>
    %324 = vector.extract_strided_slice %319 {offsets = [0, 0], sizes = [16, 8], strides = [1, 1]} : vector<16x32xf32> to vector<16x8xf32>
    %325 = arith.truncf %323 : vector<16x8xf32> to vector<16x8xbf16>
    %326 = arith.truncf %324 : vector<16x8xf32> to vector<16x8xbf16>
    %cst_84 = arith.constant dense<0.000000e+00> : vector<16x16xf32>
    %327 = tpu.matmul %325, %326, %cst_84 {dimension_numbers = #tpu.dot_dimension_numbers<[1], [1], [0], [0], [0, 0, 1, 0], [], []>} : vector<16x8xbf16>, vector<16x8xbf16>, vector<16x16xf32> -> vector<16x16xf32>
    %328 = vector.extract_strided_slice %318 {offsets = [0, 8], sizes = [16, 8], strides = [1, 1]} : vector<16x32xf32> to vector<16x8xf32>
    %329 = vector.extract_strided_slice %319 {offsets = [0, 8], sizes = [16, 8], strides = [1, 1]} : vector<16x32xf32> to vector<16x8xf32>
    %330 = arith.truncf %328 : vector<16x8xf32> to vector<16x8xbf16>
    %331 = arith.truncf %329 : vector<16x8xf32> to vector<16x8xbf16>
    %cst_85 = arith.constant dense<0.000000e+00> : vector<16x16xf32>
    %332 = tpu.matmul %330, %331, %cst_85 {dimension_numbers = #tpu.dot_dimension_numbers<[1], [1], [0], [0], [0, 0, 1, 0], [], []>} : vector<16x8xbf16>, vector<16x8xbf16>, vector<16x16xf32> -> vector<16x16xf32>
    %333 = vector.extract_strided_slice %318 {offsets = [0, 16], sizes = [16, 8], strides = [1, 1]} : vector<16x32xf32> to vector<16x8xf32>
    %334 = vector.extract_strided_slice %319 {offsets = [0, 16], sizes = [16, 8], strides = [1, 1]} : vector<16x32xf32> to vector<16x8xf32>
    %335 = arith.truncf %333 : vector<16x8xf32> to vector<16x8xbf16>
    %336 = arith.truncf %334 : vector<16x8xf32> to vector<16x8xbf16>
    %cst_86 = arith.constant dense<0.000000e+00> : vector<16x16xf32>
    %337 = tpu.matmul %335, %336, %cst_86 {dimension_numbers = #tpu.dot_dimension_numbers<[1], [1], [0], [0], [0, 0, 1, 0], [], []>} : vector<16x8xbf16>, vector<16x8xbf16>, vector<16x16xf32> -> vector<16x16xf32>
    %338 = vector.extract_strided_slice %318 {offsets = [0, 24], sizes = [16, 8], strides = [1, 1]} : vector<16x32xf32> to vector<16x8xf32>
    %339 = vector.extract_strided_slice %319 {offsets = [0, 24], sizes = [16, 8], strides = [1, 1]} : vector<16x32xf32> to vector<16x8xf32>
    %340 = arith.truncf %338 : vector<16x8xf32> to vector<16x8xbf16>
    %341 = arith.truncf %339 : vector<16x8xf32> to vector<16x8xbf16>
    %cst_87 = arith.constant dense<0.000000e+00> : vector<16x16xf32>
    %342 = tpu.matmul %340, %341, %cst_87 {dimension_numbers = #tpu.dot_dimension_numbers<[1], [1], [0], [0], [0, 0, 1, 0], [], []>} : vector<16x8xbf16>, vector<16x8xbf16>, vector<16x16xf32> -> vector<16x16xf32>
    %343 = tpu.concatenate %327, %332, %337, %342 in 0 : vector<16x16xf32>, vector<16x16xf32>, vector<16x16xf32>, vector<16x16xf32> -> vector<64x16xf32>
    %344 = arith.addf %343, %2 : vector<64x16xf32>
    %cst_88 = arith.constant dense<0xFF800000> : vector<64xf32>
    %345 = vector.multi_reduction <maximumf>, %344, %cst_88 [1] : vector<64x16xf32> to vector<64xf32>
    %346 = vector.shape_cast %345 : vector<64xf32> to vector<64x1xf32>
    %347 = vector.broadcast %346 : vector<64x1xf32> to vector<64x16xf32>
    %348 = arith.subf %344, %347 : vector<64x16xf32>
    %349 = math.exp %348 : vector<64x16xf32>
    %cst_89 = arith.constant dense<0.000000e+00> : vector<64xf32>
    %350 = vector.multi_reduction <add>, %349, %cst_89 [1] : vector<64x16xf32> to vector<64xf32>
    %351 = vector.shape_cast %350 : vector<64xf32> to vector<64x1xf32>
    %352 = tpu.reciprocal %351 {approx = true} : vector<64x1xf32> -> vector<64x1xf32>
    %353 = vector.broadcast %352 : vector<64x1xf32> to vector<64x16xf32>
    %354 = arith.mulf %349, %353 : vector<64x16xf32>
    %cst_90 = arith.constant 0.000000e+00 : f32
    %355 = vector.broadcast %cst_90 : f32 to vector<16x32xf32>
    %356 = vector.broadcast %322 : vector<1x32xf32> to vector<16x32xf32>
    %357 = arith.addf %356, %355 : vector<16x32xf32>
    %358 = vector.extract_strided_slice %354 {offsets = [0, 0], sizes = [16, 16], strides = [1, 1]} : vector<64x16xf32> to vector<16x16xf32>
    %359 = vector.extract_strided_slice %320 {offsets = [0, 0], sizes = [16, 8], strides = [1, 1]} : vector<16x32xf32> to vector<16x8xf32>
    %360 = arith.truncf %358 : vector<16x16xf32> to vector<16x16xbf16>
    %361 = arith.truncf %359 : vector<16x8xf32> to vector<16x8xbf16>
    %cst_91 = arith.constant dense<0.000000e+00> : vector<16x8xf32>
    %362 = tpu.matmul %360, %361, %cst_91 {dimension_numbers = #tpu.dot_dimension_numbers<[1], [0], [0], [1], [0, 0, 1, 1], [], []>} : vector<16x16xbf16>, vector<16x8xbf16>, vector<16x8xf32> -> vector<16x8xf32>
    %363 = vector.extract_strided_slice %321 {offsets = [0, 0], sizes = [8, 32], strides = [1, 1]} : vector<32x32xbf16> to vector<8x32xbf16>
    %364 = arith.truncf %362 : vector<16x8xf32> to vector<16x8xbf16>
    %cst_92 = arith.constant dense<0.000000e+00> : vector<16x32xf32>
    %365 = tpu.matmul %364, %363, %cst_92 {dimension_numbers = #tpu.dot_dimension_numbers<[1], [0], [0], [1], [0, 0, 1, 1], [], []>} : vector<16x8xbf16>, vector<8x32xbf16>, vector<16x32xf32> -> vector<16x32xf32>
    %366 = arith.addf %357, %365 : vector<16x32xf32>
    %367 = vector.extract_strided_slice %354 {offsets = [16, 0], sizes = [16, 16], strides = [1, 1]} : vector<64x16xf32> to vector<16x16xf32>
    %368 = vector.extract_strided_slice %320 {offsets = [0, 8], sizes = [16, 8], strides = [1, 1]} : vector<16x32xf32> to vector<16x8xf32>
    %369 = arith.truncf %367 : vector<16x16xf32> to vector<16x16xbf16>
    %370 = arith.truncf %368 : vector<16x8xf32> to vector<16x8xbf16>
    %cst_93 = arith.constant dense<0.000000e+00> : vector<16x8xf32>
    %371 = tpu.matmul %369, %370, %cst_93 {dimension_numbers = #tpu.dot_dimension_numbers<[1], [0], [0], [1], [0, 0, 1, 1], [], []>} : vector<16x16xbf16>, vector<16x8xbf16>, vector<16x8xf32> -> vector<16x8xf32>
    %372 = vector.extract_strided_slice %321 {offsets = [8, 0], sizes = [8, 32], strides = [1, 1]} : vector<32x32xbf16> to vector<8x32xbf16>
    %373 = arith.truncf %371 : vector<16x8xf32> to vector<16x8xbf16>
    %cst_94 = arith.constant dense<0.000000e+00> : vector<16x32xf32>
    %374 = tpu.matmul %373, %372, %cst_94 {dimension_numbers = #tpu.dot_dimension_numbers<[1], [0], [0], [1], [0, 0, 1, 1], [], []>} : vector<16x8xbf16>, vector<8x32xbf16>, vector<16x32xf32> -> vector<16x32xf32>
    %375 = arith.addf %366, %374 : vector<16x32xf32>
    %376 = vector.extract_strided_slice %354 {offsets = [32, 0], sizes = [16, 16], strides = [1, 1]} : vector<64x16xf32> to vector<16x16xf32>
    %377 = vector.extract_strided_slice %320 {offsets = [0, 16], sizes = [16, 8], strides = [1, 1]} : vector<16x32xf32> to vector<16x8xf32>
    %378 = arith.truncf %376 : vector<16x16xf32> to vector<16x16xbf16>
    %379 = arith.truncf %377 : vector<16x8xf32> to vector<16x8xbf16>
    %cst_95 = arith.constant dense<0.000000e+00> : vector<16x8xf32>
    %380 = tpu.matmul %378, %379, %cst_95 {dimension_numbers = #tpu.dot_dimension_numbers<[1], [0], [0], [1], [0, 0, 1, 1], [], []>} : vector<16x16xbf16>, vector<16x8xbf16>, vector<16x8xf32> -> vector<16x8xf32>
    %381 = vector.extract_strided_slice %321 {offsets = [16, 0], sizes = [8, 32], strides = [1, 1]} : vector<32x32xbf16> to vector<8x32xbf16>
    %382 = arith.truncf %380 : vector<16x8xf32> to vector<16x8xbf16>
    %cst_96 = arith.constant dense<0.000000e+00> : vector<16x32xf32>
    %383 = tpu.matmul %382, %381, %cst_96 {dimension_numbers = #tpu.dot_dimension_numbers<[1], [0], [0], [1], [0, 0, 1, 1], [], []>} : vector<16x8xbf16>, vector<8x32xbf16>, vector<16x32xf32> -> vector<16x32xf32>
    %384 = arith.addf %375, %383 : vector<16x32xf32>
    %385 = vector.extract_strided_slice %354 {offsets = [48, 0], sizes = [16, 16], strides = [1, 1]} : vector<64x16xf32> to vector<16x16xf32>
    %386 = vector.extract_strided_slice %320 {offsets = [0, 24], sizes = [16, 8], strides = [1, 1]} : vector<16x32xf32> to vector<16x8xf32>
    %387 = arith.truncf %385 : vector<16x16xf32> to vector<16x16xbf16>
    %388 = arith.truncf %386 : vector<16x8xf32> to vector<16x8xbf16>
    %cst_97 = arith.constant dense<0.000000e+00> : vector<16x8xf32>
    %389 = tpu.matmul %387, %388, %cst_97 {dimension_numbers = #tpu.dot_dimension_numbers<[1], [0], [0], [1], [0, 0, 1, 1], [], []>} : vector<16x16xbf16>, vector<16x8xbf16>, vector<16x8xf32> -> vector<16x8xf32>
    %390 = vector.extract_strided_slice %321 {offsets = [24, 0], sizes = [8, 32], strides = [1, 1]} : vector<32x32xbf16> to vector<8x32xbf16>
    %391 = arith.truncf %389 : vector<16x8xf32> to vector<16x8xbf16>
    %cst_98 = arith.constant dense<0.000000e+00> : vector<16x32xf32>
    %392 = tpu.matmul %391, %390, %cst_98 {dimension_numbers = #tpu.dot_dimension_numbers<[1], [0], [0], [1], [0, 0, 1, 1], [], []>} : vector<16x8xbf16>, vector<8x32xbf16>, vector<16x32xf32> -> vector<16x32xf32>
    %393 = arith.addf %384, %392 : vector<16x32xf32>
    %394 = vector.extract_strided_slice %307 {offsets = [0, 768], sizes = [32, 16], strides = [1, 1]} : vector<32x1152xbf16> to vector<32x16xbf16>
    %395 = vector.extract_strided_slice %311 {offsets = [13, 0], sizes = [1, 16], strides = [1, 1]} : vector<19x96xf32> to vector<1x16xf32>
    %396 = vector.extract_strided_slice %309 {offsets = [64, 0], sizes = [16, 32], strides = [1, 1]} : vector<112x32xbf16> to vector<16x32xbf16>
    %397 = vector.extract_strided_slice %311 {offsets = [14, 0], sizes = [1, 32], strides = [1, 1]} : vector<19x96xf32> to vector<1x32xf32>
    %398 = arith.truncf %393 : vector<16x32xf32> to vector<16x32xbf16>
    %cst_99 = arith.constant dense<0.000000e+00> : vector<16x16xf32>
    %399 = tpu.matmul %398, %394, %cst_99 {dimension_numbers = #tpu.dot_dimension_numbers<[1], [0], [0], [1], [0, 0, 1, 1], [], []>} : vector<16x32xbf16>, vector<32x16xbf16>, vector<16x16xf32> -> vector<16x16xf32>
    %400 = vector.broadcast %395 : vector<1x16xf32> to vector<16x16xf32>
    %401 = arith.addf %399, %400 : vector<16x16xf32>
    %cst_100 = arith.constant 0.000000e+00 : f32
    %402 = vector.broadcast %cst_100 : f32 to vector<16x16xf32>
    %403 = arith.maximumf %401, %402 : vector<16x16xf32>
    %404 = arith.truncf %403 : vector<16x16xf32> to vector<16x16xbf16>
    %cst_101 = arith.constant dense<0.000000e+00> : vector<16x32xf32>
    %405 = tpu.matmul %404, %396, %cst_101 {dimension_numbers = #tpu.dot_dimension_numbers<[1], [0], [0], [1], [0, 0, 1, 1], [], []>} : vector<16x16xbf16>, vector<16x32xbf16>, vector<16x32xf32> -> vector<16x32xf32>
    %406 = vector.broadcast %397 : vector<1x32xf32> to vector<16x32xf32>
    %407 = arith.addf %405, %406 : vector<16x32xf32>
    %408 = arith.addf %407, %393 : vector<16x32xf32>
    %409 = arith.addf %305, %408 : vector<16x32xf32>
    %410 = vector.extract_strided_slice %311 {offsets = [7, 0], sizes = [1, 32], strides = [1, 1]} : vector<19x96xf32> to vector<1x32xf32>
    %411 = vector.extract_strided_slice %311 {offsets = [8, 0], sizes = [1, 32], strides = [1, 1]} : vector<19x96xf32> to vector<1x32xf32>
    %cst_102 = arith.constant dense<0.000000e+00> : vector<16xf32>
    %412 = vector.multi_reduction <add>, %409, %cst_102 [1] : vector<16x32xf32> to vector<16xf32>
    %413 = vector.shape_cast %412 : vector<16xf32> to vector<16x1xf32>
    %cst_103 = arith.constant 3.200000e+01 : f32
    %414 = vector.broadcast %cst_103 : f32 to vector<16x1xf32>
    %415 = arith.divf %413, %414 : vector<16x1xf32>
    %416 = vector.broadcast %415 : vector<16x1xf32> to vector<16x32xf32>
    %417 = arith.subf %409, %416 : vector<16x32xf32>
    %418 = arith.mulf %417, %417 : vector<16x32xf32>
    %cst_104 = arith.constant dense<0.000000e+00> : vector<16xf32>
    %419 = vector.multi_reduction <add>, %418, %cst_104 [1] : vector<16x32xf32> to vector<16xf32>
    %420 = vector.shape_cast %419 : vector<16xf32> to vector<16x1xf32>
    %cst_105 = arith.constant 3.200000e+01 : f32
    %421 = vector.broadcast %cst_105 : f32 to vector<16x1xf32>
    %422 = arith.divf %420, %421 : vector<16x1xf32>
    %cst_106 = arith.constant 9.99999974E-6 : f32
    %423 = vector.broadcast %cst_106 : f32 to vector<16x1xf32>
    %424 = arith.addf %422, %423 : vector<16x1xf32>
    %425 = math.rsqrt %424 : vector<16x1xf32>
    %426 = vector.broadcast %425 : vector<16x1xf32> to vector<16x32xf32>
    %427 = arith.mulf %417, %426 : vector<16x32xf32>
    %428 = vector.broadcast %410 : vector<1x32xf32> to vector<16x32xf32>
    %429 = arith.mulf %427, %428 : vector<16x32xf32>
    %430 = vector.broadcast %411 : vector<1x32xf32> to vector<16x32xf32>
    %431 = arith.addf %429, %430 : vector<16x32xf32>
    %432 = arith.truncf %431 : vector<16x32xf32> to vector<16x32xbf16>
    %433 = vector.extract_strided_slice %307 {offsets = [0, 128], sizes = [32, 32], strides = [1, 1]} : vector<32x1152xbf16> to vector<32x32xbf16>
    %cst_107 = arith.constant dense<0.000000e+00> : vector<16x32xf32>
    %434 = tpu.matmul %432, %433, %cst_107 {dimension_numbers = #tpu.dot_dimension_numbers<[1], [0], [0], [1], [0, 0, 1, 1], [], []>} : vector<16x32xbf16>, vector<32x32xbf16>, vector<16x32xf32> -> vector<16x32xf32>
    %435 = vector.extract_strided_slice %311 {offsets = [1, 0], sizes = [1, 32], strides = [1, 1]} : vector<19x96xf32> to vector<1x32xf32>
    %436 = vector.broadcast %435 : vector<1x32xf32> to vector<16x32xf32>
    %437 = arith.addf %434, %436 : vector<16x32xf32>
    %438 = vector.extract_strided_slice %307 {offsets = [0, 256], sizes = [32, 64], strides = [1, 1]} : vector<32x1152xbf16> to vector<32x64xbf16>
    %cst_108 = arith.constant dense<0.000000e+00> : vector<16x64xf32>
    %439 = tpu.matmul %1, %438, %cst_108 {dimension_numbers = #tpu.dot_dimension_numbers<[1], [0], [0], [1], [0, 0, 1, 1], [], []>} : vector<16x32xbf16>, vector<32x64xbf16>, vector<16x64xf32> -> vector<16x64xf32>
    %440 = vector.extract_strided_slice %311 {offsets = [2, 0], sizes = [1, 64], strides = [1, 1]} : vector<19x96xf32> to vector<1x64xf32>
    %441 = vector.broadcast %440 : vector<1x64xf32> to vector<16x64xf32>
    %442 = arith.addf %439, %441 : vector<16x64xf32>
    %443 = vector.extract_strided_slice %442 {offsets = [0, 0], sizes = [16, 32], strides = [1, 1]} : vector<16x64xf32> to vector<16x32xf32>
    %444 = vector.extract_strided_slice %442 {offsets = [0, 32], sizes = [16, 32], strides = [1, 1]} : vector<16x64xf32> to vector<16x32xf32>
    %445 = vector.extract_strided_slice %307 {offsets = [0, 640], sizes = [32, 32], strides = [1, 1]} : vector<32x1152xbf16> to vector<32x32xbf16>
    %446 = vector.extract_strided_slice %311 {offsets = [5, 0], sizes = [1, 32], strides = [1, 1]} : vector<19x96xf32> to vector<1x32xf32>
    %447 = vector.extract_strided_slice %437 {offsets = [0, 0], sizes = [16, 8], strides = [1, 1]} : vector<16x32xf32> to vector<16x8xf32>
    %448 = vector.extract_strided_slice %443 {offsets = [0, 0], sizes = [16, 8], strides = [1, 1]} : vector<16x32xf32> to vector<16x8xf32>
    %449 = arith.truncf %447 : vector<16x8xf32> to vector<16x8xbf16>
    %450 = arith.truncf %448 : vector<16x8xf32> to vector<16x8xbf16>
    %cst_109 = arith.constant dense<0.000000e+00> : vector<16x16xf32>
    %451 = tpu.matmul %449, %450, %cst_109 {dimension_numbers = #tpu.dot_dimension_numbers<[1], [1], [0], [0], [0, 0, 1, 0], [], []>} : vector<16x8xbf16>, vector<16x8xbf16>, vector<16x16xf32> -> vector<16x16xf32>
    %452 = vector.extract_strided_slice %437 {offsets = [0, 8], sizes = [16, 8], strides = [1, 1]} : vector<16x32xf32> to vector<16x8xf32>
    %453 = vector.extract_strided_slice %443 {offsets = [0, 8], sizes = [16, 8], strides = [1, 1]} : vector<16x32xf32> to vector<16x8xf32>
    %454 = arith.truncf %452 : vector<16x8xf32> to vector<16x8xbf16>
    %455 = arith.truncf %453 : vector<16x8xf32> to vector<16x8xbf16>
    %cst_110 = arith.constant dense<0.000000e+00> : vector<16x16xf32>
    %456 = tpu.matmul %454, %455, %cst_110 {dimension_numbers = #tpu.dot_dimension_numbers<[1], [1], [0], [0], [0, 0, 1, 0], [], []>} : vector<16x8xbf16>, vector<16x8xbf16>, vector<16x16xf32> -> vector<16x16xf32>
    %457 = vector.extract_strided_slice %437 {offsets = [0, 16], sizes = [16, 8], strides = [1, 1]} : vector<16x32xf32> to vector<16x8xf32>
    %458 = vector.extract_strided_slice %443 {offsets = [0, 16], sizes = [16, 8], strides = [1, 1]} : vector<16x32xf32> to vector<16x8xf32>
    %459 = arith.truncf %457 : vector<16x8xf32> to vector<16x8xbf16>
    %460 = arith.truncf %458 : vector<16x8xf32> to vector<16x8xbf16>
    %cst_111 = arith.constant dense<0.000000e+00> : vector<16x16xf32>
    %461 = tpu.matmul %459, %460, %cst_111 {dimension_numbers = #tpu.dot_dimension_numbers<[1], [1], [0], [0], [0, 0, 1, 0], [], []>} : vector<16x8xbf16>, vector<16x8xbf16>, vector<16x16xf32> -> vector<16x16xf32>
    %462 = vector.extract_strided_slice %437 {offsets = [0, 24], sizes = [16, 8], strides = [1, 1]} : vector<16x32xf32> to vector<16x8xf32>
    %463 = vector.extract_strided_slice %443 {offsets = [0, 24], sizes = [16, 8], strides = [1, 1]} : vector<16x32xf32> to vector<16x8xf32>
    %464 = arith.truncf %462 : vector<16x8xf32> to vector<16x8xbf16>
    %465 = arith.truncf %463 : vector<16x8xf32> to vector<16x8xbf16>
    %cst_112 = arith.constant dense<0.000000e+00> : vector<16x16xf32>
    %466 = tpu.matmul %464, %465, %cst_112 {dimension_numbers = #tpu.dot_dimension_numbers<[1], [1], [0], [0], [0, 0, 1, 0], [], []>} : vector<16x8xbf16>, vector<16x8xbf16>, vector<16x16xf32> -> vector<16x16xf32>
    %467 = tpu.concatenate %451, %456, %461, %466 in 0 : vector<16x16xf32>, vector<16x16xf32>, vector<16x16xf32>, vector<16x16xf32> -> vector<64x16xf32>
    %468 = arith.addf %467, %3 : vector<64x16xf32>
    %cst_113 = arith.constant dense<0xFF800000> : vector<64xf32>
    %469 = vector.multi_reduction <maximumf>, %468, %cst_113 [1] : vector<64x16xf32> to vector<64xf32>
    %470 = vector.shape_cast %469 : vector<64xf32> to vector<64x1xf32>
    %471 = vector.broadcast %470 : vector<64x1xf32> to vector<64x16xf32>
    %472 = arith.subf %468, %471 : vector<64x16xf32>
    %473 = math.exp %472 : vector<64x16xf32>
    %cst_114 = arith.constant dense<0.000000e+00> : vector<64xf32>
    %474 = vector.multi_reduction <add>, %473, %cst_114 [1] : vector<64x16xf32> to vector<64xf32>
    %475 = vector.shape_cast %474 : vector<64xf32> to vector<64x1xf32>
    %476 = tpu.reciprocal %475 {approx = true} : vector<64x1xf32> -> vector<64x1xf32>
    %477 = vector.broadcast %476 : vector<64x1xf32> to vector<64x16xf32>
    %478 = arith.mulf %473, %477 : vector<64x16xf32>
    %cst_115 = arith.constant 0.000000e+00 : f32
    %479 = vector.broadcast %cst_115 : f32 to vector<16x32xf32>
    %480 = vector.broadcast %446 : vector<1x32xf32> to vector<16x32xf32>
    %481 = arith.addf %480, %479 : vector<16x32xf32>
    %482 = vector.extract_strided_slice %478 {offsets = [0, 0], sizes = [16, 16], strides = [1, 1]} : vector<64x16xf32> to vector<16x16xf32>
    %483 = vector.extract_strided_slice %444 {offsets = [0, 0], sizes = [16, 8], strides = [1, 1]} : vector<16x32xf32> to vector<16x8xf32>
    %484 = arith.truncf %482 : vector<16x16xf32> to vector<16x16xbf16>
    %485 = arith.truncf %483 : vector<16x8xf32> to vector<16x8xbf16>
    %cst_116 = arith.constant dense<0.000000e+00> : vector<16x8xf32>
    %486 = tpu.matmul %484, %485, %cst_116 {dimension_numbers = #tpu.dot_dimension_numbers<[1], [0], [0], [1], [0, 0, 1, 1], [], []>} : vector<16x16xbf16>, vector<16x8xbf16>, vector<16x8xf32> -> vector<16x8xf32>
    %487 = vector.extract_strided_slice %445 {offsets = [0, 0], sizes = [8, 32], strides = [1, 1]} : vector<32x32xbf16> to vector<8x32xbf16>
    %488 = arith.truncf %486 : vector<16x8xf32> to vector<16x8xbf16>
    %cst_117 = arith.constant dense<0.000000e+00> : vector<16x32xf32>
    %489 = tpu.matmul %488, %487, %cst_117 {dimension_numbers = #tpu.dot_dimension_numbers<[1], [0], [0], [1], [0, 0, 1, 1], [], []>} : vector<16x8xbf16>, vector<8x32xbf16>, vector<16x32xf32> -> vector<16x32xf32>
    %490 = arith.addf %481, %489 : vector<16x32xf32>
    %491 = vector.extract_strided_slice %478 {offsets = [16, 0], sizes = [16, 16], strides = [1, 1]} : vector<64x16xf32> to vector<16x16xf32>
    %492 = vector.extract_strided_slice %444 {offsets = [0, 8], sizes = [16, 8], strides = [1, 1]} : vector<16x32xf32> to vector<16x8xf32>
    %493 = arith.truncf %491 : vector<16x16xf32> to vector<16x16xbf16>
    %494 = arith.truncf %492 : vector<16x8xf32> to vector<16x8xbf16>
    %cst_118 = arith.constant dense<0.000000e+00> : vector<16x8xf32>
    %495 = tpu.matmul %493, %494, %cst_118 {dimension_numbers = #tpu.dot_dimension_numbers<[1], [0], [0], [1], [0, 0, 1, 1], [], []>} : vector<16x16xbf16>, vector<16x8xbf16>, vector<16x8xf32> -> vector<16x8xf32>
    %496 = vector.extract_strided_slice %445 {offsets = [8, 0], sizes = [8, 32], strides = [1, 1]} : vector<32x32xbf16> to vector<8x32xbf16>
    %497 = arith.truncf %495 : vector<16x8xf32> to vector<16x8xbf16>
    %cst_119 = arith.constant dense<0.000000e+00> : vector<16x32xf32>
    %498 = tpu.matmul %497, %496, %cst_119 {dimension_numbers = #tpu.dot_dimension_numbers<[1], [0], [0], [1], [0, 0, 1, 1], [], []>} : vector<16x8xbf16>, vector<8x32xbf16>, vector<16x32xf32> -> vector<16x32xf32>
    %499 = arith.addf %490, %498 : vector<16x32xf32>
    %500 = vector.extract_strided_slice %478 {offsets = [32, 0], sizes = [16, 16], strides = [1, 1]} : vector<64x16xf32> to vector<16x16xf32>
    %501 = vector.extract_strided_slice %444 {offsets = [0, 16], sizes = [16, 8], strides = [1, 1]} : vector<16x32xf32> to vector<16x8xf32>
    %502 = arith.truncf %500 : vector<16x16xf32> to vector<16x16xbf16>
    %503 = arith.truncf %501 : vector<16x8xf32> to vector<16x8xbf16>
    %cst_120 = arith.constant dense<0.000000e+00> : vector<16x8xf32>
    %504 = tpu.matmul %502, %503, %cst_120 {dimension_numbers = #tpu.dot_dimension_numbers<[1], [0], [0], [1], [0, 0, 1, 1], [], []>} : vector<16x16xbf16>, vector<16x8xbf16>, vector<16x8xf32> -> vector<16x8xf32>
    %505 = vector.extract_strided_slice %445 {offsets = [16, 0], sizes = [8, 32], strides = [1, 1]} : vector<32x32xbf16> to vector<8x32xbf16>
    %506 = arith.truncf %504 : vector<16x8xf32> to vector<16x8xbf16>
    %cst_121 = arith.constant dense<0.000000e+00> : vector<16x32xf32>
    %507 = tpu.matmul %506, %505, %cst_121 {dimension_numbers = #tpu.dot_dimension_numbers<[1], [0], [0], [1], [0, 0, 1, 1], [], []>} : vector<16x8xbf16>, vector<8x32xbf16>, vector<16x32xf32> -> vector<16x32xf32>
    %508 = arith.addf %499, %507 : vector<16x32xf32>
    %509 = vector.extract_strided_slice %478 {offsets = [48, 0], sizes = [16, 16], strides = [1, 1]} : vector<64x16xf32> to vector<16x16xf32>
    %510 = vector.extract_strided_slice %444 {offsets = [0, 24], sizes = [16, 8], strides = [1, 1]} : vector<16x32xf32> to vector<16x8xf32>
    %511 = arith.truncf %509 : vector<16x16xf32> to vector<16x16xbf16>
    %512 = arith.truncf %510 : vector<16x8xf32> to vector<16x8xbf16>
    %cst_122 = arith.constant dense<0.000000e+00> : vector<16x8xf32>
    %513 = tpu.matmul %511, %512, %cst_122 {dimension_numbers = #tpu.dot_dimension_numbers<[1], [0], [0], [1], [0, 0, 1, 1], [], []>} : vector<16x16xbf16>, vector<16x8xbf16>, vector<16x8xf32> -> vector<16x8xf32>
    %514 = vector.extract_strided_slice %445 {offsets = [24, 0], sizes = [8, 32], strides = [1, 1]} : vector<32x32xbf16> to vector<8x32xbf16>
    %515 = arith.truncf %513 : vector<16x8xf32> to vector<16x8xbf16>
    %cst_123 = arith.constant dense<0.000000e+00> : vector<16x32xf32>
    %516 = tpu.matmul %515, %514, %cst_123 {dimension_numbers = #tpu.dot_dimension_numbers<[1], [0], [0], [1], [0, 0, 1, 1], [], []>} : vector<16x8xbf16>, vector<8x32xbf16>, vector<16x32xf32> -> vector<16x32xf32>
    %517 = arith.addf %508, %516 : vector<16x32xf32>
    %518 = vector.extract_strided_slice %307 {offsets = [0, 896], sizes = [32, 16], strides = [1, 1]} : vector<32x1152xbf16> to vector<32x16xbf16>
    %519 = vector.extract_strided_slice %311 {offsets = [15, 0], sizes = [1, 16], strides = [1, 1]} : vector<19x96xf32> to vector<1x16xf32>
    %520 = vector.extract_strided_slice %309 {offsets = [80, 0], sizes = [16, 32], strides = [1, 1]} : vector<112x32xbf16> to vector<16x32xbf16>
    %521 = vector.extract_strided_slice %311 {offsets = [16, 0], sizes = [1, 32], strides = [1, 1]} : vector<19x96xf32> to vector<1x32xf32>
    %522 = arith.truncf %517 : vector<16x32xf32> to vector<16x32xbf16>
    %cst_124 = arith.constant dense<0.000000e+00> : vector<16x16xf32>
    %523 = tpu.matmul %522, %518, %cst_124 {dimension_numbers = #tpu.dot_dimension_numbers<[1], [0], [0], [1], [0, 0, 1, 1], [], []>} : vector<16x32xbf16>, vector<32x16xbf16>, vector<16x16xf32> -> vector<16x16xf32>
    %524 = vector.broadcast %519 : vector<1x16xf32> to vector<16x16xf32>
    %525 = arith.addf %523, %524 : vector<16x16xf32>
    %cst_125 = arith.constant 0.000000e+00 : f32
    %526 = vector.broadcast %cst_125 : f32 to vector<16x16xf32>
    %527 = arith.maximumf %525, %526 : vector<16x16xf32>
    %528 = arith.truncf %527 : vector<16x16xf32> to vector<16x16xbf16>
    %cst_126 = arith.constant dense<0.000000e+00> : vector<16x32xf32>
    %529 = tpu.matmul %528, %520, %cst_126 {dimension_numbers = #tpu.dot_dimension_numbers<[1], [0], [0], [1], [0, 0, 1, 1], [], []>} : vector<16x16xbf16>, vector<16x32xbf16>, vector<16x32xf32> -> vector<16x32xf32>
    %530 = vector.broadcast %521 : vector<1x32xf32> to vector<16x32xf32>
    %531 = arith.addf %529, %530 : vector<16x32xf32>
    %532 = arith.addf %531, %517 : vector<16x32xf32>
    %533 = arith.addf %431, %532 : vector<16x32xf32>
    %534 = vector.extract_strided_slice %311 {offsets = [9, 0], sizes = [1, 32], strides = [1, 1]} : vector<19x96xf32> to vector<1x32xf32>
    %535 = vector.extract_strided_slice %311 {offsets = [10, 0], sizes = [1, 32], strides = [1, 1]} : vector<19x96xf32> to vector<1x32xf32>
    %cst_127 = arith.constant dense<0.000000e+00> : vector<16xf32>
    %536 = vector.multi_reduction <add>, %533, %cst_127 [1] : vector<16x32xf32> to vector<16xf32>
    %537 = vector.shape_cast %536 : vector<16xf32> to vector<16x1xf32>
    %cst_128 = arith.constant 3.200000e+01 : f32
    %538 = vector.broadcast %cst_128 : f32 to vector<16x1xf32>
    %539 = arith.divf %537, %538 : vector<16x1xf32>
    %540 = vector.broadcast %539 : vector<16x1xf32> to vector<16x32xf32>
    %541 = arith.subf %533, %540 : vector<16x32xf32>
    %542 = arith.mulf %541, %541 : vector<16x32xf32>
    %cst_129 = arith.constant dense<0.000000e+00> : vector<16xf32>
    %543 = vector.multi_reduction <add>, %542, %cst_129 [1] : vector<16x32xf32> to vector<16xf32>
    %544 = vector.shape_cast %543 : vector<16xf32> to vector<16x1xf32>
    %cst_130 = arith.constant 3.200000e+01 : f32
    %545 = vector.broadcast %cst_130 : f32 to vector<16x1xf32>
    %546 = arith.divf %544, %545 : vector<16x1xf32>
    %cst_131 = arith.constant 9.99999974E-6 : f32
    %547 = vector.broadcast %cst_131 : f32 to vector<16x1xf32>
    %548 = arith.addf %546, %547 : vector<16x1xf32>
    %549 = math.rsqrt %548 : vector<16x1xf32>
    %550 = vector.broadcast %549 : vector<16x1xf32> to vector<16x32xf32>
    %551 = arith.mulf %541, %550 : vector<16x32xf32>
    %552 = vector.broadcast %534 : vector<1x32xf32> to vector<16x32xf32>
    %553 = arith.mulf %551, %552 : vector<16x32xf32>
    %554 = vector.broadcast %535 : vector<1x32xf32> to vector<16x32xf32>
    %555 = arith.addf %553, %554 : vector<16x32xf32>
    %556 = arith.truncf %555 : vector<16x32xf32> to vector<16x32xbf16>
    %557 = vector.extract_strided_slice %307 {offsets = [0, 384], sizes = [32, 64], strides = [1, 1]} : vector<32x1152xbf16> to vector<32x64xbf16>
    %cst_132 = arith.constant dense<0.000000e+00> : vector<16x64xf32>
    %558 = tpu.matmul %556, %557, %cst_132 {dimension_numbers = #tpu.dot_dimension_numbers<[1], [0], [0], [1], [0, 0, 1, 1], [], []>} : vector<16x32xbf16>, vector<32x64xbf16>, vector<16x64xf32> -> vector<16x64xf32>
    %559 = vector.extract_strided_slice %311 {offsets = [3, 0], sizes = [1, 64], strides = [1, 1]} : vector<19x96xf32> to vector<1x64xf32>
    %560 = vector.broadcast %559 : vector<1x64xf32> to vector<16x64xf32>
    %561 = arith.addf %558, %560 : vector<16x64xf32>
    %cst_133 = arith.constant 0.000000e+00 : f32
    %562 = vector.broadcast %cst_133 : f32 to vector<16x64xf32>
    %563 = arith.maximumf %561, %562 : vector<16x64xf32>
    %564 = vector.extract_strided_slice %309 {offsets = [0, 0], sizes = [64, 32], strides = [1, 1]} : vector<112x32xbf16> to vector<64x32xbf16>
    %565 = arith.truncf %563 : vector<16x64xf32> to vector<16x64xbf16>
    %cst_134 = arith.constant dense<0.000000e+00> : vector<16x32xf32>
    %566 = tpu.matmul %565, %564, %cst_134 {dimension_numbers = #tpu.dot_dimension_numbers<[1], [0], [0], [1], [0, 0, 1, 1], [], []>} : vector<16x64xbf16>, vector<64x32xbf16>, vector<16x32xf32> -> vector<16x32xf32>
    %567 = vector.extract_strided_slice %311 {offsets = [6, 0], sizes = [1, 32], strides = [1, 1]} : vector<19x96xf32> to vector<1x32xf32>
    %568 = vector.broadcast %567 : vector<1x32xf32> to vector<16x32xf32>
    %569 = arith.addf %566, %568 : vector<16x32xf32>
    %570 = vector.extract_strided_slice %307 {offsets = [0, 1024], sizes = [32, 16], strides = [1, 1]} : vector<32x1152xbf16> to vector<32x16xbf16>
    %571 = vector.extract_strided_slice %311 {offsets = [17, 0], sizes = [1, 16], strides = [1, 1]} : vector<19x96xf32> to vector<1x16xf32>
    %572 = vector.extract_strided_slice %309 {offsets = [96, 0], sizes = [16, 32], strides = [1, 1]} : vector<112x32xbf16> to vector<16x32xbf16>
    %573 = vector.extract_strided_slice %311 {offsets = [18, 0], sizes = [1, 32], strides = [1, 1]} : vector<19x96xf32> to vector<1x32xf32>
    %574 = arith.truncf %569 : vector<16x32xf32> to vector<16x32xbf16>
    %cst_135 = arith.constant dense<0.000000e+00> : vector<16x16xf32>
    %575 = tpu.matmul %574, %570, %cst_135 {dimension_numbers = #tpu.dot_dimension_numbers<[1], [0], [0], [1], [0, 0, 1, 1], [], []>} : vector<16x32xbf16>, vector<32x16xbf16>, vector<16x16xf32> -> vector<16x16xf32>
    %576 = vector.broadcast %571 : vector<1x16xf32> to vector<16x16xf32>
    %577 = arith.addf %575, %576 : vector<16x16xf32>
    %cst_136 = arith.constant 0.000000e+00 : f32
    %578 = vector.broadcast %cst_136 : f32 to vector<16x16xf32>
    %579 = arith.maximumf %577, %578 : vector<16x16xf32>
    %580 = arith.truncf %579 : vector<16x16xf32> to vector<16x16xbf16>
    %cst_137 = arith.constant dense<0.000000e+00> : vector<16x32xf32>
    %581 = tpu.matmul %580, %572, %cst_137 {dimension_numbers = #tpu.dot_dimension_numbers<[1], [0], [0], [1], [0, 0, 1, 1], [], []>} : vector<16x16xbf16>, vector<16x32xbf16>, vector<16x32xf32> -> vector<16x32xf32>
    %582 = vector.broadcast %573 : vector<1x32xf32> to vector<16x32xf32>
    %583 = arith.addf %581, %582 : vector<16x32xf32>
    %584 = arith.addf %583, %569 : vector<16x32xf32>
    %585 = arith.addf %555, %584 : vector<16x32xf32>
    %586 = vector.extract_strided_slice %311 {offsets = [11, 0], sizes = [1, 32], strides = [1, 1]} : vector<19x96xf32> to vector<1x32xf32>
    %587 = vector.extract_strided_slice %311 {offsets = [12, 0], sizes = [1, 32], strides = [1, 1]} : vector<19x96xf32> to vector<1x32xf32>
    %cst_138 = arith.constant dense<0.000000e+00> : vector<16xf32>
    %588 = vector.multi_reduction <add>, %585, %cst_138 [1] : vector<16x32xf32> to vector<16xf32>
    %589 = vector.shape_cast %588 : vector<16xf32> to vector<16x1xf32>
    %cst_139 = arith.constant 3.200000e+01 : f32
    %590 = vector.broadcast %cst_139 : f32 to vector<16x1xf32>
    %591 = arith.divf %589, %590 : vector<16x1xf32>
    %592 = vector.broadcast %591 : vector<16x1xf32> to vector<16x32xf32>
    %593 = arith.subf %585, %592 : vector<16x32xf32>
    %594 = arith.mulf %593, %593 : vector<16x32xf32>
    %cst_140 = arith.constant dense<0.000000e+00> : vector<16xf32>
    %595 = vector.multi_reduction <add>, %594, %cst_140 [1] : vector<16x32xf32> to vector<16xf32>
    %596 = vector.shape_cast %595 : vector<16xf32> to vector<16x1xf32>
    %cst_141 = arith.constant 3.200000e+01 : f32
    %597 = vector.broadcast %cst_141 : f32 to vector<16x1xf32>
    %598 = arith.divf %596, %597 : vector<16x1xf32>
    %cst_142 = arith.constant 9.99999974E-6 : f32
    %599 = vector.broadcast %cst_142 : f32 to vector<16x1xf32>
    %600 = arith.addf %598, %599 : vector<16x1xf32>
    %601 = math.rsqrt %600 : vector<16x1xf32>
    %602 = vector.broadcast %601 : vector<16x1xf32> to vector<16x32xf32>
    %603 = arith.mulf %593, %602 : vector<16x32xf32>
    %604 = vector.broadcast %586 : vector<1x32xf32> to vector<16x32xf32>
    %605 = arith.mulf %603, %604 : vector<16x32xf32>
    %606 = vector.broadcast %587 : vector<1x32xf32> to vector<16x32xf32>
    %607 = arith.addf %605, %606 : vector<16x32xf32>
    %c0_143 = arith.constant 0 : index
    %c0_144 = arith.constant 0 : index
    %608 = vector.load %arg7[%c0_143, %c0_144] : memref<16x32xf32, #tpu.memory_space<vmem>>, vector<16x32xf32>
    tpu.vector_store %arg7[%c0_143, %c0_144], %607 {strides = array<i32>} : memref<16x32xf32, #tpu.memory_space<vmem>>, vector<16x32xf32>,
    return
  }
}

</mosaic_0001>

<llo_original>
// kernel: decoder_with_adapter.1
$region0: #{decoder_with_adapter.1}
  #allocation0 [shape = 'u32[]', space=smem, size = 0x4, offset = 0x4, fixed_abs, tag = 'smem constant byte address 0x4 - core index']
  #allocation1 [shape = 'u32[144,128]{1,0:T(1,128)}', space=vmem, size = 0x12000, scoped, tag = 'internal scratch']
  %s0 = inlined_call_operand.vmem [shape: f32[16,32], index: 0, kind: input, shape index: {}]
  %s1 = inlined_call_operand.vmem [shape: bf16[16,32], index: 1, kind: input, shape index: {}]
  %s2 = inlined_call_operand.vmem [shape: f32[64,16], index: 2, kind: input, shape index: {}]
  %s3 = inlined_call_operand.vmem [shape: f32[64,16], index: 3, kind: input, shape index: {}]
  %s4 = inlined_call_operand.vmem [shape: bf16[2,32,1152], index: 4, kind: input, shape index: {}]
  %s5 = inlined_call_operand.vmem [shape: bf16[2,112,32], index: 5, kind: input, shape index: {}]
  %s6 = inlined_call_operand.vmem [shape: f32[2,19,96], index: 6, kind: input, shape index: {}]
  %s7 = inlined_call_operand.hbm [shape: f32[16,32], index: 7, kind: output, shape index: {}]
  %s8 = sld [smem:[#allocation0]]
  $region38: #{decoder_with_adapter.1} parent=0
    _
  %s10 = ssub.s32 1, %s8
  %s11 = scalar_select 0, %s10, %s8
  $region1: #{decoder_with_adapter.1} parent=0
    #allocation2 [shape = 'u8[8192]{0}', space=vmem, size = 0x2000, scoped, tag = 'output window, operand 0, single buffered']
    #allocation3 [shape = 's32[1]{0}', space=sflag, size = 0x4, scoped, tag = 'scoped memory for decoder_with_adapter.1']
    %12 = vsyncpa [#allocation3], 0
    // Predicated region
    $region2: #{decoder_with_adapter.1} parent=1 // pred_check
      _
    $region3: #{decoder_with_adapter.1} parent=1 // pred_check_branch
      %14 = sbr.rel (0) target = $region5
    $region4: #{decoder_with_adapter.1} parent=1 // pred_region
      _
    $region5: #{decoder_with_adapter.1} parent=1 // pred_fallthru
      _
    // Predicated region
    $region6: #{decoder_with_adapter.1} parent=1 // pred_check
      _
    $region7: #{decoder_with_adapter.1} parent=1 // pred_check_branch
      %16 = sbr.rel (0) target = $region9
    $region8: #{decoder_with_adapter.1} parent=1 // pred_region
      _
    $region9: #{decoder_with_adapter.1} parent=1 // pred_fallthru
      _
    // Predicated region
    $region10: #{decoder_with_adapter.1} parent=1 // pred_check
      _
    $region11: #{decoder_with_adapter.1} parent=1 // pred_check_branch
      %18 = sbr.rel (0) target = $region13
    $region12: #{decoder_with_adapter.1} parent=1 // pred_region
      _
    $region13: #{decoder_with_adapter.1} parent=1 // pred_fallthru
      _
    // Predicated region
    $region14: #{decoder_with_adapter.1} parent=1 // pred_check
      _
    $region15: #{decoder_with_adapter.1} parent=1 // pred_check_branch
      %20 = sbr.rel (0) target = $region17
    $region16: #{decoder_with_adapter.1} parent=1 // pred_region
      _
    $region17: #{decoder_with_adapter.1} parent=1 // pred_fallthru
      _
    // Predicated region
    $region18: #{decoder_with_adapter.1} parent=1 // pred_check
      _
    $region19: #{decoder_with_adapter.1} parent=1 // pred_check_branch
      %22 = sbr.rel (0) target = $region21
    $region20: #{decoder_with_adapter.1} parent=1 // pred_region
      _
    $region21: #{decoder_with_adapter.1} parent=1 // pred_fallthru
      _
    // Predicated region
    $region22: #{decoder_with_adapter.1} parent=1 // pred_check
      _
    $region23: #{decoder_with_adapter.1} parent=1 // pred_check_branch
      %24 = sbr.rel (0) target = $region25
    $region24: #{decoder_with_adapter.1} parent=1 // pred_region
      _
    $region25: #{decoder_with_adapter.1} parent=1 // pred_fallthru
      _
    // Predicated region
    $region26: #{decoder_with_adapter.1} parent=1 // pred_check
      _
    $region27: #{decoder_with_adapter.1} parent=1 // pred_check_branch
      %26 = sbr.rel (0) target = $region29
    $region28: #{decoder_with_adapter.1} parent=1 // pred_region
      _
    $region29: #{decoder_with_adapter.1} parent=1 // pred_fallthru
      _
    %v28 = vld [vmem:[%s0] sm:$0xff]
    %v29 = vld [vmem:[%s0 + $0x8] sm:$0xff]
    %v30 = vld [vmem:[%s1] sm:$0xf]
    %v31 = vld [vmem:[%s1 + $0x4] sm:$0xf]
    %v32 = vld [vmem:[%s2] sm:$0xff]
    %v33 = vld [vmem:[%s2 + $0x8] sm:$0xff]
    %v34 = vld [vmem:[%s2 + $0x10] sm:$0xff]
    %v35 = vld [vmem:[%s2 + $0x18] sm:$0xff]
    %v36 = vld [vmem:[%s2 + $0x20] sm:$0xff]
    %v37 = vld [vmem:[%s2 + $0x28] sm:$0xff]
    %v38 = vld [vmem:[%s2 + $0x30] sm:$0xff]
    %v39 = vld [vmem:[%s2 + $0x38] sm:$0xff]
    %v40 = vld [vmem:[%s3] sm:$0xff]
    %v41 = vld [vmem:[%s3 + $0x8] sm:$0xff]
    %v42 = vld [vmem:[%s3 + $0x10] sm:$0xff]
    %v43 = vld [vmem:[%s3 + $0x18] sm:$0xff]
    %v44 = vld [vmem:[%s3 + $0x20] sm:$0xff]
    %v45 = vld [vmem:[%s3 + $0x28] sm:$0xff]
    %v46 = vld [vmem:[%s3 + $0x30] sm:$0xff]
    %v47 = vld [vmem:[%s3 + $0x38] sm:$0xff]
    %v48 = vld [vmem:[%s4] sm:$0xff]
    %v49 = vld [vmem:[%s4 + $0x8] sm:$0xff]
    %v50 = vld [vmem:[%s4 + $0x10] sm:$0xff]
    %v51 = vld [vmem:[%s4 + $0x18] sm:$0xff]
    %v52 = vld [vmem:[%s4 + $0x20] sm:$0xf]
    %v53 = vld [vmem:[%s4 + $0x24] sm:$0xff]
    %v54 = vld [vmem:[%s4 + $0x2c] sm:$0xff]
    %v55 = vld [vmem:[%s4 + $0x34] sm:$0xff]
    %v56 = vld [vmem:[%s4 + $0x3c] sm:$0xff]
    %v57 = vld [vmem:[%s4 + $0x44] sm:$0xf]
    %v58 = vld [vmem:[%s4 + $0x48] sm:$0xff]
    %v59 = vld [vmem:[%s4 + $0x50] sm:$0xff]
    %v60 = vld [vmem:[%s4 + $0x58] sm:$0xff]
    %v61 = vld [vmem:[%s4 + $0x60] sm:$0xff]
    %v62 = vld [vmem:[%s4 + $0x68] sm:$0xf]
    %v63 = vld [vmem:[%s4 + $0x6c] sm:$0xff]
    %v64 = vld [vmem:[%s4 + $0x74] sm:$0xff]
    %v65 = vld [vmem:[%s4 + $0x7c] sm:$0xff]
    %v66 = vld [vmem:[%s4 + $0x84] sm:$0xff]
    %v67 = vld [vmem:[%s4 + $0x8c] sm:$0xf]
    %v68 = vld [vmem:[%s5] sm:$0xf]
    %v69 = vld [vmem:[%s5 + $0x4] sm:$0xf]
    %v70 = vld [vmem:[%s5 + $0x8] sm:$0xf]
    %v71 = vld [vmem:[%s5 + $0xc] sm:$0xf]
    %v72 = vld [vmem:[%s5 + $0x10] sm:$0xf]
    %v73 = vld [vmem:[%s5 + $0x14] sm:$0xf]
    %v74 = vld [vmem:[%s5 + $0x18] sm:$0xf]
    %v75 = vld [vmem:[%s5 + $0x1c] sm:$0xf]
    %v76 = vld [vmem:[%s5 + $0x20] sm:$0xf]
    %v77 = vld [vmem:[%s5 + $0x24] sm:$0xf]
    %v78 = vld [vmem:[%s5 + $0x28] sm:$0xf]
    %v79 = vld [vmem:[%s5 + $0x2c] sm:$0xf]
    %v80 = vld [vmem:[%s5 + $0x30] sm:$0xf]
    %v81 = vld [vmem:[%s5 + $0x34] sm:$0xf]
    %v82 = vld [vmem:[%s6] sm:$0xff]
    %v83 = vld [vmem:[%s6 + $0x8] sm:$0xff]
    %v84 = vld [vmem:[%s6 + $0x10] sm:$0x7]
    %v85 = vpack.c.bf16 %v29, %v28
    %v86 = vlaneseq
    %v87 = vshrl.u32 %v86, 7
    %v88 = vsub.s32 0, %v87
    %v89 = vrot.slane %v82, %v88
    %v94 = vunpack.c.l.b16 %v48
    %v95 = vunpack.c.l.b16 %v53
    %v96 = vunpack.c.l.b16 %v58
    %v97 = vunpack.c.l.b16 %v63
    %v98 = vpack.c.b16 %v95, %v94
    %v99 = vpack.c.b16 %v97, %v96
    %vm102 = vcmask 261120
    %v104 = vsel %vm102, %v85, 0
    %106 = vmatprep.subr.bf16.mxu0 0
    %107 = vmatpush1.bf16.msra.mxu0 %v98
    %108 = vmatprep.subr.bf16.mxu0 0
    %109 = vmatpush1.bf16.msra.mxu0 %v99
    %110 = vmatprep.subr.bf16.mxu0 0
    %111 = vmatpush1.bf16.msra.mxu0 0
    %112 = vmatprep.subr.bf16.mxu0 0
    %113 = vmatpush1.bf16.msra.mxu0 0
    %114 = vmatprep.subr.bf16.mxu0 0
    %115 = vmatpush1.bf16.msra.mxu0 0
    %116 = vmatprep.subr.bf16.mxu0 0
    %117 = vmatpush1.bf16.msra.mxu0 0
    %118 = vmatprep.subr.bf16.mxu0 0
    %119 = vmatpush1.bf16.msra.mxu0 0
    %120 = vmatprep.subr.bf16.mxu0 0
    %121 = vmatpush1.bf16.msra.mxu0 0
    %122 = vmatprep.subr.bf16.mxu0 0
    %123 = vmatpush1.bf16.msra.mxu0 0
    %124 = vmatprep.subr.bf16.mxu0 0
    %125 = vmatpush1.bf16.msra.mxu0 0
    %126 = vmatprep.subr.bf16.mxu0 0
    %127 = vmatpush1.bf16.msra.mxu0 0
    %128 = vmatprep.subr.bf16.mxu0 0
    %129 = vmatpush1.bf16.msra.mxu0 0
    %130 = vmatprep.subr.bf16.mxu0 0
    %131 = vmatpush1.bf16.msra.mxu0 0
    %132 = vmatprep.subr.bf16.mxu0 0
    %133 = vmatpush1.bf16.msra.mxu0 0
    %134 = vmatprep.subr.bf16.mxu0 0
    %135 = vmatpush1.bf16.msra.mxu0 0
    %136 = vmatprep.subr.bf16.mxu0 0
    %137 = vmatpush1.bf16.msra.mxu0 0
    %138 = vmatprep.mubr.bf16.mxu0 0
    %139 = vmatmul.mubr.bf16.gmra.mrb[0].mxu0 %v104
    %v140 = vpop.f32.mrb[0].mxu0
    %v141 = vadd.f32 %v89, %v140
    %v142 = vpop.f32.mrb[0].mxu0
    %v143 = vpop.f32.mrb[0].mxu0
    %v144 = vadd.f32 %v89, %v143
    %v145 = vpop.f32.mrb[0].mxu0
    %146 = vdwg.mxu0
    %v147 = vpack.c.bf16 %v144, %v141
    %149 = vrot.lane.b32.xlu0 %v147, 96
    %v150 = vpop.permute.xlu0 %149
    %vm151 = vcmask 64512
    %v153 = vsel %vm151, %v147, 0
    %v156 = vsel %vm151, %v150, 0
    %158 = vmatprep.subr.bf16.mxu0 0
    %159 = vmatpush1.bf16.xpose.msra.mxu0 %v156
    %160 = vmatprep.subr.bf16.mxu0 0
    %161 = vmatpush1.bf16.xpose.msra.mxu0 0
    %162 = vmatprep.subr.bf16.mxu0 0
    %163 = vmatpush1.bf16.xpose.msra.mxu0 0
    %164 = vmatprep.subr.bf16.mxu0 0
    %165 = vmatpush1.bf16.xpose.msra.mxu0 0
    %166 = vmatprep.subr.bf16.mxu0 0
    %167 = vmatpush1.bf16.xpose.msra.mxu0 0
    %168 = vmatprep.subr.bf16.mxu0 0
    %169 = vmatpush1.bf16.xpose.msra.mxu0 0
    %170 = vmatprep.subr.bf16.mxu0 0
    %171 = vmatpush1.bf16.xpose.msra.mxu0 0
    %172 = vmatprep.subr.bf16.mxu0 0
    %173 = vmatpush1.bf16.xpose.msra.mxu0 0
    %174 = vmatprep.subr.bf16.mxu0 0
    %175 = vmatpush1.bf16.xpose.msra.mxu0 0
    %176 = vmatprep.subr.bf16.mxu0 0
    %177 = vmatpush1.bf16.xpose.msra.mxu0 0
    %178 = vmatprep.subr.bf16.mxu0 0
    %179 = vmatpush1.bf16.xpose.msra.mxu0 0
    %180 = vmatprep.subr.bf16.mxu0 0
    %181 = vmatpush1.bf16.xpose.msra.mxu0 0
    %182 = vmatprep.subr.bf16.mxu0 0
    %183 = vmatpush1.bf16.xpose.msra.mxu0 0
    %184 = vmatprep.subr.bf16.mxu0 0
    %185 = vmatpush1.bf16.xpose.msra.mxu0 0
    %186 = vmatprep.subr.bf16.mxu0 0
    %187 = vmatpush1.bf16.xpose.msra.mxu0 0
    %188 = vmatprep.subr.bf16.mxu0 0
    %189 = vmatpush1.bf16.xpose.msra.mxu0 0
    %190 = vmatprep.mubr.bf16.mxu0 0
    %191 = vmatmul.mubr.bf16.gmra.mrb[0].mxu0 %v153
    %v192 = vpop.f32.mrb[0].mxu0
    %v193 = vadd.f32 0.0, %v192
    %v194 = vpop.f32.mrb[0].mxu0
    %v195 = vpop.f32.mrb[0].mxu0
    %v196 = vadd.f32 0.0, %v195
    %v197 = vpop.f32.mrb[0].mxu0
    %198 = vdwg.mxu0
    %199 = vrot.lane.b32.xlu0 %v147, 120
    %v200 = vpop.permute.xlu0 %199
    %201 = vrot.lane.b32.xlu0 %v147, 88
    %v202 = vpop.permute.xlu0 %201
    %v204 = vsel %vm151, %v200, 0
    %v207 = vsel %vm151, %v202, 0
    %209 = vmatprep.subr.bf16.mxu0 0
    %210 = vmatpush1.bf16.xpose.msra.mxu0 %v207
    %211 = vmatprep.subr.bf16.mxu0 0
    %212 = vmatpush1.bf16.xpose.msra.mxu0 0
    %213 = vmatprep.subr.bf16.mxu0 0
    %214 = vmatpush1.bf16.xpose.msra.mxu0 0
    %215 = vmatprep.subr.bf16.mxu0 0
    %216 = vmatpush1.bf16.xpose.msra.mxu0 0
    %217 = vmatprep.subr.bf16.mxu0 0
    %218 = vmatpush1.bf16.xpose.msra.mxu0 0
    %219 = vmatprep.subr.bf16.mxu0 0
    %220 = vmatpush1.bf16.xpose.msra.mxu0 0
    %221 = vmatprep.subr.bf16.mxu0 0
    %222 = vmatpush1.bf16.xpose.msra.mxu0 0
    %223 = vmatprep.subr.bf16.mxu0 0
    %224 = vmatpush1.bf16.xpose.msra.mxu0 0
    %225 = vmatprep.subr.bf16.mxu0 0
    %226 = vmatpush1.bf16.xpose.msra.mxu0 0
    %227 = vmatprep.subr.bf16.mxu0 0
    %228 = vmatpush1.bf16.xpose.msra.mxu0 0
    %229 = vmatprep.subr.bf16.mxu0 0
    %230 = vmatpush1.bf16.xpose.msra.mxu0 0
    %231 = vmatprep.subr.bf16.mxu0 0
    %232 = vmatpush1.bf16.xpose.msra.mxu0 0
    %233 = vmatprep.subr.bf16.mxu0 0
    %234 = vmatpush1.bf16.xpose.msra.mxu0 0
    %235 = vmatprep.subr.bf16.mxu0 0
    %236 = vmatpush1.bf16.xpose.msra.mxu0 0
    %237 = vmatprep.subr.bf16.mxu0 0
    %238 = vmatpush1.bf16.xpose.msra.mxu0 0
    %239 = vmatprep.subr.bf16.mxu0 0
    %240 = vmatpush1.bf16.xpose.msra.mxu0 0
    %241 = vmatprep.mubr.bf16.mxu0 0
    %242 = vmatmul.mubr.bf16.gmra.mrb[0].mxu0 %v204
    %v243 = vpop.f32.mrb[0].mxu0
    %v244 = vadd.f32 0.0, %v243
    %v245 = vpop.f32.mrb[0].mxu0
    %v246 = vpop.f32.mrb[0].mxu0
    %v247 = vadd.f32 0.0, %v246
    %v248 = vpop.f32.mrb[0].mxu0
    %249 = vdwg.mxu0
    %250 = vrot.lane.b32.xlu0 %v147, 112
    %v251 = vpop.permute.xlu0 %250
    %252 = vrot.lane.b32.xlu0 %v147, 80
    %v253 = vpop.permute.xlu0 %252
    %v255 = vsel %vm151, %v251, 0
    %v258 = vsel %vm151, %v253, 0
    %260 = vmatprep.subr.bf16.mxu0 0
    %261 = vmatpush1.bf16.xpose.msra.mxu0 %v258
    %262 = vmatprep.subr.bf16.mxu0 0
    %263 = vmatpush1.bf16.xpose.msra.mxu0 0
    %264 = vmatprep.subr.bf16.mxu0 0
    %265 = vmatpush1.bf16.xpose.msra.mxu0 0
    %266 = vmatprep.subr.bf16.mxu0 0
    %267 = vmatpush1.bf16.xpose.msra.mxu0 0
    %268 = vmatprep.subr.bf16.mxu0 0
    %269 = vmatpush1.bf16.xpose.msra.mxu0 0
    %270 = vmatprep.subr.bf16.mxu0 0
    %271 = vmatpush1.bf16.xpose.msra.mxu0 0
    %272 = vmatprep.subr.bf16.mxu0 0
    %273 = vmatpush1.bf16.xpose.msra.mxu0 0
    %274 = vmatprep.subr.bf16.mxu0 0
    %275 = vmatpush1.bf16.xpose.msra.mxu0 0
    %276 = vmatprep.subr.bf16.mxu0 0
    %277 = vmatpush1.bf16.xpose.msra.mxu0 0
    %278 = vmatprep.subr.bf16.mxu0 0
    %279 = vmatpush1.bf16.xpose.msra.mxu0 0
    %280 = vmatprep.subr.bf16.mxu0 0
    %281 = vmatpush1.bf16.xpose.msra.mxu0 0
    %282 = vmatprep.subr.bf16.mxu0 0
    %283 = vmatpush1.bf16.xpose.msra.mxu0 0
    %284 = vmatprep.subr.bf16.mxu0 0
    %285 = vmatpush1.bf16.xpose.msra.mxu0 0
    %286 = vmatprep.subr.bf16.mxu0 0
    %287 = vmatpush1.bf16.xpose.msra.mxu0 0
    %288 = vmatprep.subr.bf16.mxu0 0
    %289 = vmatpush1.bf16.xpose.msra.mxu0 0
    %290 = vmatprep.subr.bf16.mxu0 0
    %291 = vmatpush1.bf16.xpose.msra.mxu0 0
    %292 = vmatprep.mubr.bf16.mxu0 0
    %293 = vmatmul.mubr.bf16.gmra.mrb[0].mxu0 %v255
    %v294 = vpop.f32.mrb[0].mxu0
    %v295 = vadd.f32 0.0, %v294
    %v296 = vpop.f32.mrb[0].mxu0
    %v297 = vpop.f32.mrb[0].mxu0
    %v298 = vadd.f32 0.0, %v297
    %v299 = vpop.f32.mrb[0].mxu0
    %300 = vdwg.mxu0
    %301 = vrot.lane.b32.xlu0 %v147, 104
    %v302 = vpop.permute.xlu0 %301
    %303 = vrot.lane.b32.xlu0 %v147, 72
    %v304 = vpop.permute.xlu0 %303
    %v306 = vsel %vm151, %v302, 0
    %v309 = vsel %vm151, %v304, 0
    %311 = vmatprep.subr.bf16.mxu0 0
    %312 = vmatpush1.bf16.xpose.msra.mxu0 %v309
    %313 = vmatprep.subr.bf16.mxu0 0
    %314 = vmatpush1.bf16.xpose.msra.mxu0 0
    %315 = vmatprep.subr.bf16.mxu0 0
    %316 = vmatpush1.bf16.xpose.msra.mxu0 0
    %317 = vmatprep.subr.bf16.mxu0 0
    %318 = vmatpush1.bf16.xpose.msra.mxu0 0
    %319 = vmatprep.subr.bf16.mxu0 0
    %320 = vmatpush1.bf16.xpose.msra.mxu0 0
    %321 = vmatprep.subr.bf16.mxu0 0
    %322 = vmatpush1.bf16.xpose.msra.mxu0 0
    %323 = vmatprep.subr.bf16.mxu0 0
    %324 = vmatpush1.bf16.xpose.msra.mxu0 0
    %325 = vmatprep.subr.bf16.mxu0 0
    %326 = vmatpush1.bf16.xpose.msra.mxu0 0
    %327 = vmatprep.subr.bf16.mxu0 0
    %328 = vmatpush1.bf16.xpose.msra.mxu0 0
    %329 = vmatprep.subr.bf16.mxu0 0
    %330 = vmatpush1.bf16.xpose.msra.mxu0 0
    %331 = vmatprep.subr.bf16.mxu0 0
    %332 = vmatpush1.bf16.xpose.msra.mxu0 0
    %333 = vmatprep.subr.bf16.mxu0 0
    %334 = vmatpush1.bf16.xpose.msra.mxu0 0
    %335 = vmatprep.subr.bf16.mxu0 0
    %336 = vmatpush1.bf16.xpose.msra.mxu0 0
    %337 = vmatprep.subr.bf16.mxu0 0
    %338 = vmatpush1.bf16.xpose.msra.mxu0 0
    %339 = vmatprep.subr.bf16.mxu0 0
    %340 = vmatpush1.bf16.xpose.msra.mxu0 0
    %341 = vmatprep.subr.bf16.mxu0 0
    %342 = vmatpush1.bf16.xpose.msra.mxu0 0
    %343 = vmatprep.mubr.bf16.mxu0 0
    %344 = vmatmul.mubr.bf16.gmra.mrb[0].mxu0 %v306
    %v345 = vpop.f32.mrb[0].mxu0
    %v346 = vadd.f32 0.0, %v345
    %v347 = vpop.f32.mrb[0].mxu0
    %v348 = vpop.f32.mrb[0].mxu0
    %v349 = vadd.f32 0.0, %v348
    %v350 = vpop.f32.mrb[0].mxu0
    %351 = vdwg.mxu0
    %v352 = vadd.f32 %v193, %v32
    %v353 = vadd.f32 %v196, %v33
    %v354 = vadd.f32 %v244, %v34
    %v355 = vadd.f32 %v247, %v35
    %v356 = vadd.f32 %v295, %v36
    %v357 = vadd.f32 %v298, %v37
    %v358 = vadd.f32 %v346, %v38
    %v359 = vadd.f32 %v349, %v39
    %vm360 = vcmask 130048
    %v361 = vsel %vm360, %v352, -inf
    %362 = vmax.xlane.f32.xlu0 %v361
    %v363 = vpop.xlane.xlu0 %362
    %v364 = vsel %vm360, %v353, -inf
    %365 = vmax.xlane.f32.xlu0 %v364
    %v366 = vpop.xlane.xlu0 %365
    %v367 = vsel %vm360, %v354, -inf
    %368 = vmax.xlane.f32.xlu0 %v367
    %v369 = vpop.xlane.xlu0 %368
    %v370 = vsel %vm360, %v355, -inf
    %371 = vmax.xlane.f32.xlu0 %v370
    %v372 = vpop.xlane.xlu0 %371
    %v373 = vsel %vm360, %v356, -inf
    %374 = vmax.xlane.f32.xlu0 %v373
    %v375 = vpop.xlane.xlu0 %374
    %v376 = vsel %vm360, %v357, -inf
    %377 = vmax.xlane.f32.xlu0 %v376
    %v378 = vpop.xlane.xlu0 %377
    %v379 = vsel %vm360, %v358, -inf
    %380 = vmax.xlane.f32.xlu0 %v379
    %v381 = vpop.xlane.xlu0 %380
    %v382 = vsel %vm360, %v359, -inf
    %383 = vmax.xlane.f32.xlu0 %v382
    %v384 = vpop.xlane.xlu0 %383
    %v385 = vsub.f32 %v352, %v363
    %v386 = vsub.f32 %v353, %v366
    %v387 = vsub.f32 %v354, %v369
    %v388 = vsub.f32 %v355, %v372
    %v389 = vsub.f32 %v356, %v375
    %v390 = vsub.f32 %v357, %v378
    %v391 = vsub.f32 %v358, %v381
    %v392 = vsub.f32 %v359, %v384
    %v393 = vmul.f32 %v385, 1.442695
    %v394 = vpow.pop %v393
    %v395 = vmul.f32 %v386, 1.442695
    %v396 = vpow.pop %v395
    %v397 = vmul.f32 %v387, 1.442695
    %v398 = vpow.pop %v397
    %v399 = vmul.f32 %v388, 1.442695
    %v400 = vpow.pop %v399
    %v401 = vmul.f32 %v389, 1.442695
    %v402 = vpow.pop %v401
    %v403 = vmul.f32 %v390, 1.442695
    %v404 = vpow.pop %v403
    %v405 = vmul.f32 %v391, 1.442695
    %v406 = vpow.pop %v405
    %v407 = vmul.f32 %v392, 1.442695
    %v408 = vpow.pop %v407
    %v409 = vsel %vm360, %v394, 0.0
    %410 = vadd.xlane.f32.xlu0 %v409
    %v411 = vpop.xlane.xlu0 %410
    %v412 = vsel %vm360, %v396, 0.0
    %413 = vadd.xlane.f32.xlu0 %v412
    %v414 = vpop.xlane.xlu0 %413
    %v415 = vsel %vm360, %v398, 0.0
    %416 = vadd.xlane.f32.xlu0 %v415
    %v417 = vpop.xlane.xlu0 %416
    %v418 = vsel %vm360, %v400, 0.0
    %419 = vadd.xlane.f32.xlu0 %v418
    %v420 = vpop.xlane.xlu0 %419
    %v421 = vsel %vm360, %v402, 0.0
    %422 = vadd.xlane.f32.xlu0 %v421
    %v423 = vpop.xlane.xlu0 %422
    %v424 = vsel %vm360, %v404, 0.0
    %425 = vadd.xlane.f32.xlu0 %v424
    %v426 = vpop.xlane.xlu0 %425
    %v427 = vsel %vm360, %v406, 0.0
    %428 = vadd.xlane.f32.xlu0 %v427
    %v429 = vpop.xlane.xlu0 %428
    %v430 = vsel %vm360, %v408, 0.0
    %431 = vadd.xlane.f32.xlu0 %v430
    %v432 = vpop.xlane.xlu0 %431
    %v433 = vrcp.pop %v411
    %v434 = vrcp.pop %v414
    %v435 = vrcp.pop %v417
    %v436 = vrcp.pop %v420
    %v437 = vrcp.pop %v423
    %v438 = vrcp.pop %v426
    %v439 = vrcp.pop %v429
    %v440 = vrcp.pop %v432
    %v441 = vmul.f32 %v394, %v433
    %v442 = vmul.f32 %v396, %v434
    %v443 = vmul.f32 %v398, %v435
    %v444 = vmul.f32 %v400, %v436
    %v445 = vmul.f32 %v402, %v437
    %v446 = vmul.f32 %v404, %v438
    %v447 = vmul.f32 %v406, %v439
    %v448 = vmul.f32 %v408, %v440
    %v449 = vlaneseq
    %v450 = vshrl.u32 %v449, 7
    %v451 = vsub.s32 4, %v450
    %v452 = vrot.slane %v82, %v451
    %v453 = vadd.f32 %v452, 0.0
    %v454 = vpack.c.bf16 %v442, %v441
    %455 = vrot.lane.b32.xlu0 %v147, 64
    %v456 = vpop.permute.xlu0 %455
    %v459 = vsel %vm360, %v454, 0
    %461 = vmatprep.subr.bf16.mxu0 0
    %462 = vmatpush1.bf16.msra.mxu0 %v456
    %463 = vmatprep.subr.bf16.mxu0 0
    %464 = vmatpush1.bf16.msra.mxu0 0
    %465 = vmatprep.subr.bf16.mxu0 0
    %466 = vmatpush1.bf16.msra.mxu0 0
    %467 = vmatprep.subr.bf16.mxu0 0
    %468 = vmatpush1.bf16.msra.mxu0 0
    %469 = vmatprep.subr.bf16.mxu0 0
    %470 = vmatpush1.bf16.msra.mxu0 0
    %471 = vmatprep.subr.bf16.mxu0 0
    %472 = vmatpush1.bf16.msra.mxu0 0
    %473 = vmatprep.subr.bf16.mxu0 0
    %474 = vmatpush1.bf16.msra.mxu0 0
    %475 = vmatprep.subr.bf16.mxu0 0
    %476 = vmatpush1.bf16.msra.mxu0 0
    %477 = vmatprep.subr.bf16.mxu0 0
    %478 = vmatpush1.bf16.msra.mxu0 0
    %479 = vmatprep.subr.bf16.mxu0 0
    %480 = vmatpush1.bf16.msra.mxu0 0
    %481 = vmatprep.subr.bf16.mxu0 0
    %482 = vmatpush1.bf16.msra.mxu0 0
    %483 = vmatprep.subr.bf16.mxu0 0
    %484 = vmatpush1.bf16.msra.mxu0 0
    %485 = vmatprep.subr.bf16.mxu0 0
    %486 = vmatpush1.bf16.msra.mxu0 0
    %487 = vmatprep.subr.bf16.mxu0 0
    %488 = vmatpush1.bf16.msra.mxu0 0
    %489 = vmatprep.subr.bf16.mxu0 0
    %490 = vmatpush1.bf16.msra.mxu0 0
    %491 = vmatprep.subr.bf16.mxu0 0
    %492 = vmatpush1.bf16.msra.mxu0 0
    %493 = vmatprep.mubr.bf16.mxu0 0
    %494 = vmatmul.mubr.bf16.gmra.mrb[0].mxu0 %v459
    %v495 = vpop.f32.mrb[0].mxu0
    %v496 = vadd.f32 0.0, %v495
    %v497 = vpop.f32.mrb[0].mxu0
    %v498 = vpop.f32.mrb[0].mxu0
    %v499 = vadd.f32 0.0, %v498
    %v500 = vpop.f32.mrb[0].mxu0
    %501 = vdwg.mxu0
    %v502 = vpack.c.bf16 %v499, %v496
    %v504 = vsel %vm151, %v502, 0
    %vm506 = vcmask 1043456
    %v508 = vsel %vm506, %v50, 0
    %510 = vmatprep.subr.bf16.mxu0 0
    %511 = vmatpush1.bf16.msra.mxu0 %v508
    %512 = vmatprep.subr.bf16.mxu0 0
    %513 = vmatpush1.bf16.msra.mxu0 0
    %514 = vmatprep.subr.bf16.mxu0 0
    %515 = vmatpush1.bf16.msra.mxu0 0
    %516 = vmatprep.subr.bf16.mxu0 0
    %517 = vmatpush1.bf16.msra.mxu0 0
    %518 = vmatprep.subr.bf16.mxu0 0
    %519 = vmatpush1.bf16.msra.mxu0 0
    %520 = vmatprep.subr.bf16.mxu0 0
    %521 = vmatpush1.bf16.msra.mxu0 0
    %522 = vmatprep.subr.bf16.mxu0 0
    %523 = vmatpush1.bf16.msra.mxu0 0
    %524 = vmatprep.subr.bf16.mxu0 0
    %525 = vmatpush1.bf16.msra.mxu0 0
    %526 = vmatprep.subr.bf16.mxu0 0
    %527 = vmatpush1.bf16.msra.mxu0 0
    %528 = vmatprep.subr.bf16.mxu0 0
    %529 = vmatpush1.bf16.msra.mxu0 0
    %530 = vmatprep.subr.bf16.mxu0 0
    %531 = vmatpush1.bf16.msra.mxu0 0
    %532 = vmatprep.subr.bf16.mxu0 0
    %533 = vmatpush1.bf16.msra.mxu0 0
    %534 = vmatprep.subr.bf16.mxu0 0
    %535 = vmatpush1.bf16.msra.mxu0 0
    %536 = vmatprep.subr.bf16.mxu0 0
    %537 = vmatpush1.bf16.msra.mxu0 0
    %538 = vmatprep.subr.bf16.mxu0 0
    %539 = vmatpush1.bf16.msra.mxu0 0
    %540 = vmatprep.subr.bf16.mxu0 0
    %541 = vmatpush1.bf16.msra.mxu0 0
    %542 = vmatprep.mubr.bf16.mxu0 0
    %543 = vmatmul.mubr.bf16.gmra.mrb[0].mxu0 %v504
    %v544 = vpop.f32.mrb[0].mxu0
    %v545 = vadd.f32 0.0, %v544
    %v546 = vpop.f32.mrb[0].mxu0
    %v547 = vpop.f32.mrb[0].mxu0
    %v548 = vadd.f32 0.0, %v547
    %v549 = vpop.f32.mrb[0].mxu0
    %550 = vdwg.mxu0
    %v551 = vadd.f32 %v453, %v545
    %v552 = vadd.f32 %v453, %v548
    %v553 = vpack.c.bf16 %v444, %v443
    %554 = vrot.lane.b32.xlu0 %v147, 56
    %v555 = vpop.permute.xlu0 %554
    %v558 = vsel %vm360, %v553, 0
    %560 = vmatprep.subr.bf16.mxu0 0
    %561 = vmatpush1.bf16.msra.mxu0 %v555
    %562 = vmatprep.subr.bf16.mxu0 0
    %563 = vmatpush1.bf16.msra.mxu0 0
    %564 = vmatprep.subr.bf16.mxu0 0
    %565 = vmatpush1.bf16.msra.mxu0 0
    %566 = vmatprep.subr.bf16.mxu0 0
    %567 = vmatpush1.bf16.msra.mxu0 0
    %568 = vmatprep.subr.bf16.mxu0 0
    %569 = vmatpush1.bf16.msra.mxu0 0
    %570 = vmatprep.subr.bf16.mxu0 0
    %571 = vmatpush1.bf16.msra.mxu0 0
    %572 = vmatprep.subr.bf16.mxu0 0
    %573 = vmatpush1.bf16.msra.mxu0 0
    %574 = vmatprep.subr.bf16.mxu0 0
    %575 = vmatpush1.bf16.msra.mxu0 0
    %576 = vmatprep.subr.bf16.mxu0 0
    %577 = vmatpush1.bf16.msra.mxu0 0
    %578 = vmatprep.subr.bf16.mxu0 0
    %579 = vmatpush1.bf16.msra.mxu0 0
    %580 = vmatprep.subr.bf16.mxu0 0
    %581 = vmatpush1.bf16.msra.mxu0 0
    %582 = vmatprep.subr.bf16.mxu0 0
    %583 = vmatpush1.bf16.msra.mxu0 0
    %584 = vmatprep.subr.bf16.mxu0 0
    %585 = vmatpush1.bf16.msra.mxu0 0
    %586 = vmatprep.subr.bf16.mxu0 0
    %587 = vmatpush1.bf16.msra.mxu0 0
    %588 = vmatprep.subr.bf16.mxu0 0
    %589 = vmatpush1.bf16.msra.mxu0 0
    %590 = vmatprep.subr.bf16.mxu0 0
    %591 = vmatpush1.bf16.msra.mxu0 0
    %592 = vmatprep.mubr.bf16.mxu0 0
    %593 = vmatmul.mubr.bf16.gmra.mrb[0].mxu0 %v558
    %v594 = vpop.f32.mrb[0].mxu0
    %v595 = vadd.f32 0.0, %v594
    %v596 = vpop.f32.mrb[0].mxu0
    %v597 = vpop.f32.mrb[0].mxu0
    %v598 = vadd.f32 0.0, %v597
    %v599 = vpop.f32.mrb[0].mxu0
    %600 = vdwg.mxu0
    %v601 = vpack.c.bf16 %v598, %v595
    %v603 = vsel %vm151, %v601, 0
    %v606 = vsel %vm506, %v55, 0
    %608 = vmatprep.subr.bf16.mxu0 0
    %609 = vmatpush1.bf16.msra.mxu0 %v606
    %610 = vmatprep.subr.bf16.mxu0 0
    %611 = vmatpush1.bf16.msra.mxu0 0
    %612 = vmatprep.subr.bf16.mxu0 0
    %613 = vmatpush1.bf16.msra.mxu0 0
    %614 = vmatprep.subr.bf16.mxu0 0
    %615 = vmatpush1.bf16.msra.mxu0 0
    %616 = vmatprep.subr.bf16.mxu0 0
    %617 = vmatpush1.bf16.msra.mxu0 0
    %618 = vmatprep.subr.bf16.mxu0 0
    %619 = vmatpush1.bf16.msra.mxu0 0
    %620 = vmatprep.subr.bf16.mxu0 0
    %621 = vmatpush1.bf16.msra.mxu0 0
    %622 = vmatprep.subr.bf16.mxu0 0
    %623 = vmatpush1.bf16.msra.mxu0 0
    %624 = vmatprep.subr.bf16.mxu0 0
    %625 = vmatpush1.bf16.msra.mxu0 0
    %626 = vmatprep.subr.bf16.mxu0 0
    %627 = vmatpush1.bf16.msra.mxu0 0
    %628 = vmatprep.subr.bf16.mxu0 0
    %629 = vmatpush1.bf16.msra.mxu0 0
    %630 = vmatprep.subr.bf16.mxu0 0
    %631 = vmatpush1.bf16.msra.mxu0 0
    %632 = vmatprep.subr.bf16.mxu0 0
    %633 = vmatpush1.bf16.msra.mxu0 0
    %634 = vmatprep.subr.bf16.mxu0 0
    %635 = vmatpush1.bf16.msra.mxu0 0
    %636 = vmatprep.subr.bf16.mxu0 0
    %637 = vmatpush1.bf16.msra.mxu0 0
    %638 = vmatprep.subr.bf16.mxu0 0
    %639 = vmatpush1.bf16.msra.mxu0 0
    %640 = vmatprep.mubr.bf16.mxu0 0
    %641 = vmatmul.mubr.bf16.gmra.mrb[0].mxu0 %v603
    %v642 = vpop.f32.mrb[0].mxu0
    %v643 = vadd.f32 0.0, %v642
    %v644 = vpop.f32.mrb[0].mxu0
    %v645 = vpop.f32.mrb[0].mxu0
    %v646 = vadd.f32 0.0, %v645
    %v647 = vpop.f32.mrb[0].mxu0
    %648 = vdwg.mxu0
    %v649 = vadd.f32 %v551, %v643
    %v650 = vadd.f32 %v552, %v646
    %v651 = vpack.c.bf16 %v446, %v445
    %652 = vrot.lane.b32.xlu0 %v147, 48
    %v653 = vpop.permute.xlu0 %652
    %v656 = vsel %vm360, %v651, 0
    %658 = vmatprep.subr.bf16.mxu0 0
    %659 = vmatpush1.bf16.msra.mxu0 %v653
    %660 = vmatprep.subr.bf16.mxu0 0
    %661 = vmatpush1.bf16.msra.mxu0 0
    %662 = vmatprep.subr.bf16.mxu0 0
    %663 = vmatpush1.bf16.msra.mxu0 0
    %664 = vmatprep.subr.bf16.mxu0 0
    %665 = vmatpush1.bf16.msra.mxu0 0
    %666 = vmatprep.subr.bf16.mxu0 0
    %667 = vmatpush1.bf16.msra.mxu0 0
    %668 = vmatprep.subr.bf16.mxu0 0
    %669 = vmatpush1.bf16.msra.mxu0 0
    %670 = vmatprep.subr.bf16.mxu0 0
    %671 = vmatpush1.bf16.msra.mxu0 0
    %672 = vmatprep.subr.bf16.mxu0 0
    %673 = vmatpush1.bf16.msra.mxu0 0
    %674 = vmatprep.subr.bf16.mxu0 0
    %675 = vmatpush1.bf16.msra.mxu0 0
    %676 = vmatprep.subr.bf16.mxu0 0
    %677 = vmatpush1.bf16.msra.mxu0 0
    %678 = vmatprep.subr.bf16.mxu0 0
    %679 = vmatpush1.bf16.msra.mxu0 0
    %680 = vmatprep.subr.bf16.mxu0 0
    %681 = vmatpush1.bf16.msra.mxu0 0
    %682 = vmatprep.subr.bf16.mxu0 0
    %683 = vmatpush1.bf16.msra.mxu0 0
    %684 = vmatprep.subr.bf16.mxu0 0
    %685 = vmatpush1.bf16.msra.mxu0 0
    %686 = vmatprep.subr.bf16.mxu0 0
    %687 = vmatpush1.bf16.msra.mxu0 0
    %688 = vmatprep.subr.bf16.mxu0 0
    %689 = vmatpush1.bf16.msra.mxu0 0
    %690 = vmatprep.mubr.bf16.mxu0 0
    %691 = vmatmul.mubr.bf16.gmra.mrb[0].mxu0 %v656
    %v692 = vpop.f32.mrb[0].mxu0
    %v693 = vadd.f32 0.0, %v692
    %v694 = vpop.f32.mrb[0].mxu0
    %v695 = vpop.f32.mrb[0].mxu0
    %v696 = vadd.f32 0.0, %v695
    %v697 = vpop.f32.mrb[0].mxu0
    %698 = vdwg.mxu0
    %v699 = vpack.c.bf16 %v696, %v693
    %v701 = vsel %vm151, %v699, 0
    %v704 = vsel %vm506, %v60, 0
    %706 = vmatprep.subr.bf16.mxu0 0
    %707 = vmatpush1.bf16.msra.mxu0 %v704
    %708 = vmatprep.subr.bf16.mxu0 0
    %709 = vmatpush1.bf16.msra.mxu0 0
    %710 = vmatprep.subr.bf16.mxu0 0
    %711 = vmatpush1.bf16.msra.mxu0 0
    %712 = vmatprep.subr.bf16.mxu0 0
    %713 = vmatpush1.bf16.msra.mxu0 0
    %714 = vmatprep.subr.bf16.mxu0 0
    %715 = vmatpush1.bf16.msra.mxu0 0
    %716 = vmatprep.subr.bf16.mxu0 0
    %717 = vmatpush1.bf16.msra.mxu0 0
    %718 = vmatprep.subr.bf16.mxu0 0
    %719 = vmatpush1.bf16.msra.mxu0 0
    %720 = vmatprep.subr.bf16.mxu0 0
    %721 = vmatpush1.bf16.msra.mxu0 0
    %722 = vmatprep.subr.bf16.mxu0 0
    %723 = vmatpush1.bf16.msra.mxu0 0
    %724 = vmatprep.subr.bf16.mxu0 0
    %725 = vmatpush1.bf16.msra.mxu0 0
    %726 = vmatprep.subr.bf16.mxu0 0
    %727 = vmatpush1.bf16.msra.mxu0 0
    %728 = vmatprep.subr.bf16.mxu0 0
    %729 = vmatpush1.bf16.msra.mxu0 0
    %730 = vmatprep.subr.bf16.mxu0 0
    %731 = vmatpush1.bf16.msra.mxu0 0
    %732 = vmatprep.subr.bf16.mxu0 0
    %733 = vmatpush1.bf16.msra.mxu0 0
    %734 = vmatprep.subr.bf16.mxu0 0
    %735 = vmatpush1.bf16.msra.mxu0 0
    %736 = vmatprep.subr.bf16.mxu0 0
    %737 = vmatpush1.bf16.msra.mxu0 0
    %738 = vmatprep.mubr.bf16.mxu0 0
    %739 = vmatmul.mubr.bf16.gmra.mrb[0].mxu0 %v701
    %v740 = vpop.f32.mrb[0].mxu0
    %v741 = vadd.f32 0.0, %v740
    %v742 = vpop.f32.mrb[0].mxu0
    %v743 = vpop.f32.mrb[0].mxu0
    %v744 = vadd.f32 0.0, %v743
    %v745 = vpop.f32.mrb[0].mxu0
    %746 = vdwg.mxu0
    %v747 = vadd.f32 %v649, %v741
    %v748 = vadd.f32 %v650, %v744
    %v749 = vpack.c.bf16 %v448, %v447
    %750 = vrot.lane.b32.xlu0 %v147, 40
    %v751 = vpop.permute.xlu0 %750
    %v754 = vsel %vm360, %v749, 0
    %756 = vmatprep.subr.bf16.mxu0 0
    %757 = vmatpush1.bf16.msra.mxu0 %v751
    %758 = vmatprep.subr.bf16.mxu0 0
    %759 = vmatpush1.bf16.msra.mxu0 0
    %760 = vmatprep.subr.bf16.mxu0 0
    %761 = vmatpush1.bf16.msra.mxu0 0
    %762 = vmatprep.subr.bf16.mxu0 0
    %763 = vmatpush1.bf16.msra.mxu0 0
    %764 = vmatprep.subr.bf16.mxu0 0
    %765 = vmatpush1.bf16.msra.mxu0 0
    %766 = vmatprep.subr.bf16.mxu0 0
    %767 = vmatpush1.bf16.msra.mxu0 0
    %768 = vmatprep.subr.bf16.mxu0 0
    %769 = vmatpush1.bf16.msra.mxu0 0
    %770 = vmatprep.subr.bf16.mxu0 0
    %771 = vmatpush1.bf16.msra.mxu0 0
    %772 = vmatprep.subr.bf16.mxu0 0
    %773 = vmatpush1.bf16.msra.mxu0 0
    %774 = vmatprep.subr.bf16.mxu0 0
    %775 = vmatpush1.bf16.msra.mxu0 0
    %776 = vmatprep.subr.bf16.mxu0 0
    %777 = vmatpush1.bf16.msra.mxu0 0
    %778 = vmatprep.subr.bf16.mxu0 0
    %779 = vmatpush1.bf16.msra.mxu0 0
    %780 = vmatprep.subr.bf16.mxu0 0
    %781 = vmatpush1.bf16.msra.mxu0 0
    %782 = vmatprep.subr.bf16.mxu0 0
    %783 = vmatpush1.bf16.msra.mxu0 0
    %784 = vmatprep.subr.bf16.mxu0 0
    %785 = vmatpush1.bf16.msra.mxu0 0
    %786 = vmatprep.subr.bf16.mxu0 0
    %787 = vmatpush1.bf16.msra.mxu0 0
    %788 = vmatprep.mubr.bf16.mxu0 0
    %789 = vmatmul.mubr.bf16.gmra.mrb[0].mxu0 %v754
    %v790 = vpop.f32.mrb[0].mxu0
    %v791 = vadd.f32 0.0, %v790
    %v792 = vpop.f32.mrb[0].mxu0
    %v793 = vpop.f32.mrb[0].mxu0
    %v794 = vadd.f32 0.0, %v793
    %v795 = vpop.f32.mrb[0].mxu0
    %796 = vdwg.mxu0
    %v797 = vpack.c.bf16 %v794, %v791
    %v799 = vsel %vm151, %v797, 0
    %v802 = vsel %vm506, %v65, 0
    %804 = vmatprep.subr.bf16.mxu0 0
    %805 = vmatpush1.bf16.msra.mxu0 %v802
    %806 = vmatprep.subr.bf16.mxu0 0
    %807 = vmatpush1.bf16.msra.mxu0 0
    %808 = vmatprep.subr.bf16.mxu0 0
    %809 = vmatpush1.bf16.msra.mxu0 0
    %810 = vmatprep.subr.bf16.mxu0 0
    %811 = vmatpush1.bf16.msra.mxu0 0
    %812 = vmatprep.subr.bf16.mxu0 0
    %813 = vmatpush1.bf16.msra.mxu0 0
    %814 = vmatprep.subr.bf16.mxu0 0
    %815 = vmatpush1.bf16.msra.mxu0 0
    %816 = vmatprep.subr.bf16.mxu0 0
    %817 = vmatpush1.bf16.msra.mxu0 0
    %818 = vmatprep.subr.bf16.mxu0 0
    %819 = vmatpush1.bf16.msra.mxu0 0
    %820 = vmatprep.subr.bf16.mxu0 0
    %821 = vmatpush1.bf16.msra.mxu0 0
    %822 = vmatprep.subr.bf16.mxu0 0
    %823 = vmatpush1.bf16.msra.mxu0 0
    %824 = vmatprep.subr.bf16.mxu0 0
    %825 = vmatpush1.bf16.msra.mxu0 0
    %826 = vmatprep.subr.bf16.mxu0 0
    %827 = vmatpush1.bf16.msra.mxu0 0
    %828 = vmatprep.subr.bf16.mxu0 0
    %829 = vmatpush1.bf16.msra.mxu0 0
    %830 = vmatprep.subr.bf16.mxu0 0
    %831 = vmatpush1.bf16.msra.mxu0 0
    %832 = vmatprep.subr.bf16.mxu0 0
    %833 = vmatpush1.bf16.msra.mxu0 0
    %834 = vmatprep.subr.bf16.mxu0 0
    %835 = vmatpush1.bf16.msra.mxu0 0
    %836 = vmatprep.mubr.bf16.mxu0 0
    %837 = vmatmul.mubr.bf16.gmra.mrb[0].mxu0 %v799
    %v838 = vpop.f32.mrb[0].mxu0
    %v839 = vadd.f32 0.0, %v838
    %v840 = vpop.f32.mrb[0].mxu0
    %v841 = vpop.f32.mrb[0].mxu0
    %v842 = vadd.f32 0.0, %v841
    %v843 = vpop.f32.mrb[0].mxu0
    %844 = vdwg.mxu0
    %v845 = vadd.f32 %v747, %v839
    %v846 = vadd.f32 %v748, %v842
    %v847 = vpack.c.bf16 %v846, %v845
    %v848 = vlaneseq
    %v849 = vshrl.u32 %v848, 7
    %v850 = vsub.s32 5, %v849
    %v851 = vrot.slane %v83, %v850
    %v856 = vunpack.c.l.b16 %v51
    %v857 = vunpack.c.l.b16 %v56
    %v858 = vunpack.c.l.b16 %v61
    %v859 = vunpack.c.l.b16 %v66
    %v860 = vpack.c.b16 %v857, %v856
    %v861 = vpack.c.b16 %v859, %v858
    %v865 = vsel %vm102, %v847, 0
    %867 = vmatprep.subr.bf16.mxu0 0
    %868 = vmatpush1.bf16.msra.mxu0 %v860
    %869 = vmatprep.subr.bf16.mxu0 0
    %870 = vmatpush1.bf16.msra.mxu0 %v861
    %871 = vmatprep.subr.bf16.mxu0 0
    %872 = vmatpush1.bf16.msra.mxu0 0
    %873 = vmatprep.subr.bf16.mxu0 0
    %874 = vmatpush1.bf16.msra.mxu0 0
    %875 = vmatprep.subr.bf16.mxu0 0
    %876 = vmatpush1.bf16.msra.mxu0 0
    %877 = vmatprep.subr.bf16.mxu0 0
    %878 = vmatpush1.bf16.msra.mxu0 0
    %879 = vmatprep.subr.bf16.mxu0 0
    %880 = vmatpush1.bf16.msra.mxu0 0
    %881 = vmatprep.subr.bf16.mxu0 0
    %882 = vmatpush1.bf16.msra.mxu0 0
    %883 = vmatprep.subr.bf16.mxu0 0
    %884 = vmatpush1.bf16.msra.mxu0 0
    %885 = vmatprep.subr.bf16.mxu0 0
    %886 = vmatpush1.bf16.msra.mxu0 0
    %887 = vmatprep.subr.bf16.mxu0 0
    %888 = vmatpush1.bf16.msra.mxu0 0
    %889 = vmatprep.subr.bf16.mxu0 0
    %890 = vmatpush1.bf16.msra.mxu0 0
    %891 = vmatprep.subr.bf16.mxu0 0
    %892 = vmatpush1.bf16.msra.mxu0 0
    %893 = vmatprep.subr.bf16.mxu0 0
    %894 = vmatpush1.bf16.msra.mxu0 0
    %895 = vmatprep.subr.bf16.mxu0 0
    %896 = vmatpush1.bf16.msra.mxu0 0
    %897 = vmatprep.subr.bf16.mxu0 0
    %898 = vmatpush1.bf16.msra.mxu0 0
    %899 = vmatprep.mubr.bf16.mxu0 0
    %900 = vmatmul.mubr.bf16.gmra.mrb[0].mxu0 %v865
    %v901 = vpop.f32.mrb[0].mxu0
    %v902 = vadd.f32 %v851, %v901
    %v903 = vpop.f32.mrb[0].mxu0
    %v904 = vpop.f32.mrb[0].mxu0
    %v905 = vadd.f32 %v851, %v904
    %v906 = vpop.f32.mrb[0].mxu0
    %907 = vdwg.mxu0
    %v908 = vmax.f32 %v902, 0.0
    %v909 = vmax.f32 %v905, 0.0
    %v910 = vpack.c.bf16 %v909, %v908
    %v911 = vlaneseq
    %v912 = vshrl.u32 %v911, 7
    %v913 = vsub.s32 6, %v912
    %v914 = vrot.slane %v83, %v913
    %v917 = vunpack.c.l.b16 %v76
    %v918 = vunpack.c.l.b16 %v77
    %v919 = vpack.c.b16 %v918, %v917
    %v922 = vsel %vm360, %v910, 0
    %924 = vmatprep.subr.bf16.mxu0 0
    %925 = vmatpush1.bf16.msra.mxu0 %v919
    %926 = vmatprep.subr.bf16.mxu0 0
    %927 = vmatpush1.bf16.msra.mxu0 0
    %928 = vmatprep.subr.bf16.mxu0 0
    %929 = vmatpush1.bf16.msra.mxu0 0
    %930 = vmatprep.subr.bf16.mxu0 0
    %931 = vmatpush1.bf16.msra.mxu0 0
    %932 = vmatprep.subr.bf16.mxu0 0
    %933 = vmatpush1.bf16.msra.mxu0 0
    %934 = vmatprep.subr.bf16.mxu0 0
    %935 = vmatpush1.bf16.msra.mxu0 0
    %936 = vmatprep.subr.bf16.mxu0 0
    %937 = vmatpush1.bf16.msra.mxu0 0
    %938 = vmatprep.subr.bf16.mxu0 0
    %939 = vmatpush1.bf16.msra.mxu0 0
    %940 = vmatprep.subr.bf16.mxu0 0
    %941 = vmatpush1.bf16.msra.mxu0 0
    %942 = vmatprep.subr.bf16.mxu0 0
    %943 = vmatpush1.bf16.msra.mxu0 0
    %944 = vmatprep.subr.bf16.mxu0 0
    %945 = vmatpush1.bf16.msra.mxu0 0
    %946 = vmatprep.subr.bf16.mxu0 0
    %947 = vmatpush1.bf16.msra.mxu0 0
    %948 = vmatprep.subr.bf16.mxu0 0
    %949 = vmatpush1.bf16.msra.mxu0 0
    %950 = vmatprep.subr.bf16.mxu0 0
    %951 = vmatpush1.bf16.msra.mxu0 0
    %952 = vmatprep.subr.bf16.mxu0 0
    %953 = vmatpush1.bf16.msra.mxu0 0
    %954 = vmatprep.subr.bf16.mxu0 0
    %955 = vmatpush1.bf16.msra.mxu0 0
    %956 = vmatprep.mubr.bf16.mxu0 0
    %957 = vmatmul.mubr.bf16.gmra.mrb[0].mxu0 %v922
    %v958 = vpop.f32.mrb[0].mxu0
    %v959 = vadd.f32 %v914, %v958
    %v960 = vpop.f32.mrb[0].mxu0
    %v961 = vpop.f32.mrb[0].mxu0
    %v962 = vadd.f32 %v914, %v961
    %v963 = vpop.f32.mrb[0].mxu0
    %964 = vdwg.mxu0
    %v965 = vadd.f32 %v959, %v845
    %v966 = vadd.f32 %v962, %v846
    %v967 = vadd.f32 %v28, %v965
    %v968 = vadd.f32 %v29, %v966
    %v969 = vsel %vm102, %v967, 0.0
    %970 = vadd.xlane.f32.xlu0 %v969
    %v971 = vpop.xlane.xlu0 %970
    %v972 = vsel %vm102, %v968, 0.0
    %973 = vadd.xlane.f32.xlu0 %v972
    %v974 = vpop.xlane.xlu0 %973
    %v975 = vrcp.pop 32.0
    %v976 = vmul.f32 %v971, %v975
    %v977 = vmul.f32 %v974, %v975
    %v978 = vsub.f32 %v967, %v976
    %v979 = vsub.f32 %v968, %v977
    %v980 = vmul.f32 %v978, %v978
    %v981 = vmul.f32 %v979, %v979
    %v982 = vsel %vm102, %v980, 0.0
    %983 = vadd.xlane.f32.xlu0 %v982
    %v984 = vpop.xlane.xlu0 %983
    %v985 = vsel %vm102, %v981, 0.0
    %986 = vadd.xlane.f32.xlu0 %v985
    %v987 = vpop.xlane.xlu0 %986
    %v988 = vmul.f32 %v984, %v975
    %v989 = vmul.f32 %v987, %v975
    %v990 = vadd.f32 %v988, 1e-05
    %v991 = vadd.f32 %v989, 1e-05
    %v992 = vrsqrt.pop %v990
    %v993 = vrsqrt.pop %v991
    %v994 = vmul.f32 %v978, %v992
    %v995 = vmul.f32 %v979, %v993
    %v996 = vlaneseq
    %v997 = vshrl.u32 %v996, 7
    %v998 = vsub.s32 7, %v997
    %v999 = vrot.slane %v82, %v998
    %v1000 = vmul.f32 %v994, %v999
    %v1001 = vmul.f32 %v995, %v999
    %v1002 = vlaneseq
    %v1003 = vshrl.u32 %v1002, 7
    %v1004 = vsub.s32 0, %v1003
    %v1005 = vrot.slane %v83, %v1004
    %v1006 = vadd.f32 %v1000, %v1005
    %v1007 = vadd.f32 %v1001, %v1005
    %v1008 = vpack.c.bf16 %v1007, %v1006
    %v1009 = vlaneseq
    %v1010 = vshrl.u32 %v1009, 7
    %v1011 = vsub.s32 1, %v1010
    %v1012 = vrot.slane %v82, %v1011
    %v1013 = vunpack.c.h.b16 %v48
    %v1014 = vunpack.c.h.b16 %v53
    %v1015 = vunpack.c.h.b16 %v58
    %v1016 = vunpack.c.h.b16 %v63
    %v1017 = vpack.c.b16 %v1014, %v1013
    %v1018 = vpack.c.b16 %v1016, %v1015
    %v1022 = vsel %vm102, %v1008, 0
    %1024 = vmatprep.subr.bf16.mxu0 0
    %1025 = vmatpush1.bf16.msra.mxu0 %v1017
    %1026 = vmatprep.subr.bf16.mxu0 0
    %1027 = vmatpush1.bf16.msra.mxu0 %v1018
    %1028 = vmatprep.subr.bf16.mxu0 0
    %1029 = vmatpush1.bf16.msra.mxu0 0
    %1030 = vmatprep.subr.bf16.mxu0 0
    %1031 = vmatpush1.bf16.msra.mxu0 0
    %1032 = vmatprep.subr.bf16.mxu0 0
    %1033 = vmatpush1.bf16.msra.mxu0 0
    %1034 = vmatprep.subr.bf16.mxu0 0
    %1035 = vmatpush1.bf16.msra.mxu0 0
    %1036 = vmatprep.subr.bf16.mxu0 0
    %1037 = vmatpush1.bf16.msra.mxu0 0
    %1038 = vmatprep.subr.bf16.mxu0 0
    %1039 = vmatpush1.bf16.msra.mxu0 0
    %1040 = vmatprep.subr.bf16.mxu0 0
    %1041 = vmatpush1.bf16.msra.mxu0 0
    %1042 = vmatprep.subr.bf16.mxu0 0
    %1043 = vmatpush1.bf16.msra.mxu0 0
    %1044 = vmatprep.subr.bf16.mxu0 0
    %1045 = vmatpush1.bf16.msra.mxu0 0
    %1046 = vmatprep.subr.bf16.mxu0 0
    %1047 = vmatpush1.bf16.msra.mxu0 0
    %1048 = vmatprep.subr.bf16.mxu0 0
    %1049 = vmatpush1.bf16.msra.mxu0 0
    %1050 = vmatprep.subr.bf16.mxu0 0
    %1051 = vmatpush1.bf16.msra.mxu0 0
    %1052 = vmatprep.subr.bf16.mxu0 0
    %1053 = vmatpush1.bf16.msra.mxu0 0
    %1054 = vmatprep.subr.bf16.mxu0 0
    %1055 = vmatpush1.bf16.msra.mxu0 0
    %1056 = vmatprep.mubr.bf16.mxu0 0
    %1057 = vmatmul.mubr.bf16.gmra.mrb[0].mxu0 %v1022
    %v1058 = vpop.f32.mrb[0].mxu0
    %v1059 = vadd.f32 %v1012, %v1058
    %v1060 = vpop.f32.mrb[0].mxu0
    %v1061 = vpop.f32.mrb[0].mxu0
    %v1062 = vadd.f32 %v1012, %v1061
    %v1063 = vpop.f32.mrb[0].mxu0
    %1064 = vdwg.mxu0
    %v1065 = vlaneseq
    %v1066 = vshrl.u32 %v1065, 7
    %v1067 = vsub.s32 2, %v1066
    %v1068 = vrot.slane %v82, %v1067
    %v1071 = vunpack.c.l.b16 %v30
    %v1072 = vunpack.c.l.b16 %v31
    %v1073 = vpack.c.b16 %v1072, %v1071
    %v1078 = vunpack.c.l.b16 %v49
    %v1079 = vunpack.c.l.b16 %v54
    %v1080 = vunpack.c.l.b16 %v59
    %v1081 = vunpack.c.l.b16 %v64
    %v1082 = vpack.c.b16 %v1079, %v1078
    %v1083 = vpack.c.b16 %v1081, %v1080
    %v1087 = vsel %vm102, %v1073, 0
    %1089 = vmatprep.subr.bf16.mxu0 0
    %1090 = vmatpush1.bf16.msra.mxu0 %v1082
    %1091 = vmatprep.subr.bf16.mxu0 0
    %1092 = vmatpush1.bf16.msra.mxu0 %v1083
    %1093 = vmatprep.subr.bf16.mxu0 0
    %1094 = vmatpush1.bf16.msra.mxu0 0
    %1095 = vmatprep.subr.bf16.mxu0 0
    %1096 = vmatpush1.bf16.msra.mxu0 0
    %1097 = vmatprep.subr.bf16.mxu0 0
    %1098 = vmatpush1.bf16.msra.mxu0 0
    %1099 = vmatprep.subr.bf16.mxu0 0
    %1100 = vmatpush1.bf16.msra.mxu0 0
    %1101 = vmatprep.subr.bf16.mxu0 0
    %1102 = vmatpush1.bf16.msra.mxu0 0
    %1103 = vmatprep.subr.bf16.mxu0 0
    %1104 = vmatpush1.bf16.msra.mxu0 0
    %1105 = vmatprep.subr.bf16.mxu0 0
    %1106 = vmatpush1.bf16.msra.mxu0 0
    %1107 = vmatprep.subr.bf16.mxu0 0
    %1108 = vmatpush1.bf16.msra.mxu0 0
    %1109 = vmatprep.subr.bf16.mxu0 0
    %1110 = vmatpush1.bf16.msra.mxu0 0
    %1111 = vmatprep.subr.bf16.mxu0 0
    %1112 = vmatpush1.bf16.msra.mxu0 0
    %1113 = vmatprep.subr.bf16.mxu0 0
    %1114 = vmatpush1.bf16.msra.mxu0 0
    %1115 = vmatprep.subr.bf16.mxu0 0
    %1116 = vmatpush1.bf16.msra.mxu0 0
    %1117 = vmatprep.subr.bf16.mxu0 0
    %1118 = vmatpush1.bf16.msra.mxu0 0
    %1119 = vmatprep.subr.bf16.mxu0 0
    %1120 = vmatpush1.bf16.msra.mxu0 0
    %1121 = vmatprep.mubr.bf16.mxu0 0
    %1122 = vmatmul.mubr.bf16.gmra.mrb[0].mxu0 %v1087
    %v1123 = vpop.f32.mrb[0].mxu0
    %v1124 = vadd.f32 %v1068, %v1123
    %v1125 = vpop.f32.mrb[0].mxu0
    %v1126 = vpop.f32.mrb[0].mxu0
    %v1127 = vadd.f32 %v1068, %v1126
    %v1128 = vpop.f32.mrb[0].mxu0
    %1129 = vdwg.mxu0
    %v1130 = vpack.c.bf16 %v1062, %v1059
    %v1131 = vpack.c.bf16 %v1127, %v1124
    %v1133 = vsel %vm151, %v1130, 0
    %v1136 = vsel %vm151, %v1131, 0
    %1138 = vmatprep.subr.bf16.mxu0 0
    %1139 = vmatpush1.bf16.xpose.msra.mxu0 %v1136
    %1140 = vmatprep.subr.bf16.mxu0 0
    %1141 = vmatpush1.bf16.xpose.msra.mxu0 0
    %1142 = vmatprep.subr.bf16.mxu0 0
    %1143 = vmatpush1.bf16.xpose.msra.mxu0 0
    %1144 = vmatprep.subr.bf16.mxu0 0
    %1145 = vmatpush1.bf16.xpose.msra.mxu0 0
    %1146 = vmatprep.subr.bf16.mxu0 0
    %1147 = vmatpush1.bf16.xpose.msra.mxu0 0
    %1148 = vmatprep.subr.bf16.mxu0 0
    %1149 = vmatpush1.bf16.xpose.msra.mxu0 0
    %1150 = vmatprep.subr.bf16.mxu0 0
    %1151 = vmatpush1.bf16.xpose.msra.mxu0 0
    %1152 = vmatprep.subr.bf16.mxu0 0
    %1153 = vmatpush1.bf16.xpose.msra.mxu0 0
    %1154 = vmatprep.subr.bf16.mxu0 0
    %1155 = vmatpush1.bf16.xpose.msra.mxu0 0
    %1156 = vmatprep.subr.bf16.mxu0 0
    %1157 = vmatpush1.bf16.xpose.msra.mxu0 0
    %1158 = vmatprep.subr.bf16.mxu0 0
    %1159 = vmatpush1.bf16.xpose.msra.mxu0 0
    %1160 = vmatprep.subr.bf16.mxu0 0
    %1161 = vmatpush1.bf16.xpose.msra.mxu0 0
    %1162 = vmatprep.subr.bf16.mxu0 0
    %1163 = vmatpush1.bf16.xpose.msra.mxu0 0
    %1164 = vmatprep.subr.bf16.mxu0 0
    %1165 = vmatpush1.bf16.xpose.msra.mxu0 0
    %1166 = vmatprep.subr.bf16.mxu0 0
    %1167 = vmatpush1.bf16.xpose.msra.mxu0 0
    %1168 = vmatprep.subr.bf16.mxu0 0
    %1169 = vmatpush1.bf16.xpose.msra.mxu0 0
    %1170 = vmatprep.mubr.bf16.mxu0 0
    %1171 = vmatmul.mubr.bf16.gmra.mrb[0].mxu0 %v1133
    %v1172 = vpop.f32.mrb[0].mxu0
    %v1173 = vadd.f32 0.0, %v1172
    %v1174 = vpop.f32.mrb[0].mxu0
    %v1175 = vpop.f32.mrb[0].mxu0
    %v1176 = vadd.f32 0.0, %v1175
    %v1177 = vpop.f32.mrb[0].mxu0
    %1178 = vdwg.mxu0
    %1180 = vrot.lane.b32.xlu0 %v1130, 120
    %v1181 = vpop.permute.xlu0 %1180
    %1183 = vrot.lane.b32.xlu0 %v1131, 120
    %v1184 = vpop.permute.xlu0 %1183
    %v1186 = vsel %vm151, %v1181, 0
    %v1189 = vsel %vm151, %v1184, 0
    %1191 = vmatprep.subr.bf16.mxu0 0
    %1192 = vmatpush1.bf16.xpose.msra.mxu0 %v1189
    %1193 = vmatprep.subr.bf16.mxu0 0
    %1194 = vmatpush1.bf16.xpose.msra.mxu0 0
    %1195 = vmatprep.subr.bf16.mxu0 0
    %1196 = vmatpush1.bf16.xpose.msra.mxu0 0
    %1197 = vmatprep.subr.bf16.mxu0 0
    %1198 = vmatpush1.bf16.xpose.msra.mxu0 0
    %1199 = vmatprep.subr.bf16.mxu0 0
    %1200 = vmatpush1.bf16.xpose.msra.mxu0 0
    %1201 = vmatprep.subr.bf16.mxu0 0
    %1202 = vmatpush1.bf16.xpose.msra.mxu0 0
    %1203 = vmatprep.subr.bf16.mxu0 0
    %1204 = vmatpush1.bf16.xpose.msra.mxu0 0
    %1205 = vmatprep.subr.bf16.mxu0 0
    %1206 = vmatpush1.bf16.xpose.msra.mxu0 0
    %1207 = vmatprep.subr.bf16.mxu0 0
    %1208 = vmatpush1.bf16.xpose.msra.mxu0 0
    %1209 = vmatprep.subr.bf16.mxu0 0
    %1210 = vmatpush1.bf16.xpose.msra.mxu0 0
    %1211 = vmatprep.subr.bf16.mxu0 0
    %1212 = vmatpush1.bf16.xpose.msra.mxu0 0
    %1213 = vmatprep.subr.bf16.mxu0 0
    %1214 = vmatpush1.bf16.xpose.msra.mxu0 0
    %1215 = vmatprep.subr.bf16.mxu0 0
    %1216 = vmatpush1.bf16.xpose.msra.mxu0 0
    %1217 = vmatprep.subr.bf16.mxu0 0
    %1218 = vmatpush1.bf16.xpose.msra.mxu0 0
    %1219 = vmatprep.subr.bf16.mxu0 0
    %1220 = vmatpush1.bf16.xpose.msra.mxu0 0
    %1221 = vmatprep.subr.bf16.mxu0 0
    %1222 = vmatpush1.bf16.xpose.msra.mxu0 0
    %1223 = vmatprep.mubr.bf16.mxu0 0
    %1224 = vmatmul.mubr.bf16.gmra.mrb[0].mxu0 %v1186
    %v1225 = vpop.f32.mrb[0].mxu0
    %v1226 = vadd.f32 0.0, %v1225
    %v1227 = vpop.f32.mrb[0].mxu0
    %v1228 = vpop.f32.mrb[0].mxu0
    %v1229 = vadd.f32 0.0, %v1228
    %v1230 = vpop.f32.mrb[0].mxu0
    %1231 = vdwg.mxu0
    %1232 = vrot.lane.b32.xlu0 %v1130, 112
    %v1233 = vpop.permute.xlu0 %1232
    %1234 = vrot.lane.b32.xlu0 %v1131, 112
    %v1235 = vpop.permute.xlu0 %1234
    %v1237 = vsel %vm151, %v1233, 0
    %v1240 = vsel %vm151, %v1235, 0
    %1242 = vmatprep.subr.bf16.mxu0 0
    %1243 = vmatpush1.bf16.xpose.msra.mxu0 %v1240
    %1244 = vmatprep.subr.bf16.mxu0 0
    %1245 = vmatpush1.bf16.xpose.msra.mxu0 0
    %1246 = vmatprep.subr.bf16.mxu0 0
    %1247 = vmatpush1.bf16.xpose.msra.mxu0 0
    %1248 = vmatprep.subr.bf16.mxu0 0
    %1249 = vmatpush1.bf16.xpose.msra.mxu0 0
    %1250 = vmatprep.subr.bf16.mxu0 0
    %1251 = vmatpush1.bf16.xpose.msra.mxu0 0
    %1252 = vmatprep.subr.bf16.mxu0 0
    %1253 = vmatpush1.bf16.xpose.msra.mxu0 0
    %1254 = vmatprep.subr.bf16.mxu0 0
    %1255 = vmatpush1.bf16.xpose.msra.mxu0 0
    %1256 = vmatprep.subr.bf16.mxu0 0
    %1257 = vmatpush1.bf16.xpose.msra.mxu0 0
    %1258 = vmatprep.subr.bf16.mxu0 0
    %1259 = vmatpush1.bf16.xpose.msra.mxu0 0
    %1260 = vmatprep.subr.bf16.mxu0 0
    %1261 = vmatpush1.bf16.xpose.msra.mxu0 0
    %1262 = vmatprep.subr.bf16.mxu0 0
    %1263 = vmatpush1.bf16.xpose.msra.mxu0 0
    %1264 = vmatprep.subr.bf16.mxu0 0
    %1265 = vmatpush1.bf16.xpose.msra.mxu0 0
    %1266 = vmatprep.subr.bf16.mxu0 0
    %1267 = vmatpush1.bf16.xpose.msra.mxu0 0
    %1268 = vmatprep.subr.bf16.mxu0 0
    %1269 = vmatpush1.bf16.xpose.msra.mxu0 0
    %1270 = vmatprep.subr.bf16.mxu0 0
    %1271 = vmatpush1.bf16.xpose.msra.mxu0 0
    %1272 = vmatprep.subr.bf16.mxu0 0
    %1273 = vmatpush1.bf16.xpose.msra.mxu0 0
    %1274 = vmatprep.mubr.bf16.mxu0 0
    %1275 = vmatmul.mubr.bf16.gmra.mrb[0].mxu0 %v1237
    %v1276 = vpop.f32.mrb[0].mxu0
    %v1277 = vadd.f32 0.0, %v1276
    %v1278 = vpop.f32.mrb[0].mxu0
    %v1279 = vpop.f32.mrb[0].mxu0
    %v1280 = vadd.f32 0.0, %v1279
    %v1281 = vpop.f32.mrb[0].mxu0
    %1282 = vdwg.mxu0
    %1283 = vrot.lane.b32.xlu0 %v1130, 104
    %v1284 = vpop.permute.xlu0 %1283
    %1285 = vrot.lane.b32.xlu0 %v1131, 104
    %v1286 = vpop.permute.xlu0 %1285
    %v1288 = vsel %vm151, %v1284, 0
    %v1291 = vsel %vm151, %v1286, 0
    %1293 = vmatprep.subr.bf16.mxu0 0
    %1294 = vmatpush1.bf16.xpose.msra.mxu0 %v1291
    %1295 = vmatprep.subr.bf16.mxu0 0
    %1296 = vmatpush1.bf16.xpose.msra.mxu0 0
    %1297 = vmatprep.subr.bf16.mxu0 0
    %1298 = vmatpush1.bf16.xpose.msra.mxu0 0
    %1299 = vmatprep.subr.bf16.mxu0 0
    %1300 = vmatpush1.bf16.xpose.msra.mxu0 0
    %1301 = vmatprep.subr.bf16.mxu0 0
    %1302 = vmatpush1.bf16.xpose.msra.mxu0 0
    %1303 = vmatprep.subr.bf16.mxu0 0
    %1304 = vmatpush1.bf16.xpose.msra.mxu0 0
    %1305 = vmatprep.subr.bf16.mxu0 0
    %1306 = vmatpush1.bf16.xpose.msra.mxu0 0
    %1307 = vmatprep.subr.bf16.mxu0 0
    %1308 = vmatpush1.bf16.xpose.msra.mxu0 0
    %1309 = vmatprep.subr.bf16.mxu0 0
    %1310 = vmatpush1.bf16.xpose.msra.mxu0 0
    %1311 = vmatprep.subr.bf16.mxu0 0
    %1312 = vmatpush1.bf16.xpose.msra.mxu0 0
    %1313 = vmatprep.subr.bf16.mxu0 0
    %1314 = vmatpush1.bf16.xpose.msra.mxu0 0
    %1315 = vmatprep.subr.bf16.mxu0 0
    %1316 = vmatpush1.bf16.xpose.msra.mxu0 0
    %1317 = vmatprep.subr.bf16.mxu0 0
    %1318 = vmatpush1.bf16.xpose.msra.mxu0 0
    %1319 = vmatprep.subr.bf16.mxu0 0
    %1320 = vmatpush1.bf16.xpose.msra.mxu0 0
    %1321 = vmatprep.subr.bf16.mxu0 0
    %1322 = vmatpush1.bf16.xpose.msra.mxu0 0
    %1323 = vmatprep.subr.bf16.mxu0 0
    %1324 = vmatpush1.bf16.xpose.msra.mxu0 0
    %1325 = vmatprep.mubr.bf16.mxu0 0
    %1326 = vmatmul.mubr.bf16.gmra.mrb[0].mxu0 %v1288
    %v1327 = vpop.f32.mrb[0].mxu0
    %v1328 = vadd.f32 0.0, %v1327
    %v1329 = vpop.f32.mrb[0].mxu0
    %v1330 = vpop.f32.mrb[0].mxu0
    %v1331 = vadd.f32 0.0, %v1330
    %v1332 = vpop.f32.mrb[0].mxu0
    %1333 = vdwg.mxu0
    %v1334 = vadd.f32 %v1173, %v40
    %v1335 = vadd.f32 %v1176, %v41
    %v1336 = vadd.f32 %v1226, %v42
    %v1337 = vadd.f32 %v1229, %v43
    %v1338 = vadd.f32 %v1277, %v44
    %v1339 = vadd.f32 %v1280, %v45
    %v1340 = vadd.f32 %v1328, %v46
    %v1341 = vadd.f32 %v1331, %v47
    %v1342 = vsel %vm360, %v1334, -inf
    %1343 = vmax.xlane.f32.xlu0 %v1342
    %v1344 = vpop.xlane.xlu0 %1343
    %v1345 = vsel %vm360, %v1335, -inf
    %1346 = vmax.xlane.f32.xlu0 %v1345
    %v1347 = vpop.xlane.xlu0 %1346
    %v1348 = vsel %vm360, %v1336, -inf
    %1349 = vmax.xlane.f32.xlu0 %v1348
    %v1350 = vpop.xlane.xlu0 %1349
    %v1351 = vsel %vm360, %v1337, -inf
    %1352 = vmax.xlane.f32.xlu0 %v1351
    %v1353 = vpop.xlane.xlu0 %1352
    %v1354 = vsel %vm360, %v1338, -inf
    %1355 = vmax.xlane.f32.xlu0 %v1354
    %v1356 = vpop.xlane.xlu0 %1355
    %v1357 = vsel %vm360, %v1339, -inf
    %1358 = vmax.xlane.f32.xlu0 %v1357
    %v1359 = vpop.xlane.xlu0 %1358
    %v1360 = vsel %vm360, %v1340, -inf
    %1361 = vmax.xlane.f32.xlu0 %v1360
    %v1362 = vpop.xlane.xlu0 %1361
    %v1363 = vsel %vm360, %v1341, -inf
    %1364 = vmax.xlane.f32.xlu0 %v1363
    %v1365 = vpop.xlane.xlu0 %1364
    %v1366 = vsub.f32 %v1334, %v1344
    %v1367 = vsub.f32 %v1335, %v1347
    %v1368 = vsub.f32 %v1336, %v1350
    %v1369 = vsub.f32 %v1337, %v1353
    %v1370 = vsub.f32 %v1338, %v1356
    %v1371 = vsub.f32 %v1339, %v1359
    %v1372 = vsub.f32 %v1340, %v1362
    %v1373 = vsub.f32 %v1341, %v1365
    %v1374 = vmul.f32 %v1366, 1.442695
    %v1375 = vpow.pop %v1374
    %v1376 = vmul.f32 %v1367, 1.442695
    %v1377 = vpow.pop %v1376
    %v1378 = vmul.f32 %v1368, 1.442695
    %v1379 = vpow.pop %v1378
    %v1380 = vmul.f32 %v1369, 1.442695
    %v1381 = vpow.pop %v1380
    %v1382 = vmul.f32 %v1370, 1.442695
    %v1383 = vpow.pop %v1382
    %v1384 = vmul.f32 %v1371, 1.442695
    %v1385 = vpow.pop %v1384
    %v1386 = vmul.f32 %v1372, 1.442695
    %v1387 = vpow.pop %v1386
    %v1388 = vmul.f32 %v1373, 1.442695
    %v1389 = vpow.pop %v1388
    %v1390 = vsel %vm360, %v1375, 0.0
    %1391 = vadd.xlane.f32.xlu0 %v1390
    %v1392 = vpop.xlane.xlu0 %1391
    %v1393 = vsel %vm360, %v1377, 0.0
    %1394 = vadd.xlane.f32.xlu0 %v1393
    %v1395 = vpop.xlane.xlu0 %1394
    %v1396 = vsel %vm360, %v1379, 0.0
    %1397 = vadd.xlane.f32.xlu0 %v1396
    %v1398 = vpop.xlane.xlu0 %1397
    %v1399 = vsel %vm360, %v1381, 0.0
    %1400 = vadd.xlane.f32.xlu0 %v1399
    %v1401 = vpop.xlane.xlu0 %1400
    %v1402 = vsel %vm360, %v1383, 0.0
    %1403 = vadd.xlane.f32.xlu0 %v1402
    %v1404 = vpop.xlane.xlu0 %1403
    %v1405 = vsel %vm360, %v1385, 0.0
    %1406 = vadd.xlane.f32.xlu0 %v1405
    %v1407 = vpop.xlane.xlu0 %1406
    %v1408 = vsel %vm360, %v1387, 0.0
    %1409 = vadd.xlane.f32.xlu0 %v1408
    %v1410 = vpop.xlane.xlu0 %1409
    %v1411 = vsel %vm360, %v1389, 0.0
    %1412 = vadd.xlane.f32.xlu0 %v1411
    %v1413 = vpop.xlane.xlu0 %1412
    %v1414 = vrcp.pop %v1392
    %v1415 = vrcp.pop %v1395
    %v1416 = vrcp.pop %v1398
    %v1417 = vrcp.pop %v1401
    %v1418 = vrcp.pop %v1404
    %v1419 = vrcp.pop %v1407
    %v1420 = vrcp.pop %v1410
    %v1421 = vrcp.pop %v1413
    %v1422 = vmul.f32 %v1375, %v1414
    %v1423 = vmul.f32 %v1377, %v1415
    %v1424 = vmul.f32 %v1379, %v1416
    %v1425 = vmul.f32 %v1381, %v1417
    %v1426 = vmul.f32 %v1383, %v1418
    %v1427 = vmul.f32 %v1385, %v1419
    %v1428 = vmul.f32 %v1387, %v1420
    %v1429 = vmul.f32 %v1389, %v1421
    %v1430 = vlaneseq
    %v1431 = vshrl.u32 %v1430, 7
    %v1432 = vsub.s32 5, %v1431
    %v1433 = vrot.slane %v82, %v1432
    %v1434 = vadd.f32 %v1433, 0.0
    %v1435 = vpack.c.bf16 %v1423, %v1422
    %1436 = vrot.lane.b32.xlu0 %v1131, 96
    %v1437 = vpop.permute.xlu0 %1436
    %v1440 = vsel %vm360, %v1435, 0
    %1442 = vmatprep.subr.bf16.mxu0 0
    %1443 = vmatpush1.bf16.msra.mxu0 %v1437
    %1444 = vmatprep.subr.bf16.mxu0 0
    %1445 = vmatpush1.bf16.msra.mxu0 0
    %1446 = vmatprep.subr.bf16.mxu0 0
    %1447 = vmatpush1.bf16.msra.mxu0 0
    %1448 = vmatprep.subr.bf16.mxu0 0
    %1449 = vmatpush1.bf16.msra.mxu0 0
    %1450 = vmatprep.subr.bf16.mxu0 0
    %1451 = vmatpush1.bf16.msra.mxu0 0
    %1452 = vmatprep.subr.bf16.mxu0 0
    %1453 = vmatpush1.bf16.msra.mxu0 0
    %1454 = vmatprep.subr.bf16.mxu0 0
    %1455 = vmatpush1.bf16.msra.mxu0 0
    %1456 = vmatprep.subr.bf16.mxu0 0
    %1457 = vmatpush1.bf16.msra.mxu0 0
    %1458 = vmatprep.subr.bf16.mxu0 0
    %1459 = vmatpush1.bf16.msra.mxu0 0
    %1460 = vmatprep.subr.bf16.mxu0 0
    %1461 = vmatpush1.bf16.msra.mxu0 0
    %1462 = vmatprep.subr.bf16.mxu0 0
    %1463 = vmatpush1.bf16.msra.mxu0 0
    %1464 = vmatprep.subr.bf16.mxu0 0
    %1465 = vmatpush1.bf16.msra.mxu0 0
    %1466 = vmatprep.subr.bf16.mxu0 0
    %1467 = vmatpush1.bf16.msra.mxu0 0
    %1468 = vmatprep.subr.bf16.mxu0 0
    %1469 = vmatpush1.bf16.msra.mxu0 0
    %1470 = vmatprep.subr.bf16.mxu0 0
    %1471 = vmatpush1.bf16.msra.mxu0 0
    %1472 = vmatprep.subr.bf16.mxu0 0
    %1473 = vmatpush1.bf16.msra.mxu0 0
    %1474 = vmatprep.mubr.bf16.mxu0 0
    %1475 = vmatmul.mubr.bf16.gmra.mrb[0].mxu0 %v1440
    %v1476 = vpop.f32.mrb[0].mxu0
    %v1477 = vadd.f32 0.0, %v1476
    %v1478 = vpop.f32.mrb[0].mxu0
    %v1479 = vpop.f32.mrb[0].mxu0
    %v1480 = vadd.f32 0.0, %v1479
    %v1481 = vpop.f32.mrb[0].mxu0
    %1482 = vdwg.mxu0
    %v1483 = vpack.c.bf16 %v1480, %v1477
    %v1485 = vunpack.c.h.b16 %v50
    %v1486 = vpack.c.b16 %v1485, %v1485
    %v1488 = vsel %vm151, %v1483, 0
    %v1491 = vsel %vm506, %v1486, 0
    %1493 = vmatprep.subr.bf16.mxu0 0
    %1494 = vmatpush1.bf16.msra.mxu0 %v1491
    %1495 = vmatprep.subr.bf16.mxu0 0
    %1496 = vmatpush1.bf16.msra.mxu0 0
    %1497 = vmatprep.subr.bf16.mxu0 0
    %1498 = vmatpush1.bf16.msra.mxu0 0
    %1499 = vmatprep.subr.bf16.mxu0 0
    %1500 = vmatpush1.bf16.msra.mxu0 0
    %1501 = vmatprep.subr.bf16.mxu0 0
    %1502 = vmatpush1.bf16.msra.mxu0 0
    %1503 = vmatprep.subr.bf16.mxu0 0
    %1504 = vmatpush1.bf16.msra.mxu0 0
    %1505 = vmatprep.subr.bf16.mxu0 0
    %1506 = vmatpush1.bf16.msra.mxu0 0
    %1507 = vmatprep.subr.bf16.mxu0 0
    %1508 = vmatpush1.bf16.msra.mxu0 0
    %1509 = vmatprep.subr.bf16.mxu0 0
    %1510 = vmatpush1.bf16.msra.mxu0 0
    %1511 = vmatprep.subr.bf16.mxu0 0
    %1512 = vmatpush1.bf16.msra.mxu0 0
    %1513 = vmatprep.subr.bf16.mxu0 0
    %1514 = vmatpush1.bf16.msra.mxu0 0
    %1515 = vmatprep.subr.bf16.mxu0 0
    %1516 = vmatpush1.bf16.msra.mxu0 0
    %1517 = vmatprep.subr.bf16.mxu0 0
    %1518 = vmatpush1.bf16.msra.mxu0 0
    %1519 = vmatprep.subr.bf16.mxu0 0
    %1520 = vmatpush1.bf16.msra.mxu0 0
    %1521 = vmatprep.subr.bf16.mxu0 0
    %1522 = vmatpush1.bf16.msra.mxu0 0
    %1523 = vmatprep.subr.bf16.mxu0 0
    %1524 = vmatpush1.bf16.msra.mxu0 0
    %1525 = vmatprep.mubr.bf16.mxu0 0
    %1526 = vmatmul.mubr.bf16.gmra.mrb[0].mxu0 %v1488
    %v1527 = vpop.f32.mrb[0].mxu0
    %v1528 = vadd.f32 0.0, %v1527
    %v1529 = vpop.f32.mrb[0].mxu0
    %v1530 = vpop.f32.mrb[0].mxu0
    %v1531 = vadd.f32 0.0, %v1530
    %v1532 = vpop.f32.mrb[0].mxu0
    %1533 = vdwg.mxu0
    %v1534 = vadd.f32 %v1434, %v1528
    %v1535 = vadd.f32 %v1434, %v1531
    %v1536 = vpack.c.bf16 %v1425, %v1424
    %1537 = vrot.lane.b32.xlu0 %v1131, 88
    %v1538 = vpop.permute.xlu0 %1537
    %v1541 = vsel %vm360, %v1536, 0
    %1543 = vmatprep.subr.bf16.mxu0 0
    %1544 = vmatpush1.bf16.msra.mxu0 %v1538
    %1545 = vmatprep.subr.bf16.mxu0 0
    %1546 = vmatpush1.bf16.msra.mxu0 0
    %1547 = vmatprep.subr.bf16.mxu0 0
    %1548 = vmatpush1.bf16.msra.mxu0 0
    %1549 = vmatprep.subr.bf16.mxu0 0
    %1550 = vmatpush1.bf16.msra.mxu0 0
    %1551 = vmatprep.subr.bf16.mxu0 0
    %1552 = vmatpush1.bf16.msra.mxu0 0
    %1553 = vmatprep.subr.bf16.mxu0 0
    %1554 = vmatpush1.bf16.msra.mxu0 0
    %1555 = vmatprep.subr.bf16.mxu0 0
    %1556 = vmatpush1.bf16.msra.mxu0 0
    %1557 = vmatprep.subr.bf16.mxu0 0
    %1558 = vmatpush1.bf16.msra.mxu0 0
    %1559 = vmatprep.subr.bf16.mxu0 0
    %1560 = vmatpush1.bf16.msra.mxu0 0
    %1561 = vmatprep.subr.bf16.mxu0 0
    %1562 = vmatpush1.bf16.msra.mxu0 0
    %1563 = vmatprep.subr.bf16.mxu0 0
    %1564 = vmatpush1.bf16.msra.mxu0 0
    %1565 = vmatprep.subr.bf16.mxu0 0
    %1566 = vmatpush1.bf16.msra.mxu0 0
    %1567 = vmatprep.subr.bf16.mxu0 0
    %1568 = vmatpush1.bf16.msra.mxu0 0
    %1569 = vmatprep.subr.bf16.mxu0 0
    %1570 = vmatpush1.bf16.msra.mxu0 0
    %1571 = vmatprep.subr.bf16.mxu0 0
    %1572 = vmatpush1.bf16.msra.mxu0 0
    %1573 = vmatprep.subr.bf16.mxu0 0
    %1574 = vmatpush1.bf16.msra.mxu0 0
    %1575 = vmatprep.mubr.bf16.mxu0 0
    %1576 = vmatmul.mubr.bf16.gmra.mrb[0].mxu0 %v1541
    %v1577 = vpop.f32.mrb[0].mxu0
    %v1578 = vadd.f32 0.0, %v1577
    %v1579 = vpop.f32.mrb[0].mxu0
    %v1580 = vpop.f32.mrb[0].mxu0
    %v1581 = vadd.f32 0.0, %v1580
    %v1582 = vpop.f32.mrb[0].mxu0
    %1583 = vdwg.mxu0
    %v1584 = vpack.c.bf16 %v1581, %v1578
    %v1586 = vunpack.c.h.b16 %v55
    %v1587 = vpack.c.b16 %v1586, %v1586
    %v1589 = vsel %vm151, %v1584, 0
    %v1592 = vsel %vm506, %v1587, 0
    %1594 = vmatprep.subr.bf16.mxu0 0
    %1595 = vmatpush1.bf16.msra.mxu0 %v1592
    %1596 = vmatprep.subr.bf16.mxu0 0
    %1597 = vmatpush1.bf16.msra.mxu0 0
    %1598 = vmatprep.subr.bf16.mxu0 0
    %1599 = vmatpush1.bf16.msra.mxu0 0
    %1600 = vmatprep.subr.bf16.mxu0 0
    %1601 = vmatpush1.bf16.msra.mxu0 0
    %1602 = vmatprep.subr.bf16.mxu0 0
    %1603 = vmatpush1.bf16.msra.mxu0 0
    %1604 = vmatprep.subr.bf16.mxu0 0
    %1605 = vmatpush1.bf16.msra.mxu0 0
    %1606 = vmatprep.subr.bf16.mxu0 0
    %1607 = vmatpush1.bf16.msra.mxu0 0
    %1608 = vmatprep.subr.bf16.mxu0 0
    %1609 = vmatpush1.bf16.msra.mxu0 0
    %1610 = vmatprep.subr.bf16.mxu0 0
    %1611 = vmatpush1.bf16.msra.mxu0 0
    %1612 = vmatprep.subr.bf16.mxu0 0
    %1613 = vmatpush1.bf16.msra.mxu0 0
    %1614 = vmatprep.subr.bf16.mxu0 0
    %1615 = vmatpush1.bf16.msra.mxu0 0
    %1616 = vmatprep.subr.bf16.mxu0 0
    %1617 = vmatpush1.bf16.msra.mxu0 0
    %1618 = vmatprep.subr.bf16.mxu0 0
    %1619 = vmatpush1.bf16.msra.mxu0 0
    %1620 = vmatprep.subr.bf16.mxu0 0
    %1621 = vmatpush1.bf16.msra.mxu0 0
    %1622 = vmatprep.subr.bf16.mxu0 0
    %1623 = vmatpush1.bf16.msra.mxu0 0
    %1624 = vmatprep.subr.bf16.mxu0 0
    %1625 = vmatpush1.bf16.msra.mxu0 0
    %1626 = vmatprep.mubr.bf16.mxu0 0
    %1627 = vmatmul.mubr.bf16.gmra.mrb[0].mxu0 %v1589
    %v1628 = vpop.f32.mrb[0].mxu0
    %v1629 = vadd.f32 0.0, %v1628
    %v1630 = vpop.f32.mrb[0].mxu0
    %v1631 = vpop.f32.mrb[0].mxu0
    %v1632 = vadd.f32 0.0, %v1631
    %v1633 = vpop.f32.mrb[0].mxu0
    %1634 = vdwg.mxu0
    %v1635 = vadd.f32 %v1534, %v1629
    %v1636 = vadd.f32 %v1535, %v1632
    %v1637 = vpack.c.bf16 %v1427, %v1426
    %1638 = vrot.lane.b32.xlu0 %v1131, 80
    %v1639 = vpop.permute.xlu0 %1638
    %v1642 = vsel %vm360, %v1637, 0
    %1644 = vmatprep.subr.bf16.mxu0 0
    %1645 = vmatpush1.bf16.msra.mxu0 %v1639
    %1646 = vmatprep.subr.bf16.mxu0 0
    %1647 = vmatpush1.bf16.msra.mxu0 0
    %1648 = vmatprep.subr.bf16.mxu0 0
    %1649 = vmatpush1.bf16.msra.mxu0 0
    %1650 = vmatprep.subr.bf16.mxu0 0
    %1651 = vmatpush1.bf16.msra.mxu0 0
    %1652 = vmatprep.subr.bf16.mxu0 0
    %1653 = vmatpush1.bf16.msra.mxu0 0
    %1654 = vmatprep.subr.bf16.mxu0 0
    %1655 = vmatpush1.bf16.msra.mxu0 0
    %1656 = vmatprep.subr.bf16.mxu0 0
    %1657 = vmatpush1.bf16.msra.mxu0 0
    %1658 = vmatprep.subr.bf16.mxu0 0
    %1659 = vmatpush1.bf16.msra.mxu0 0
    %1660 = vmatprep.subr.bf16.mxu0 0
    %1661 = vmatpush1.bf16.msra.mxu0 0
    %1662 = vmatprep.subr.bf16.mxu0 0
    %1663 = vmatpush1.bf16.msra.mxu0 0
    %1664 = vmatprep.subr.bf16.mxu0 0
    %1665 = vmatpush1.bf16.msra.mxu0 0
    %1666 = vmatprep.subr.bf16.mxu0 0
    %1667 = vmatpush1.bf16.msra.mxu0 0
    %1668 = vmatprep.subr.bf16.mxu0 0
    %1669 = vmatpush1.bf16.msra.mxu0 0
    %1670 = vmatprep.subr.bf16.mxu0 0
    %1671 = vmatpush1.bf16.msra.mxu0 0
    %1672 = vmatprep.subr.bf16.mxu0 0
    %1673 = vmatpush1.bf16.msra.mxu0 0
    %1674 = vmatprep.subr.bf16.mxu0 0
    %1675 = vmatpush1.bf16.msra.mxu0 0
    %1676 = vmatprep.mubr.bf16.mxu0 0
    %1677 = vmatmul.mubr.bf16.gmra.mrb[0].mxu0 %v1642
    %v1678 = vpop.f32.mrb[0].mxu0
    %v1679 = vadd.f32 0.0, %v1678
    %v1680 = vpop.f32.mrb[0].mxu0
    %v1681 = vpop.f32.mrb[0].mxu0
    %v1682 = vadd.f32 0.0, %v1681
    %v1683 = vpop.f32.mrb[0].mxu0
    %1684 = vdwg.mxu0
    %v1685 = vpack.c.bf16 %v1682, %v1679
    %v1687 = vunpack.c.h.b16 %v60
    %v1688 = vpack.c.b16 %v1687, %v1687
    %v1690 = vsel %vm151, %v1685, 0
    %v1693 = vsel %vm506, %v1688, 0
    %1695 = vmatprep.subr.bf16.mxu0 0
    %1696 = vmatpush1.bf16.msra.mxu0 %v1693
    %1697 = vmatprep.subr.bf16.mxu0 0
    %1698 = vmatpush1.bf16.msra.mxu0 0
    %1699 = vmatprep.subr.bf16.mxu0 0
    %1700 = vmatpush1.bf16.msra.mxu0 0
    %1701 = vmatprep.subr.bf16.mxu0 0
    %1702 = vmatpush1.bf16.msra.mxu0 0
    %1703 = vmatprep.subr.bf16.mxu0 0
    %1704 = vmatpush1.bf16.msra.mxu0 0
    %1705 = vmatprep.subr.bf16.mxu0 0
    %1706 = vmatpush1.bf16.msra.mxu0 0
    %1707 = vmatprep.subr.bf16.mxu0 0
    %1708 = vmatpush1.bf16.msra.mxu0 0
    %1709 = vmatprep.subr.bf16.mxu0 0
    %1710 = vmatpush1.bf16.msra.mxu0 0
    %1711 = vmatprep.subr.bf16.mxu0 0
    %1712 = vmatpush1.bf16.msra.mxu0 0
    %1713 = vmatprep.subr.bf16.mxu0 0
    %1714 = vmatpush1.bf16.msra.mxu0 0
    %1715 = vmatprep.subr.bf16.mxu0 0
    %1716 = vmatpush1.bf16.msra.mxu0 0
    %1717 = vmatprep.subr.bf16.mxu0 0
    %1718 = vmatpush1.bf16.msra.mxu0 0
    %1719 = vmatprep.subr.bf16.mxu0 0
    %1720 = vmatpush1.bf16.msra.mxu0 0
    %1721 = vmatprep.subr.bf16.mxu0 0
    %1722 = vmatpush1.bf16.msra.mxu0 0
    %1723 = vmatprep.subr.bf16.mxu0 0
    %1724 = vmatpush1.bf16.msra.mxu0 0
    %1725 = vmatprep.subr.bf16.mxu0 0
    %1726 = vmatpush1.bf16.msra.mxu0 0
    %1727 = vmatprep.mubr.bf16.mxu0 0
    %1728 = vmatmul.mubr.bf16.gmra.mrb[0].mxu0 %v1690
    %v1729 = vpop.f32.mrb[0].mxu0
    %v1730 = vadd.f32 0.0, %v1729
    %v1731 = vpop.f32.mrb[0].mxu0
    %v1732 = vpop.f32.mrb[0].mxu0
    %v1733 = vadd.f32 0.0, %v1732
    %v1734 = vpop.f32.mrb[0].mxu0
    %1735 = vdwg.mxu0
    %v1736 = vadd.f32 %v1635, %v1730
    %v1737 = vadd.f32 %v1636, %v1733
    %v1738 = vpack.c.bf16 %v1429, %v1428
    %1739 = vrot.lane.b32.xlu0 %v1131, 72
    %v1740 = vpop.permute.xlu0 %1739
    %v1743 = vsel %vm360, %v1738, 0
    %1745 = vmatprep.subr.bf16.mxu0 0
    %1746 = vmatpush1.bf16.msra.mxu0 %v1740
    %1747 = vmatprep.subr.bf16.mxu0 0
    %1748 = vmatpush1.bf16.msra.mxu0 0
    %1749 = vmatprep.subr.bf16.mxu0 0
    %1750 = vmatpush1.bf16.msra.mxu0 0
    %1751 = vmatprep.subr.bf16.mxu0 0
    %1752 = vmatpush1.bf16.msra.mxu0 0
    %1753 = vmatprep.subr.bf16.mxu0 0
    %1754 = vmatpush1.bf16.msra.mxu0 0
    %1755 = vmatprep.subr.bf16.mxu0 0
    %1756 = vmatpush1.bf16.msra.mxu0 0
    %1757 = vmatprep.subr.bf16.mxu0 0
    %1758 = vmatpush1.bf16.msra.mxu0 0
    %1759 = vmatprep.subr.bf16.mxu0 0
    %1760 = vmatpush1.bf16.msra.mxu0 0
    %1761 = vmatprep.subr.bf16.mxu0 0
    %1762 = vmatpush1.bf16.msra.mxu0 0
    %1763 = vmatprep.subr.bf16.mxu0 0
    %1764 = vmatpush1.bf16.msra.mxu0 0
    %1765 = vmatprep.subr.bf16.mxu0 0
    %1766 = vmatpush1.bf16.msra.mxu0 0
    %1767 = vmatprep.subr.bf16.mxu0 0
    %1768 = vmatpush1.bf16.msra.mxu0 0
    %1769 = vmatprep.subr.bf16.mxu0 0
    %1770 = vmatpush1.bf16.msra.mxu0 0
    %1771 = vmatprep.subr.bf16.mxu0 0
    %1772 = vmatpush1.bf16.msra.mxu0 0
    %1773 = vmatprep.subr.bf16.mxu0 0
    %1774 = vmatpush1.bf16.msra.mxu0 0
    %1775 = vmatprep.subr.bf16.mxu0 0
    %1776 = vmatpush1.bf16.msra.mxu0 0
    %1777 = vmatprep.mubr.bf16.mxu0 0
    %1778 = vmatmul.mubr.bf16.gmra.mrb[0].mxu0 %v1743
    %v1779 = vpop.f32.mrb[0].mxu0
    %v1780 = vadd.f32 0.0, %v1779
    %v1781 = vpop.f32.mrb[0].mxu0
    %v1782 = vpop.f32.mrb[0].mxu0
    %v1783 = vadd.f32 0.0, %v1782
    %v1784 = vpop.f32.mrb[0].mxu0
    %1785 = vdwg.mxu0
    %v1786 = vpack.c.bf16 %v1783, %v1780
    %v1788 = vunpack.c.h.b16 %v65
    %v1789 = vpack.c.b16 %v1788, %v1788
    %v1791 = vsel %vm151, %v1786, 0
    %v1794 = vsel %vm506, %v1789, 0
    %1796 = vmatprep.subr.bf16.mxu0 0
    %1797 = vmatpush1.bf16.msra.mxu0 %v1794
    %1798 = vmatprep.subr.bf16.mxu0 0
    %1799 = vmatpush1.bf16.msra.mxu0 0
    %1800 = vmatprep.subr.bf16.mxu0 0
    %1801 = vmatpush1.bf16.msra.mxu0 0
    %1802 = vmatprep.subr.bf16.mxu0 0
    %1803 = vmatpush1.bf16.msra.mxu0 0
    %1804 = vmatprep.subr.bf16.mxu0 0
    %1805 = vmatpush1.bf16.msra.mxu0 0
    %1806 = vmatprep.subr.bf16.mxu0 0
    %1807 = vmatpush1.bf16.msra.mxu0 0
    %1808 = vmatprep.subr.bf16.mxu0 0
    %1809 = vmatpush1.bf16.msra.mxu0 0
    %1810 = vmatprep.subr.bf16.mxu0 0
    %1811 = vmatpush1.bf16.msra.mxu0 0
    %1812 = vmatprep.subr.bf16.mxu0 0
    %1813 = vmatpush1.bf16.msra.mxu0 0
    %1814 = vmatprep.subr.bf16.mxu0 0
    %1815 = vmatpush1.bf16.msra.mxu0 0
    %1816 = vmatprep.subr.bf16.mxu0 0
    %1817 = vmatpush1.bf16.msra.mxu0 0
    %1818 = vmatprep.subr.bf16.mxu0 0
    %1819 = vmatpush1.bf16.msra.mxu0 0
    %1820 = vmatprep.subr.bf16.mxu0 0
    %1821 = vmatpush1.bf16.msra.mxu0 0
    %1822 = vmatprep.subr.bf16.mxu0 0
    %1823 = vmatpush1.bf16.msra.mxu0 0
    %1824 = vmatprep.subr.bf16.mxu0 0
    %1825 = vmatpush1.bf16.msra.mxu0 0
    %1826 = vmatprep.subr.bf16.mxu0 0
    %1827 = vmatpush1.bf16.msra.mxu0 0
    %1828 = vmatprep.mubr.bf16.mxu0 0
    %1829 = vmatmul.mubr.bf16.gmra.mrb[0].mxu0 %v1791
    %v1830 = vpop.f32.mrb[0].mxu0
    %v1831 = vadd.f32 0.0, %v1830
    %v1832 = vpop.f32.mrb[0].mxu0
    %v1833 = vpop.f32.mrb[0].mxu0
    %v1834 = vadd.f32 0.0, %v1833
    %v1835 = vpop.f32.mrb[0].mxu0
    %1836 = vdwg.mxu0
    %v1837 = vadd.f32 %v1736, %v1831
    %v1838 = vadd.f32 %v1737, %v1834
    %v1839 = vpack.c.bf16 %v1838, %v1837
    %v1840 = vlaneseq
    %v1841 = vshrl.u32 %v1840, 7
    %v1842 = vsub.s32 7, %v1841
    %v1843 = vrot.slane %v83, %v1842
    %v1844 = vunpack.c.h.b16 %v51
    %v1845 = vunpack.c.h.b16 %v56
    %v1846 = vunpack.c.h.b16 %v61
    %v1847 = vunpack.c.h.b16 %v66
    %v1848 = vpack.c.b16 %v1845, %v1844
    %v1849 = vpack.c.b16 %v1847, %v1846
    %v1853 = vsel %vm102, %v1839, 0
    %1855 = vmatprep.subr.bf16.mxu0 0
    %1856 = vmatpush1.bf16.msra.mxu0 %v1848
    %1857 = vmatprep.subr.bf16.mxu0 0
    %1858 = vmatpush1.bf16.msra.mxu0 %v1849
    %1859 = vmatprep.subr.bf16.mxu0 0
    %1860 = vmatpush1.bf16.msra.mxu0 0
    %1861 = vmatprep.subr.bf16.mxu0 0
    %1862 = vmatpush1.bf16.msra.mxu0 0
    %1863 = vmatprep.subr.bf16.mxu0 0
    %1864 = vmatpush1.bf16.msra.mxu0 0
    %1865 = vmatprep.subr.bf16.mxu0 0
    %1866 = vmatpush1.bf16.msra.mxu0 0
    %1867 = vmatprep.subr.bf16.mxu0 0
    %1868 = vmatpush1.bf16.msra.mxu0 0
    %1869 = vmatprep.subr.bf16.mxu0 0
    %1870 = vmatpush1.bf16.msra.mxu0 0
    %1871 = vmatprep.subr.bf16.mxu0 0
    %1872 = vmatpush1.bf16.msra.mxu0 0
    %1873 = vmatprep.subr.bf16.mxu0 0
    %1874 = vmatpush1.bf16.msra.mxu0 0
    %1875 = vmatprep.subr.bf16.mxu0 0
    %1876 = vmatpush1.bf16.msra.mxu0 0
    %1877 = vmatprep.subr.bf16.mxu0 0
    %1878 = vmatpush1.bf16.msra.mxu0 0
    %1879 = vmatprep.subr.bf16.mxu0 0
    %1880 = vmatpush1.bf16.msra.mxu0 0
    %1881 = vmatprep.subr.bf16.mxu0 0
    %1882 = vmatpush1.bf16.msra.mxu0 0
    %1883 = vmatprep.subr.bf16.mxu0 0
    %1884 = vmatpush1.bf16.msra.mxu0 0
    %1885 = vmatprep.subr.bf16.mxu0 0
    %1886 = vmatpush1.bf16.msra.mxu0 0
    %1887 = vmatprep.mubr.bf16.mxu0 0
    %1888 = vmatmul.mubr.bf16.gmra.mrb[0].mxu0 %v1853
    %v1889 = vpop.f32.mrb[0].mxu0
    %v1890 = vadd.f32 %v1843, %v1889
    %v1891 = vpop.f32.mrb[0].mxu0
    %v1892 = vpop.f32.mrb[0].mxu0
    %v1893 = vadd.f32 %v1843, %v1892
    %v1894 = vpop.f32.mrb[0].mxu0
    %1895 = vdwg.mxu0
    %v1896 = vmax.f32 %v1890, 0.0
    %v1897 = vmax.f32 %v1893, 0.0
    %v1898 = vpack.c.bf16 %v1897, %v1896
    %v1899 = vlaneseq
    %v1900 = vshrl.u32 %v1899, 7
    %v1901 = vsub.s32 0, %v1900
    %v1902 = vrot.slane %v84, %v1901
    %v1905 = vunpack.c.l.b16 %v78
    %v1906 = vunpack.c.l.b16 %v79
    %v1907 = vpack.c.b16 %v1906, %v1905
    %v1910 = vsel %vm360, %v1898, 0
    %1912 = vmatprep.subr.bf16.mxu0 0
    %1913 = vmatpush1.bf16.msra.mxu0 %v1907
    %1914 = vmatprep.subr.bf16.mxu0 0
    %1915 = vmatpush1.bf16.msra.mxu0 0
    %1916 = vmatprep.subr.bf16.mxu0 0
    %1917 = vmatpush1.bf16.msra.mxu0 0
    %1918 = vmatprep.subr.bf16.mxu0 0
    %1919 = vmatpush1.bf16.msra.mxu0 0
    %1920 = vmatprep.subr.bf16.mxu0 0
    %1921 = vmatpush1.bf16.msra.mxu0 0
    %1922 = vmatprep.subr.bf16.mxu0 0
    %1923 = vmatpush1.bf16.msra.mxu0 0
    %1924 = vmatprep.subr.bf16.mxu0 0
    %1925 = vmatpush1.bf16.msra.mxu0 0
    %1926 = vmatprep.subr.bf16.mxu0 0
    %1927 = vmatpush1.bf16.msra.mxu0 0
    %1928 = vmatprep.subr.bf16.mxu0 0
    %1929 = vmatpush1.bf16.msra.mxu0 0
    %1930 = vmatprep.subr.bf16.mxu0 0
    %1931 = vmatpush1.bf16.msra.mxu0 0
    %1932 = vmatprep.subr.bf16.mxu0 0
    %1933 = vmatpush1.bf16.msra.mxu0 0
    %1934 = vmatprep.subr.bf16.mxu0 0
    %1935 = vmatpush1.bf16.msra.mxu0 0
    %1936 = vmatprep.subr.bf16.mxu0 0
    %1937 = vmatpush1.bf16.msra.mxu0 0
    %1938 = vmatprep.subr.bf16.mxu0 0
    %1939 = vmatpush1.bf16.msra.mxu0 0
    %1940 = vmatprep.subr.bf16.mxu0 0
    %1941 = vmatpush1.bf16.msra.mxu0 0
    %1942 = vmatprep.subr.bf16.mxu0 0
    %1943 = vmatpush1.bf16.msra.mxu0 0
    %1944 = vmatprep.mubr.bf16.mxu0 0
    %1945 = vmatmul.mubr.bf16.gmra.mrb[0].mxu0 %v1910
    %v1946 = vpop.f32.mrb[0].mxu0
    %v1947 = vadd.f32 %v1902, %v1946
    %v1948 = vpop.f32.mrb[0].mxu0
    %v1949 = vpop.f32.mrb[0].mxu0
    %v1950 = vadd.f32 %v1902, %v1949
    %v1951 = vpop.f32.mrb[0].mxu0
    %1952 = vdwg.mxu0
    %v1953 = vadd.f32 %v1947, %v1837
    %v1954 = vadd.f32 %v1950, %v1838
    %v1955 = vadd.f32 %v1006, %v1953
    %v1956 = vadd.f32 %v1007, %v1954
    %v1957 = vsel %vm102, %v1955, 0.0
    %1958 = vadd.xlane.f32.xlu0 %v1957
    %v1959 = vpop.xlane.xlu0 %1958
    %v1960 = vsel %vm102, %v1956, 0.0
    %1961 = vadd.xlane.f32.xlu0 %v1960
    %v1962 = vpop.xlane.xlu0 %1961
    %v1963 = vmul.f32 %v1959, %v975
    %v1964 = vmul.f32 %v1962, %v975
    %v1965 = vsub.f32 %v1955, %v1963
    %v1966 = vsub.f32 %v1956, %v1964
    %v1967 = vmul.f32 %v1965, %v1965
    %v1968 = vmul.f32 %v1966, %v1966
    %v1969 = vsel %vm102, %v1967, 0.0
    %1970 = vadd.xlane.f32.xlu0 %v1969
    %v1971 = vpop.xlane.xlu0 %1970
    %v1972 = vsel %vm102, %v1968, 0.0
    %1973 = vadd.xlane.f32.xlu0 %v1972
    %v1974 = vpop.xlane.xlu0 %1973
    %v1975 = vmul.f32 %v1971, %v975
    %v1976 = vmul.f32 %v1974, %v975
    %v1977 = vadd.f32 %v1975, 1e-05
    %v1978 = vadd.f32 %v1976, 1e-05
    %v1979 = vrsqrt.pop %v1977
    %v1980 = vrsqrt.pop %v1978
    %v1981 = vmul.f32 %v1965, %v1979
    %v1982 = vmul.f32 %v1966, %v1980
    %v1983 = vlaneseq
    %v1984 = vshrl.u32 %v1983, 7
    %v1985 = vsub.s32 1, %v1984
    %v1986 = vrot.slane %v83, %v1985
    %v1987 = vmul.f32 %v1981, %v1986
    %v1988 = vmul.f32 %v1982, %v1986
    %v1989 = vlaneseq
    %v1990 = vshrl.u32 %v1989, 7
    %v1991 = vsub.s32 2, %v1990
    %v1992 = vrot.slane %v83, %v1991
    %v1993 = vadd.f32 %v1987, %v1992
    %v1994 = vadd.f32 %v1988, %v1992
    %v1995 = vpack.c.bf16 %v1994, %v1993
    %v1996 = vlaneseq
    %v1997 = vshrl.u32 %v1996, 7
    %v1998 = vsub.s32 3, %v1997
    %v1999 = vrot.slane %v82, %v1998
    %v2000 = vunpack.c.h.b16 %v49
    %v2001 = vunpack.c.h.b16 %v54
    %v2002 = vunpack.c.h.b16 %v59
    %v2003 = vunpack.c.h.b16 %v64
    %v2004 = vpack.c.b16 %v2001, %v2000
    %v2005 = vpack.c.b16 %v2003, %v2002
    %v2009 = vsel %vm102, %v1995, 0
    %2011 = vmatprep.subr.bf16.mxu0 0
    %2012 = vmatpush1.bf16.msra.mxu0 %v2004
    %2013 = vmatprep.subr.bf16.mxu0 0
    %2014 = vmatpush1.bf16.msra.mxu0 %v2005
    %2015 = vmatprep.subr.bf16.mxu0 0
    %2016 = vmatpush1.bf16.msra.mxu0 0
    %2017 = vmatprep.subr.bf16.mxu0 0
    %2018 = vmatpush1.bf16.msra.mxu0 0
    %2019 = vmatprep.subr.bf16.mxu0 0
    %2020 = vmatpush1.bf16.msra.mxu0 0
    %2021 = vmatprep.subr.bf16.mxu0 0
    %2022 = vmatpush1.bf16.msra.mxu0 0
    %2023 = vmatprep.subr.bf16.mxu0 0
    %2024 = vmatpush1.bf16.msra.mxu0 0
    %2025 = vmatprep.subr.bf16.mxu0 0
    %2026 = vmatpush1.bf16.msra.mxu0 0
    %2027 = vmatprep.subr.bf16.mxu0 0
    %2028 = vmatpush1.bf16.msra.mxu0 0
    %2029 = vmatprep.subr.bf16.mxu0 0
    %2030 = vmatpush1.bf16.msra.mxu0 0
    %2031 = vmatprep.subr.bf16.mxu0 0
    %2032 = vmatpush1.bf16.msra.mxu0 0
    %2033 = vmatprep.subr.bf16.mxu0 0
    %2034 = vmatpush1.bf16.msra.mxu0 0
    %2035 = vmatprep.subr.bf16.mxu0 0
    %2036 = vmatpush1.bf16.msra.mxu0 0
    %2037 = vmatprep.subr.bf16.mxu0 0
    %2038 = vmatpush1.bf16.msra.mxu0 0
    %2039 = vmatprep.subr.bf16.mxu0 0
    %2040 = vmatpush1.bf16.msra.mxu0 0
    %2041 = vmatprep.subr.bf16.mxu0 0
    %2042 = vmatpush1.bf16.msra.mxu0 0
    %2043 = vmatprep.mubr.bf16.mxu0 0
    %2044 = vmatmul.mubr.bf16.gmra.mrb[0].mxu0 %v2009
    %v2045 = vpop.f32.mrb[0].mxu0
    %v2046 = vadd.f32 %v1999, %v2045
    %v2047 = vpop.f32.mrb[0].mxu0
    %v2048 = vpop.f32.mrb[0].mxu0
    %v2049 = vadd.f32 %v1999, %v2048
    %v2050 = vpop.f32.mrb[0].mxu0
    %2051 = vdwg.mxu0
    %v2052 = vmax.f32 %v2046, 0.0
    %v2053 = vmax.f32 %v2049, 0.0
    %v2054 = vpack.c.bf16 %v2053, %v2052
    %v2055 = vlaneseq
    %v2056 = vshrl.u32 %v2055, 7
    %v2057 = vsub.s32 6, %v2056
    %v2058 = vrot.slane %v82, %v2057
    %v2067 = vunpack.c.l.b16 %v68
    %v2068 = vunpack.c.l.b16 %v69
    %v2069 = vunpack.c.l.b16 %v70
    %v2070 = vunpack.c.l.b16 %v71
    %v2071 = vunpack.c.l.b16 %v72
    %v2072 = vunpack.c.l.b16 %v73
    %v2073 = vunpack.c.l.b16 %v74
    %v2074 = vunpack.c.l.b16 %v75
    %v2075 = vpack.c.b16 %v2068, %v2067
    %v2076 = vpack.c.b16 %v2070, %v2069
    %v2077 = vpack.c.b16 %v2072, %v2071
    %v2078 = vpack.c.b16 %v2074, %v2073
    %vm2083 = vcmask 523264
    %v2085 = vsel %vm2083, %v2054, 0
    %2087 = vmatprep.subr.bf16.mxu0 0
    %2088 = vmatpush1.bf16.msra.mxu0 %v2075
    %2089 = vmatprep.subr.bf16.mxu0 0
    %2090 = vmatpush1.bf16.msra.mxu0 %v2076
    %2091 = vmatprep.subr.bf16.mxu0 0
    %2092 = vmatpush1.bf16.msra.mxu0 %v2077
    %2093 = vmatprep.subr.bf16.mxu0 0
    %2094 = vmatpush1.bf16.msra.mxu0 %v2078
    %2095 = vmatprep.subr.bf16.mxu0 0
    %2096 = vmatpush1.bf16.msra.mxu0 0
    %2097 = vmatprep.subr.bf16.mxu0 0
    %2098 = vmatpush1.bf16.msra.mxu0 0
    %2099 = vmatprep.subr.bf16.mxu0 0
    %2100 = vmatpush1.bf16.msra.mxu0 0
    %2101 = vmatprep.subr.bf16.mxu0 0
    %2102 = vmatpush1.bf16.msra.mxu0 0
    %2103 = vmatprep.subr.bf16.mxu0 0
    %2104 = vmatpush1.bf16.msra.mxu0 0
    %2105 = vmatprep.subr.bf16.mxu0 0
    %2106 = vmatpush1.bf16.msra.mxu0 0
    %2107 = vmatprep.subr.bf16.mxu0 0
    %2108 = vmatpush1.bf16.msra.mxu0 0
    %2109 = vmatprep.subr.bf16.mxu0 0
    %2110 = vmatpush1.bf16.msra.mxu0 0
    %2111 = vmatprep.subr.bf16.mxu0 0
    %2112 = vmatpush1.bf16.msra.mxu0 0
    %2113 = vmatprep.subr.bf16.mxu0 0
    %2114 = vmatpush1.bf16.msra.mxu0 0
    %2115 = vmatprep.subr.bf16.mxu0 0
    %2116 = vmatpush1.bf16.msra.mxu0 0
    %2117 = vmatprep.subr.bf16.mxu0 0
    %2118 = vmatpush1.bf16.msra.mxu0 0
    %2119 = vmatprep.mubr.bf16.mxu0 0
    %2120 = vmatmul.mubr.bf16.gmra.mrb[0].mxu0 %v2085
    %v2121 = vpop.f32.mrb[0].mxu0
    %v2122 = vadd.f32 %v2058, %v2121
    %v2123 = vpop.f32.mrb[0].mxu0
    %v2124 = vpop.f32.mrb[0].mxu0
    %v2125 = vadd.f32 %v2058, %v2124
    %v2126 = vpop.f32.mrb[0].mxu0
    %2127 = vdwg.mxu0
    %v2128 = vpack.c.bf16 %v2125, %v2122
    %v2129 = vlaneseq
    %v2130 = vshrl.u32 %v2129, 7
    %v2131 = vsub.s32 1, %v2130
    %v2132 = vrot.slane %v84, %v2131
    %v2137 = vunpack.c.l.b16 %v52
    %v2138 = vunpack.c.l.b16 %v57
    %v2139 = vunpack.c.l.b16 %v62
    %v2140 = vunpack.c.l.b16 %v67
    %v2141 = vpack.c.b16 %v2138, %v2137
    %v2142 = vpack.c.b16 %v2140, %v2139
    %v2146 = vsel %vm102, %v2128, 0
    %2148 = vmatprep.subr.bf16.mxu0 0
    %2149 = vmatpush1.bf16.msra.mxu0 %v2141
    %2150 = vmatprep.subr.bf16.mxu0 0
    %2151 = vmatpush1.bf16.msra.mxu0 %v2142
    %2152 = vmatprep.subr.bf16.mxu0 0
    %2153 = vmatpush1.bf16.msra.mxu0 0
    %2154 = vmatprep.subr.bf16.mxu0 0
    %2155 = vmatpush1.bf16.msra.mxu0 0
    %2156 = vmatprep.subr.bf16.mxu0 0
    %2157 = vmatpush1.bf16.msra.mxu0 0
    %2158 = vmatprep.subr.bf16.mxu0 0
    %2159 = vmatpush1.bf16.msra.mxu0 0
    %2160 = vmatprep.subr.bf16.mxu0 0
    %2161 = vmatpush1.bf16.msra.mxu0 0
    %2162 = vmatprep.subr.bf16.mxu0 0
    %2163 = vmatpush1.bf16.msra.mxu0 0
    %2164 = vmatprep.subr.bf16.mxu0 0
    %2165 = vmatpush1.bf16.msra.mxu0 0
    %2166 = vmatprep.subr.bf16.mxu0 0
    %2167 = vmatpush1.bf16.msra.mxu0 0
    %2168 = vmatprep.subr.bf16.mxu0 0
    %2169 = vmatpush1.bf16.msra.mxu0 0
    %2170 = vmatprep.subr.bf16.mxu0 0
    %2171 = vmatpush1.bf16.msra.mxu0 0
    %2172 = vmatprep.subr.bf16.mxu0 0
    %2173 = vmatpush1.bf16.msra.mxu0 0
    %2174 = vmatprep.subr.bf16.mxu0 0
    %2175 = vmatpush1.bf16.msra.mxu0 0
    %2176 = vmatprep.subr.bf16.mxu0 0
    %2177 = vmatpush1.bf16.msra.mxu0 0
    %2178 = vmatprep.subr.bf16.mxu0 0
    %2179 = vmatpush1.bf16.msra.mxu0 0
    %2180 = vmatprep.mubr.bf16.mxu0 0
    %2181 = vmatmul.mubr.bf16.gmra.mrb[0].mxu0 %v2146
    %v2182 = vpop.f32.mrb[0].mxu0
    %v2183 = vadd.f32 %v2132, %v2182
    %v2184 = vpop.f32.mrb[0].mxu0
    %v2185 = vpop.f32.mrb[0].mxu0
    %v2186 = vadd.f32 %v2132, %v2185
    %v2187 = vpop.f32.mrb[0].mxu0
    %2188 = vdwg.mxu0
    %v2189 = vmax.f32 %v2183, 0.0
    %v2190 = vmax.f32 %v2186, 0.0
    %v2191 = vpack.c.bf16 %v2190, %v2189
    %v2192 = vlaneseq
    %v2193 = vshrl.u32 %v2192, 7
    %v2194 = vsub.s32 2, %v2193
    %v2195 = vrot.slane %v84, %v2194
    %v2198 = vunpack.c.l.b16 %v80
    %v2199 = vunpack.c.l.b16 %v81
    %v2200 = vpack.c.b16 %v2199, %v2198
    %v2203 = vsel %vm360, %v2191, 0
    %2205 = vmatprep.subr.bf16.mxu0 0
    %2206 = vmatpush1.bf16.msra.mxu0 %v2200
    %2207 = vmatprep.subr.bf16.mxu0 0
    %2208 = vmatpush1.bf16.msra.mxu0 0
    %2209 = vmatprep.subr.bf16.mxu0 0
    %2210 = vmatpush1.bf16.msra.mxu0 0
    %2211 = vmatprep.subr.bf16.mxu0 0
    %2212 = vmatpush1.bf16.msra.mxu0 0
    %2213 = vmatprep.subr.bf16.mxu0 0
    %2214 = vmatpush1.bf16.msra.mxu0 0
    %2215 = vmatprep.subr.bf16.mxu0 0
    %2216 = vmatpush1.bf16.msra.mxu0 0
    %2217 = vmatprep.subr.bf16.mxu0 0
    %2218 = vmatpush1.bf16.msra.mxu0 0
    %2219 = vmatprep.subr.bf16.mxu0 0
    %2220 = vmatpush1.bf16.msra.mxu0 0
    %2221 = vmatprep.subr.bf16.mxu0 0
    %2222 = vmatpush1.bf16.msra.mxu0 0
    %2223 = vmatprep.subr.bf16.mxu0 0
    %2224 = vmatpush1.bf16.msra.mxu0 0
    %2225 = vmatprep.subr.bf16.mxu0 0
    %2226 = vmatpush1.bf16.msra.mxu0 0
    %2227 = vmatprep.subr.bf16.mxu0 0
    %2228 = vmatpush1.bf16.msra.mxu0 0
    %2229 = vmatprep.subr.bf16.mxu0 0
    %2230 = vmatpush1.bf16.msra.mxu0 0
    %2231 = vmatprep.subr.bf16.mxu0 0
    %2232 = vmatpush1.bf16.msra.mxu0 0
    %2233 = vmatprep.subr.bf16.mxu0 0
    %2234 = vmatpush1.bf16.msra.mxu0 0
    %2235 = vmatprep.subr.bf16.mxu0 0
    %2236 = vmatpush1.bf16.msra.mxu0 0
    %2237 = vmatprep.mubr.bf16.mxu0 0
    %2238 = vmatmul.mubr.bf16.gmra.mrb[0].mxu0 %v2203
    %v2239 = vpop.f32.mrb[0].mxu0
    %v2240 = vadd.f32 %v2195, %v2239
    %v2241 = vpop.f32.mrb[0].mxu0
    %v2242 = vpop.f32.mrb[0].mxu0
    %v2243 = vadd.f32 %v2195, %v2242
    %v2244 = vpop.f32.mrb[0].mxu0
    %2245 = vdwg.mxu0
    %v2246 = vadd.f32 %v2240, %v2122
    %v2247 = vadd.f32 %v2243, %v2125
    %v2248 = vadd.f32 %v1993, %v2246
    %v2249 = vadd.f32 %v1994, %v2247
    %v2250 = vsel %vm102, %v2248, 0.0
    %2251 = vadd.xlane.f32.xlu0 %v2250
    %v2252 = vpop.xlane.xlu0 %2251
    %v2253 = vsel %vm102, %v2249, 0.0
    %2254 = vadd.xlane.f32.xlu0 %v2253
    %v2255 = vpop.xlane.xlu0 %2254
    %v2256 = vmul.f32 %v2252, %v975
    %v2257 = vmul.f32 %v2255, %v975
    %v2258 = vsub.f32 %v2248, %v2256
    %v2259 = vsub.f32 %v2249, %v2257
    %v2260 = vmul.f32 %v2258, %v2258
    %v2261 = vmul.f32 %v2259, %v2259
    %v2262 = vsel %vm102, %v2260, 0.0
    %2263 = vadd.xlane.f32.xlu0 %v2262
    %v2264 = vpop.xlane.xlu0 %2263
    %v2265 = vsel %vm102, %v2261, 0.0
    %2266 = vadd.xlane.f32.xlu0 %v2265
    %v2267 = vpop.xlane.xlu0 %2266
    %v2268 = vmul.f32 %v2264, %v975
    %v2269 = vmul.f32 %v2267, %v975
    %v2270 = vadd.f32 %v2268, 1e-05
    %v2271 = vadd.f32 %v2269, 1e-05
    %v2272 = vrsqrt.pop %v2270
    %v2273 = vrsqrt.pop %v2271
    %v2274 = vmul.f32 %v2258, %v2272
    %v2275 = vmul.f32 %v2259, %v2273
    %v2276 = vlaneseq
    %v2277 = vshrl.u32 %v2276, 7
    %v2278 = vsub.s32 3, %v2277
    %v2279 = vrot.slane %v83, %v2278
    %v2280 = vmul.f32 %v2274, %v2279
    %v2281 = vmul.f32 %v2275, %v2279
    %v2282 = vlaneseq
    %v2283 = vshrl.u32 %v2282, 7
    %v2284 = vsub.s32 4, %v2283
    %v2285 = vrot.slane %v83, %v2284
    %v2286 = vadd.f32 %v2280, %v2285
    %v2287 = vadd.f32 %v2281, %v2285
    %s2288 = scalar_lea.vmem %s4, 144
    %v2289 = vld [vmem:[%s2288] sm:$0xff]
    %v2290 = vld [vmem:[%s2288 + $0x8] sm:$0xff]
    %v2291 = vld [vmem:[%s2288 + $0x10] sm:$0xff]
    %v2292 = vld [vmem:[%s2288 + $0x18] sm:$0xff]
    %v2293 = vld [vmem:[%s2288 + $0x20] sm:$0xf]
    %v2294 = vld [vmem:[%s2288 + $0x24] sm:$0xff]
    %v2295 = vld [vmem:[%s2288 + $0x2c] sm:$0xff]
    %v2296 = vld [vmem:[%s2288 + $0x34] sm:$0xff]
    %v2297 = vld [vmem:[%s2288 + $0x3c] sm:$0xff]
    %v2298 = vld [vmem:[%s2288 + $0x44] sm:$0xf]
    %v2299 = vld [vmem:[%s2288 + $0x48] sm:$0xff]
    %v2300 = vld [vmem:[%s2288 + $0x50] sm:$0xff]
    %v2301 = vld [vmem:[%s2288 + $0x58] sm:$0xff]
    %v2302 = vld [vmem:[%s2288 + $0x60] sm:$0xff]
    %v2303 = vld [vmem:[%s2288 + $0x68] sm:$0xf]
    %v2304 = vld [vmem:[%s2288 + $0x6c] sm:$0xff]
    %v2305 = vld [vmem:[%s2288 + $0x74] sm:$0xff]
    %v2306 = vld [vmem:[%s2288 + $0x7c] sm:$0xff]
    %v2307 = vld [vmem:[%s2288 + $0x84] sm:$0xff]
    %v2308 = vld [vmem:[%s2288 + $0x8c] sm:$0xf]
    %s2309 = scalar_lea.vmem %s5, 56
    %v2310 = vld [vmem:[%s2309] sm:$0xf]
    %v2311 = vld [vmem:[%s2309 + $0x4] sm:$0xf]
    %v2312 = vld [vmem:[%s2309 + $0x8] sm:$0xf]
    %v2313 = vld [vmem:[%s2309 + $0xc] sm:$0xf]
    %v2314 = vld [vmem:[%s2309 + $0x10] sm:$0xf]
    %v2315 = vld [vmem:[%s2309 + $0x14] sm:$0xf]
    %v2316 = vld [vmem:[%s2309 + $0x18] sm:$0xf]
    %v2317 = vld [vmem:[%s2309 + $0x1c] sm:$0xf]
    %v2318 = vld [vmem:[%s2309 + $0x20] sm:$0xf]
    %v2319 = vld [vmem:[%s2309 + $0x24] sm:$0xf]
    %v2320 = vld [vmem:[%s2309 + $0x28] sm:$0xf]
    %v2321 = vld [vmem:[%s2309 + $0x2c] sm:$0xf]
    %v2322 = vld [vmem:[%s2309 + $0x30] sm:$0xf]
    %v2323 = vld [vmem:[%s2309 + $0x34] sm:$0xf]
    %s2324 = scalar_lea.vmem %s6, 24
    %v2325 = vld [vmem:[%s2324] sm:$0xff]
    %v2326 = vld [vmem:[%s2324 + $0x8] sm:$0xff]
    %v2327 = vld [vmem:[%s2324 + $0x10] sm:$0x7]
    %v2328 = vpack.c.bf16 %v2287, %v2286
    %v2329 = vlaneseq
    %v2330 = vshrl.u32 %v2329, 7
    %v2331 = vsub.s32 0, %v2330
    %v2332 = vrot.slane %v2325, %v2331
    %v2337 = vunpack.c.l.b16 %v2289
    %v2338 = vunpack.c.l.b16 %v2294
    %v2339 = vunpack.c.l.b16 %v2299
    %v2340 = vunpack.c.l.b16 %v2304
    %v2341 = vpack.c.b16 %v2338, %v2337
    %v2342 = vpack.c.b16 %v2340, %v2339
    %v2346 = vsel %vm102, %v2328, 0
    %2348 = vmatprep.subr.bf16.mxu0 0
    %2349 = vmatpush1.bf16.msra.mxu0 %v2341
    %2350 = vmatprep.subr.bf16.mxu0 0
    %2351 = vmatpush1.bf16.msra.mxu0 %v2342
    %2352 = vmatprep.subr.bf16.mxu0 0
    %2353 = vmatpush1.bf16.msra.mxu0 0
    %2354 = vmatprep.subr.bf16.mxu0 0
    %2355 = vmatpush1.bf16.msra.mxu0 0
    %2356 = vmatprep.subr.bf16.mxu0 0
    %2357 = vmatpush1.bf16.msra.mxu0 0
    %2358 = vmatprep.subr.bf16.mxu0 0
    %2359 = vmatpush1.bf16.msra.mxu0 0
    %2360 = vmatprep.subr.bf16.mxu0 0
    %2361 = vmatpush1.bf16.msra.mxu0 0
    %2362 = vmatprep.subr.bf16.mxu0 0
    %2363 = vmatpush1.bf16.msra.mxu0 0
    %2364 = vmatprep.subr.bf16.mxu0 0
    %2365 = vmatpush1.bf16.msra.mxu0 0
    %2366 = vmatprep.subr.bf16.mxu0 0
    %2367 = vmatpush1.bf16.msra.mxu0 0
    %2368 = vmatprep.subr.bf16.mxu0 0
    %2369 = vmatpush1.bf16.msra.mxu0 0
    %2370 = vmatprep.subr.bf16.mxu0 0
    %2371 = vmatpush1.bf16.msra.mxu0 0
    %2372 = vmatprep.subr.bf16.mxu0 0
    %2373 = vmatpush1.bf16.msra.mxu0 0
    %2374 = vmatprep.subr.bf16.mxu0 0
    %2375 = vmatpush1.bf16.msra.mxu0 0
    %2376 = vmatprep.subr.bf16.mxu0 0
    %2377 = vmatpush1.bf16.msra.mxu0 0
    %2378 = vmatprep.subr.bf16.mxu0 0
    %2379 = vmatpush1.bf16.msra.mxu0 0
    %2380 = vmatprep.mubr.bf16.mxu0 0
    %2381 = vmatmul.mubr.bf16.gmra.mrb[0].mxu0 %v2346
    %v2382 = vpop.f32.mrb[0].mxu0
    %v2383 = vadd.f32 %v2332, %v2382
    %v2384 = vpop.f32.mrb[0].mxu0
    %v2385 = vpop.f32.mrb[0].mxu0
    %v2386 = vadd.f32 %v2332, %v2385
    %v2387 = vpop.f32.mrb[0].mxu0
    %2388 = vdwg.mxu0
    %v2389 = vpack.c.bf16 %v2386, %v2383
    %2391 = vrot.lane.b32.xlu0 %v2389, 96
    %v2392 = vpop.permute.xlu0 %2391
    %v2394 = vsel %vm151, %v2389, 0
    %v2397 = vsel %vm151, %v2392, 0
    %2399 = vmatprep.subr.bf16.mxu0 0
    %2400 = vmatpush1.bf16.xpose.msra.mxu0 %v2397
    %2401 = vmatprep.subr.bf16.mxu0 0
    %2402 = vmatpush1.bf16.xpose.msra.mxu0 0
    %2403 = vmatprep.subr.bf16.mxu0 0
    %2404 = vmatpush1.bf16.xpose.msra.mxu0 0
    %2405 = vmatprep.subr.bf16.mxu0 0
    %2406 = vmatpush1.bf16.xpose.msra.mxu0 0
    %2407 = vmatprep.subr.bf16.mxu0 0
    %2408 = vmatpush1.bf16.xpose.msra.mxu0 0
    %2409 = vmatprep.subr.bf16.mxu0 0
    %2410 = vmatpush1.bf16.xpose.msra.mxu0 0
    %2411 = vmatprep.subr.bf16.mxu0 0
    %2412 = vmatpush1.bf16.xpose.msra.mxu0 0
    %2413 = vmatprep.subr.bf16.mxu0 0
    %2414 = vmatpush1.bf16.xpose.msra.mxu0 0
    %2415 = vmatprep.subr.bf16.mxu0 0
    %2416 = vmatpush1.bf16.xpose.msra.mxu0 0
    %2417 = vmatprep.subr.bf16.mxu0 0
    %2418 = vmatpush1.bf16.xpose.msra.mxu0 0
    %2419 = vmatprep.subr.bf16.mxu0 0
    %2420 = vmatpush1.bf16.xpose.msra.mxu0 0
    %2421 = vmatprep.subr.bf16.mxu0 0
    %2422 = vmatpush1.bf16.xpose.msra.mxu0 0
    %2423 = vmatprep.subr.bf16.mxu0 0
    %2424 = vmatpush1.bf16.xpose.msra.mxu0 0
    %2425 = vmatprep.subr.bf16.mxu0 0
    %2426 = vmatpush1.bf16.xpose.msra.mxu0 0
    %2427 = vmatprep.subr.bf16.mxu0 0
    %2428 = vmatpush1.bf16.xpose.msra.mxu0 0
    %2429 = vmatprep.subr.bf16.mxu0 0
    %2430 = vmatpush1.bf16.xpose.msra.mxu0 0
    %2431 = vmatprep.mubr.bf16.mxu0 0
    %2432 = vmatmul.mubr.bf16.gmra.mrb[0].mxu0 %v2394
    %v2433 = vpop.f32.mrb[0].mxu0
    %v2434 = vadd.f32 0.0, %v2433
    %v2435 = vpop.f32.mrb[0].mxu0
    %v2436 = vpop.f32.mrb[0].mxu0
    %v2437 = vadd.f32 0.0, %v2436
    %v2438 = vpop.f32.mrb[0].mxu0
    %2439 = vdwg.mxu0
    %2440 = vrot.lane.b32.xlu0 %v2389, 120
    %v2441 = vpop.permute.xlu0 %2440
    %2442 = vrot.lane.b32.xlu0 %v2389, 88
    %v2443 = vpop.permute.xlu0 %2442
    %v2445 = vsel %vm151, %v2441, 0
    %v2448 = vsel %vm151, %v2443, 0
    %2450 = vmatprep.subr.bf16.mxu0 0
    %2451 = vmatpush1.bf16.xpose.msra.mxu0 %v2448
    %2452 = vmatprep.subr.bf16.mxu0 0
    %2453 = vmatpush1.bf16.xpose.msra.mxu0 0
    %2454 = vmatprep.subr.bf16.mxu0 0
    %2455 = vmatpush1.bf16.xpose.msra.mxu0 0
    %2456 = vmatprep.subr.bf16.mxu0 0
    %2457 = vmatpush1.bf16.xpose.msra.mxu0 0
    %2458 = vmatprep.subr.bf16.mxu0 0
    %2459 = vmatpush1.bf16.xpose.msra.mxu0 0
    %2460 = vmatprep.subr.bf16.mxu0 0
    %2461 = vmatpush1.bf16.xpose.msra.mxu0 0
    %2462 = vmatprep.subr.bf16.mxu0 0
    %2463 = vmatpush1.bf16.xpose.msra.mxu0 0
    %2464 = vmatprep.subr.bf16.mxu0 0
    %2465 = vmatpush1.bf16.xpose.msra.mxu0 0
    %2466 = vmatprep.subr.bf16.mxu0 0
    %2467 = vmatpush1.bf16.xpose.msra.mxu0 0
    %2468 = vmatprep.subr.bf16.mxu0 0
    %2469 = vmatpush1.bf16.xpose.msra.mxu0 0
    %2470 = vmatprep.subr.bf16.mxu0 0
    %2471 = vmatpush1.bf16.xpose.msra.mxu0 0
    %2472 = vmatprep.subr.bf16.mxu0 0
    %2473 = vmatpush1.bf16.xpose.msra.mxu0 0
    %2474 = vmatprep.subr.bf16.mxu0 0
    %2475 = vmatpush1.bf16.xpose.msra.mxu0 0
    %2476 = vmatprep.subr.bf16.mxu0 0
    %2477 = vmatpush1.bf16.xpose.msra.mxu0 0
    %2478 = vmatprep.subr.bf16.mxu0 0
    %2479 = vmatpush1.bf16.xpose.msra.mxu0 0
    %2480 = vmatprep.subr.bf16.mxu0 0
    %2481 = vmatpush1.bf16.xpose.msra.mxu0 0
    %2482 = vmatprep.mubr.bf16.mxu0 0
    %2483 = vmatmul.mubr.bf16.gmra.mrb[0].mxu0 %v2445
    %v2484 = vpop.f32.mrb[0].mxu0
    %v2485 = vadd.f32 0.0, %v2484
    %v2486 = vpop.f32.mrb[0].mxu0
    %v2487 = vpop.f32.mrb[0].mxu0
    %v2488 = vadd.f32 0.0, %v2487
    %v2489 = vpop.f32.mrb[0].mxu0
    %2490 = vdwg.mxu0
    %2491 = vrot.lane.b32.xlu0 %v2389, 112
    %v2492 = vpop.permute.xlu0 %2491
    %2493 = vrot.lane.b32.xlu0 %v2389, 80
    %v2494 = vpop.permute.xlu0 %2493
    %v2496 = vsel %vm151, %v2492, 0
    %v2499 = vsel %vm151, %v2494, 0
    %2501 = vmatprep.subr.bf16.mxu0 0
    %2502 = vmatpush1.bf16.xpose.msra.mxu0 %v2499
    %2503 = vmatprep.subr.bf16.mxu0 0
    %2504 = vmatpush1.bf16.xpose.msra.mxu0 0
    %2505 = vmatprep.subr.bf16.mxu0 0
    %2506 = vmatpush1.bf16.xpose.msra.mxu0 0
    %2507 = vmatprep.subr.bf16.mxu0 0
    %2508 = vmatpush1.bf16.xpose.msra.mxu0 0
    %2509 = vmatprep.subr.bf16.mxu0 0
    %2510 = vmatpush1.bf16.xpose.msra.mxu0 0
    %2511 = vmatprep.subr.bf16.mxu0 0
    %2512 = vmatpush1.bf16.xpose.msra.mxu0 0
    %2513 = vmatprep.subr.bf16.mxu0 0
    %2514 = vmatpush1.bf16.xpose.msra.mxu0 0
    %2515 = vmatprep.subr.bf16.mxu0 0
    %2516 = vmatpush1.bf16.xpose.msra.mxu0 0
    %2517 = vmatprep.subr.bf16.mxu0 0
    %2518 = vmatpush1.bf16.xpose.msra.mxu0 0
    %2519 = vmatprep.subr.bf16.mxu0 0
    %2520 = vmatpush1.bf16.xpose.msra.mxu0 0
    %2521 = vmatprep.subr.bf16.mxu0 0
    %2522 = vmatpush1.bf16.xpose.msra.mxu0 0
    %2523 = vmatprep.subr.bf16.mxu0 0
    %2524 = vmatpush1.bf16.xpose.msra.mxu0 0
    %2525 = vmatprep.subr.bf16.mxu0 0
    %2526 = vmatpush1.bf16.xpose.msra.mxu0 0
    %2527 = vmatprep.subr.bf16.mxu0 0
    %2528 = vmatpush1.bf16.xpose.msra.mxu0 0
    %2529 = vmatprep.subr.bf16.mxu0 0
    %2530 = vmatpush1.bf16.xpose.msra.mxu0 0
    %2531 = vmatprep.subr.bf16.mxu0 0
    %2532 = vmatpush1.bf16.xpose.msra.mxu0 0
    %2533 = vmatprep.mubr.bf16.mxu0 0
    %2534 = vmatmul.mubr.bf16.gmra.mrb[0].mxu0 %v2496
    %v2535 = vpop.f32.mrb[0].mxu0
    %v2536 = vadd.f32 0.0, %v2535
    %v2537 = vpop.f32.mrb[0].mxu0
    %v2538 = vpop.f32.mrb[0].mxu0
    %v2539 = vadd.f32 0.0, %v2538
    %v2540 = vpop.f32.mrb[0].mxu0
    %2541 = vdwg.mxu0
    %2542 = vrot.lane.b32.xlu0 %v2389, 104
    %v2543 = vpop.permute.xlu0 %2542
    %2544 = vrot.lane.b32.xlu0 %v2389, 72
    %v2545 = vpop.permute.xlu0 %2544
    %v2547 = vsel %vm151, %v2543, 0
    %v2550 = vsel %vm151, %v2545, 0
    %2552 = vmatprep.subr.bf16.mxu0 0
    %2553 = vmatpush1.bf16.xpose.msra.mxu0 %v2550
    %2554 = vmatprep.subr.bf16.mxu0 0
    %2555 = vmatpush1.bf16.xpose.msra.mxu0 0
    %2556 = vmatprep.subr.bf16.mxu0 0
    %2557 = vmatpush1.bf16.xpose.msra.mxu0 0
    %2558 = vmatprep.subr.bf16.mxu0 0
    %2559 = vmatpush1.bf16.xpose.msra.mxu0 0
    %2560 = vmatprep.subr.bf16.mxu0 0
    %2561 = vmatpush1.bf16.xpose.msra.mxu0 0
    %2562 = vmatprep.subr.bf16.mxu0 0
    %2563 = vmatpush1.bf16.xpose.msra.mxu0 0
    %2564 = vmatprep.subr.bf16.mxu0 0
    %2565 = vmatpush1.bf16.xpose.msra.mxu0 0
    %2566 = vmatprep.subr.bf16.mxu0 0
    %2567 = vmatpush1.bf16.xpose.msra.mxu0 0
    %2568 = vmatprep.subr.bf16.mxu0 0
    %2569 = vmatpush1.bf16.xpose.msra.mxu0 0
    %2570 = vmatprep.subr.bf16.mxu0 0
    %2571 = vmatpush1.bf16.xpose.msra.mxu0 0
    %2572 = vmatprep.subr.bf16.mxu0 0
    %2573 = vmatpush1.bf16.xpose.msra.mxu0 0
    %2574 = vmatprep.subr.bf16.mxu0 0
    %2575 = vmatpush1.bf16.xpose.msra.mxu0 0
    %2576 = vmatprep.subr.bf16.mxu0 0
    %2577 = vmatpush1.bf16.xpose.msra.mxu0 0
    %2578 = vmatprep.subr.bf16.mxu0 0
    %2579 = vmatpush1.bf16.xpose.msra.mxu0 0
    %2580 = vmatprep.subr.bf16.mxu0 0
    %2581 = vmatpush1.bf16.xpose.msra.mxu0 0
    %2582 = vmatprep.subr.bf16.mxu0 0
    %2583 = vmatpush1.bf16.xpose.msra.mxu0 0
    %2584 = vmatprep.mubr.bf16.mxu0 0
    %2585 = vmatmul.mubr.bf16.gmra.mrb[0].mxu0 %v2547
    %v2586 = vpop.f32.mrb[0].mxu0
    %v2587 = vadd.f32 0.0, %v2586
    %v2588 = vpop.f32.mrb[0].mxu0
    %v2589 = vpop.f32.mrb[0].mxu0
    %v2590 = vadd.f32 0.0, %v2589
    %v2591 = vpop.f32.mrb[0].mxu0
    %2592 = vdwg.mxu0
    %v2593 = vadd.f32 %v2434, %v32
    %v2594 = vadd.f32 %v2437, %v33
    %v2595 = vadd.f32 %v2485, %v34
    %v2596 = vadd.f32 %v2488, %v35
    %v2597 = vadd.f32 %v2536, %v36
    %v2598 = vadd.f32 %v2539, %v37
    %v2599 = vadd.f32 %v2587, %v38
    %v2600 = vadd.f32 %v2590, %v39
    %v2601 = vsel %vm360, %v2593, -inf
    %2602 = vmax.xlane.f32.xlu0 %v2601
    %v2603 = vpop.xlane.xlu0 %2602
    %v2604 = vsel %vm360, %v2594, -inf
    %2605 = vmax.xlane.f32.xlu0 %v2604
    %v2606 = vpop.xlane.xlu0 %2605
    %v2607 = vsel %vm360, %v2595, -inf
    %2608 = vmax.xlane.f32.xlu0 %v2607
    %v2609 = vpop.xlane.xlu0 %2608
    %v2610 = vsel %vm360, %v2596, -inf
    %2611 = vmax.xlane.f32.xlu0 %v2610
    %v2612 = vpop.xlane.xlu0 %2611
    %v2613 = vsel %vm360, %v2597, -inf
    %2614 = vmax.xlane.f32.xlu0 %v2613
    %v2615 = vpop.xlane.xlu0 %2614
    %v2616 = vsel %vm360, %v2598, -inf
    %2617 = vmax.xlane.f32.xlu0 %v2616
    %v2618 = vpop.xlane.xlu0 %2617
    %v2619 = vsel %vm360, %v2599, -inf
    %2620 = vmax.xlane.f32.xlu0 %v2619
    %v2621 = vpop.xlane.xlu0 %2620
    %v2622 = vsel %vm360, %v2600, -inf
    %2623 = vmax.xlane.f32.xlu0 %v2622
    %v2624 = vpop.xlane.xlu0 %2623
    %v2625 = vsub.f32 %v2593, %v2603
    %v2626 = vsub.f32 %v2594, %v2606
    %v2627 = vsub.f32 %v2595, %v2609
    %v2628 = vsub.f32 %v2596, %v2612
    %v2629 = vsub.f32 %v2597, %v2615
    %v2630 = vsub.f32 %v2598, %v2618
    %v2631 = vsub.f32 %v2599, %v2621
    %v2632 = vsub.f32 %v2600, %v2624
    %v2633 = vmul.f32 %v2625, 1.442695
    %v2634 = vpow.pop %v2633
    %v2635 = vmul.f32 %v2626, 1.442695
    %v2636 = vpow.pop %v2635
    %v2637 = vmul.f32 %v2627, 1.442695
    %v2638 = vpow.pop %v2637
    %v2639 = vmul.f32 %v2628, 1.442695
    %v2640 = vpow.pop %v2639
    %v2641 = vmul.f32 %v2629, 1.442695
    %v2642 = vpow.pop %v2641
    %v2643 = vmul.f32 %v2630, 1.442695
    %v2644 = vpow.pop %v2643
    %v2645 = vmul.f32 %v2631, 1.442695
    %v2646 = vpow.pop %v2645
    %v2647 = vmul.f32 %v2632, 1.442695
    %v2648 = vpow.pop %v2647
    %v2649 = vsel %vm360, %v2634, 0.0
    %2650 = vadd.xlane.f32.xlu0 %v2649
    %v2651 = vpop.xlane.xlu0 %2650
    %v2652 = vsel %vm360, %v2636, 0.0
    %2653 = vadd.xlane.f32.xlu0 %v2652
    %v2654 = vpop.xlane.xlu0 %2653
    %v2655 = vsel %vm360, %v2638, 0.0
    %2656 = vadd.xlane.f32.xlu0 %v2655
    %v2657 = vpop.xlane.xlu0 %2656
    %v2658 = vsel %vm360, %v2640, 0.0
    %2659 = vadd.xlane.f32.xlu0 %v2658
    %v2660 = vpop.xlane.xlu0 %2659
    %v2661 = vsel %vm360, %v2642, 0.0
    %2662 = vadd.xlane.f32.xlu0 %v2661
    %v2663 = vpop.xlane.xlu0 %2662
    %v2664 = vsel %vm360, %v2644, 0.0
    %2665 = vadd.xlane.f32.xlu0 %v2664
    %v2666 = vpop.xlane.xlu0 %2665
    %v2667 = vsel %vm360, %v2646, 0.0
    %2668 = vadd.xlane.f32.xlu0 %v2667
    %v2669 = vpop.xlane.xlu0 %2668
    %v2670 = vsel %vm360, %v2648, 0.0
    %2671 = vadd.xlane.f32.xlu0 %v2670
    %v2672 = vpop.xlane.xlu0 %2671
    %v2673 = vrcp.pop %v2651
    %v2674 = vrcp.pop %v2654
    %v2675 = vrcp.pop %v2657
    %v2676 = vrcp.pop %v2660
    %v2677 = vrcp.pop %v2663
    %v2678 = vrcp.pop %v2666
    %v2679 = vrcp.pop %v2669
    %v2680 = vrcp.pop %v2672
    %v2681 = vmul.f32 %v2634, %v2673
    %v2682 = vmul.f32 %v2636, %v2674
    %v2683 = vmul.f32 %v2638, %v2675
    %v2684 = vmul.f32 %v2640, %v2676
    %v2685 = vmul.f32 %v2642, %v2677
    %v2686 = vmul.f32 %v2644, %v2678
    %v2687 = vmul.f32 %v2646, %v2679
    %v2688 = vmul.f32 %v2648, %v2680
    %v2689 = vlaneseq
    %v2690 = vshrl.u32 %v2689, 7
    %v2691 = vsub.s32 4, %v2690
    %v2692 = vrot.slane %v2325, %v2691
    %v2693 = vadd.f32 %v2692, 0.0
    %v2694 = vpack.c.bf16 %v2682, %v2681
    %2695 = vrot.lane.b32.xlu0 %v2389, 64
    %v2696 = vpop.permute.xlu0 %2695
    %v2699 = vsel %vm360, %v2694, 0
    %2701 = vmatprep.subr.bf16.mxu0 0
    %2702 = vmatpush1.bf16.msra.mxu0 %v2696
    %2703 = vmatprep.subr.bf16.mxu0 0
    %2704 = vmatpush1.bf16.msra.mxu0 0
    %2705 = vmatprep.subr.bf16.mxu0 0
    %2706 = vmatpush1.bf16.msra.mxu0 0
    %2707 = vmatprep.subr.bf16.mxu0 0
    %2708 = vmatpush1.bf16.msra.mxu0 0
    %2709 = vmatprep.subr.bf16.mxu0 0
    %2710 = vmatpush1.bf16.msra.mxu0 0
    %2711 = vmatprep.subr.bf16.mxu0 0
    %2712 = vmatpush1.bf16.msra.mxu0 0
    %2713 = vmatprep.subr.bf16.mxu0 0
    %2714 = vmatpush1.bf16.msra.mxu0 0
    %2715 = vmatprep.subr.bf16.mxu0 0
    %2716 = vmatpush1.bf16.msra.mxu0 0
    %2717 = vmatprep.subr.bf16.mxu0 0
    %2718 = vmatpush1.bf16.msra.mxu0 0
    %2719 = vmatprep.subr.bf16.mxu0 0
    %2720 = vmatpush1.bf16.msra.mxu0 0
    %2721 = vmatprep.subr.bf16.mxu0 0
    %2722 = vmatpush1.bf16.msra.mxu0 0
    %2723 = vmatprep.subr.bf16.mxu0 0
    %2724 = vmatpush1.bf16.msra.mxu0 0
    %2725 = vmatprep.subr.bf16.mxu0 0
    %2726 = vmatpush1.bf16.msra.mxu0 0
    %2727 = vmatprep.subr.bf16.mxu0 0
    %2728 = vmatpush1.bf16.msra.mxu0 0
    %2729 = vmatprep.subr.bf16.mxu0 0
    %2730 = vmatpush1.bf16.msra.mxu0 0
    %2731 = vmatprep.subr.bf16.mxu0 0
    %2732 = vmatpush1.bf16.msra.mxu0 0
    %2733 = vmatprep.mubr.bf16.mxu0 0
    %2734 = vmatmul.mubr.bf16.gmra.mrb[0].mxu0 %v2699
    %v2735 = vpop.f32.mrb[0].mxu0
    %v2736 = vadd.f32 0.0, %v2735
    %v2737 = vpop.f32.mrb[0].mxu0
    %v2738 = vpop.f32.mrb[0].mxu0
    %v2739 = vadd.f32 0.0, %v2738
    %v2740 = vpop.f32.mrb[0].mxu0
    %2741 = vdwg.mxu0
    %v2742 = vpack.c.bf16 %v2739, %v2736
    %v2744 = vsel %vm151, %v2742, 0
    %v2747 = vsel %vm506, %v2291, 0
    %2749 = vmatprep.subr.bf16.mxu0 0
    %2750 = vmatpush1.bf16.msra.mxu0 %v2747
    %2751 = vmatprep.subr.bf16.mxu0 0
    %2752 = vmatpush1.bf16.msra.mxu0 0
    %2753 = vmatprep.subr.bf16.mxu0 0
    %2754 = vmatpush1.bf16.msra.mxu0 0
    %2755 = vmatprep.subr.bf16.mxu0 0
    %2756 = vmatpush1.bf16.msra.mxu0 0
    %2757 = vmatprep.subr.bf16.mxu0 0
    %2758 = vmatpush1.bf16.msra.mxu0 0
    %2759 = vmatprep.subr.bf16.mxu0 0
    %2760 = vmatpush1.bf16.msra.mxu0 0
    %2761 = vmatprep.subr.bf16.mxu0 0
    %2762 = vmatpush1.bf16.msra.mxu0 0
    %2763 = vmatprep.subr.bf16.mxu0 0
    %2764 = vmatpush1.bf16.msra.mxu0 0
    %2765 = vmatprep.subr.bf16.mxu0 0
    %2766 = vmatpush1.bf16.msra.mxu0 0
    %2767 = vmatprep.subr.bf16.mxu0 0
    %2768 = vmatpush1.bf16.msra.mxu0 0
    %2769 = vmatprep.subr.bf16.mxu0 0
    %2770 = vmatpush1.bf16.msra.mxu0 0
    %2771 = vmatprep.subr.bf16.mxu0 0
    %2772 = vmatpush1.bf16.msra.mxu0 0
    %2773 = vmatprep.subr.bf16.mxu0 0
    %2774 = vmatpush1.bf16.msra.mxu0 0
    %2775 = vmatprep.subr.bf16.mxu0 0
    %2776 = vmatpush1.bf16.msra.mxu0 0
    %2777 = vmatprep.subr.bf16.mxu0 0
    %2778 = vmatpush1.bf16.msra.mxu0 0
    %2779 = vmatprep.subr.bf16.mxu0 0
    %2780 = vmatpush1.bf16.msra.mxu0 0
    %2781 = vmatprep.mubr.bf16.mxu0 0
    %2782 = vmatmul.mubr.bf16.gmra.mrb[0].mxu0 %v2744
    %v2783 = vpop.f32.mrb[0].mxu0
    %v2784 = vadd.f32 0.0, %v2783
    %v2785 = vpop.f32.mrb[0].mxu0
    %v2786 = vpop.f32.mrb[0].mxu0
    %v2787 = vadd.f32 0.0, %v2786
    %v2788 = vpop.f32.mrb[0].mxu0
    %2789 = vdwg.mxu0
    %v2790 = vadd.f32 %v2693, %v2784
    %v2791 = vadd.f32 %v2693, %v2787
    %v2792 = vpack.c.bf16 %v2684, %v2683
    %2793 = vrot.lane.b32.xlu0 %v2389, 56
    %v2794 = vpop.permute.xlu0 %2793
    %v2797 = vsel %vm360, %v2792, 0
    %2799 = vmatprep.subr.bf16.mxu0 0
    %2800 = vmatpush1.bf16.msra.mxu0 %v2794
    %2801 = vmatprep.subr.bf16.mxu0 0
    %2802 = vmatpush1.bf16.msra.mxu0 0
    %2803 = vmatprep.subr.bf16.mxu0 0
    %2804 = vmatpush1.bf16.msra.mxu0 0
    %2805 = vmatprep.subr.bf16.mxu0 0
    %2806 = vmatpush1.bf16.msra.mxu0 0
    %2807 = vmatprep.subr.bf16.mxu0 0
    %2808 = vmatpush1.bf16.msra.mxu0 0
    %2809 = vmatprep.subr.bf16.mxu0 0
    %2810 = vmatpush1.bf16.msra.mxu0 0
    %2811 = vmatprep.subr.bf16.mxu0 0
    %2812 = vmatpush1.bf16.msra.mxu0 0
    %2813 = vmatprep.subr.bf16.mxu0 0
    %2814 = vmatpush1.bf16.msra.mxu0 0
    %2815 = vmatprep.subr.bf16.mxu0 0
    %2816 = vmatpush1.bf16.msra.mxu0 0
    %2817 = vmatprep.subr.bf16.mxu0 0
    %2818 = vmatpush1.bf16.msra.mxu0 0
    %2819 = vmatprep.subr.bf16.mxu0 0
    %2820 = vmatpush1.bf16.msra.mxu0 0
    %2821 = vmatprep.subr.bf16.mxu0 0
    %2822 = vmatpush1.bf16.msra.mxu0 0
    %2823 = vmatprep.subr.bf16.mxu0 0
    %2824 = vmatpush1.bf16.msra.mxu0 0
    %2825 = vmatprep.subr.bf16.mxu0 0
    %2826 = vmatpush1.bf16.msra.mxu0 0
    %2827 = vmatprep.subr.bf16.mxu0 0
    %2828 = vmatpush1.bf16.msra.mxu0 0
    %2829 = vmatprep.subr.bf16.mxu0 0
    %2830 = vmatpush1.bf16.msra.mxu0 0
    %2831 = vmatprep.mubr.bf16.mxu0 0
    %2832 = vmatmul.mubr.bf16.gmra.mrb[0].mxu0 %v2797
    %v2833 = vpop.f32.mrb[0].mxu0
    %v2834 = vadd.f32 0.0, %v2833
    %v2835 = vpop.f32.mrb[0].mxu0
    %v2836 = vpop.f32.mrb[0].mxu0
    %v2837 = vadd.f32 0.0, %v2836
    %v2838 = vpop.f32.mrb[0].mxu0
    %2839 = vdwg.mxu0
    %v2840 = vpack.c.bf16 %v2837, %v2834
    %v2842 = vsel %vm151, %v2840, 0
    %v2845 = vsel %vm506, %v2296, 0
    %2847 = vmatprep.subr.bf16.mxu0 0
    %2848 = vmatpush1.bf16.msra.mxu0 %v2845
    %2849 = vmatprep.subr.bf16.mxu0 0
    %2850 = vmatpush1.bf16.msra.mxu0 0
    %2851 = vmatprep.subr.bf16.mxu0 0
    %2852 = vmatpush1.bf16.msra.mxu0 0
    %2853 = vmatprep.subr.bf16.mxu0 0
    %2854 = vmatpush1.bf16.msra.mxu0 0
    %2855 = vmatprep.subr.bf16.mxu0 0
    %2856 = vmatpush1.bf16.msra.mxu0 0
    %2857 = vmatprep.subr.bf16.mxu0 0
    %2858 = vmatpush1.bf16.msra.mxu0 0
    %2859 = vmatprep.subr.bf16.mxu0 0
    %2860 = vmatpush1.bf16.msra.mxu0 0
    %2861 = vmatprep.subr.bf16.mxu0 0
    %2862 = vmatpush1.bf16.msra.mxu0 0
    %2863 = vmatprep.subr.bf16.mxu0 0
    %2864 = vmatpush1.bf16.msra.mxu0 0
    %2865 = vmatprep.subr.bf16.mxu0 0
    %2866 = vmatpush1.bf16.msra.mxu0 0
    %2867 = vmatprep.subr.bf16.mxu0 0
    %2868 = vmatpush1.bf16.msra.mxu0 0
    %2869 = vmatprep.subr.bf16.mxu0 0
    %2870 = vmatpush1.bf16.msra.mxu0 0
    %2871 = vmatprep.subr.bf16.mxu0 0
    %2872 = vmatpush1.bf16.msra.mxu0 0
    %2873 = vmatprep.subr.bf16.mxu0 0
    %2874 = vmatpush1.bf16.msra.mxu0 0
    %2875 = vmatprep.subr.bf16.mxu0 0
    %2876 = vmatpush1.bf16.msra.mxu0 0
    %2877 = vmatprep.subr.bf16.mxu0 0
    %2878 = vmatpush1.bf16.msra.mxu0 0
    %2879 = vmatprep.mubr.bf16.mxu0 0
    %2880 = vmatmul.mubr.bf16.gmra.mrb[0].mxu0 %v2842
    %v2881 = vpop.f32.mrb[0].mxu0
    %v2882 = vadd.f32 0.0, %v2881
    %v2883 = vpop.f32.mrb[0].mxu0
    %v2884 = vpop.f32.mrb[0].mxu0
    %v2885 = vadd.f32 0.0, %v2884
    %v2886 = vpop.f32.mrb[0].mxu0
    %2887 = vdwg.mxu0
    %v2888 = vadd.f32 %v2790, %v2882
    %v2889 = vadd.f32 %v2791, %v2885
    %v2890 = vpack.c.bf16 %v2686, %v2685
    %2891 = vrot.lane.b32.xlu0 %v2389, 48
    %v2892 = vpop.permute.xlu0 %2891
    %v2895 = vsel %vm360, %v2890, 0
    %2897 = vmatprep.subr.bf16.mxu0 0
    %2898 = vmatpush1.bf16.msra.mxu0 %v2892
    %2899 = vmatprep.subr.bf16.mxu0 0
    %2900 = vmatpush1.bf16.msra.mxu0 0
    %2901 = vmatprep.subr.bf16.mxu0 0
    %2902 = vmatpush1.bf16.msra.mxu0 0
    %2903 = vmatprep.subr.bf16.mxu0 0
    %2904 = vmatpush1.bf16.msra.mxu0 0
    %2905 = vmatprep.subr.bf16.mxu0 0
    %2906 = vmatpush1.bf16.msra.mxu0 0
    %2907 = vmatprep.subr.bf16.mxu0 0
    %2908 = vmatpush1.bf16.msra.mxu0 0
    %2909 = vmatprep.subr.bf16.mxu0 0
    %2910 = vmatpush1.bf16.msra.mxu0 0
    %2911 = vmatprep.subr.bf16.mxu0 0
    %2912 = vmatpush1.bf16.msra.mxu0 0
    %2913 = vmatprep.subr.bf16.mxu0 0
    %2914 = vmatpush1.bf16.msra.mxu0 0
    %2915 = vmatprep.subr.bf16.mxu0 0
    %2916 = vmatpush1.bf16.msra.mxu0 0
    %2917 = vmatprep.subr.bf16.mxu0 0
    %2918 = vmatpush1.bf16.msra.mxu0 0
    %2919 = vmatprep.subr.bf16.mxu0 0
    %2920 = vmatpush1.bf16.msra.mxu0 0
    %2921 = vmatprep.subr.bf16.mxu0 0
    %2922 = vmatpush1.bf16.msra.mxu0 0
    %2923 = vmatprep.subr.bf16.mxu0 0
    %2924 = vmatpush1.bf16.msra.mxu0 0
    %2925 = vmatprep.subr.bf16.mxu0 0
    %2926 = vmatpush1.bf16.msra.mxu0 0
    %2927 = vmatprep.subr.bf16.mxu0 0
    %2928 = vmatpush1.bf16.msra.mxu0 0
    %2929 = vmatprep.mubr.bf16.mxu0 0
    %2930 = vmatmul.mubr.bf16.gmra.mrb[0].mxu0 %v2895
    %v2931 = vpop.f32.mrb[0].mxu0
    %v2932 = vadd.f32 0.0, %v2931
    %v2933 = vpop.f32.mrb[0].mxu0
    %v2934 = vpop.f32.mrb[0].mxu0
    %v2935 = vadd.f32 0.0, %v2934
    %v2936 = vpop.f32.mrb[0].mxu0
    %2937 = vdwg.mxu0
    %v2938 = vpack.c.bf16 %v2935, %v2932
    %v2940 = vsel %vm151, %v2938, 0
    %v2943 = vsel %vm506, %v2301, 0
    %2945 = vmatprep.subr.bf16.mxu0 0
    %2946 = vmatpush1.bf16.msra.mxu0 %v2943
    %2947 = vmatprep.subr.bf16.mxu0 0
    %2948 = vmatpush1.bf16.msra.mxu0 0
    %2949 = vmatprep.subr.bf16.mxu0 0
    %2950 = vmatpush1.bf16.msra.mxu0 0
    %2951 = vmatprep.subr.bf16.mxu0 0
    %2952 = vmatpush1.bf16.msra.mxu0 0
    %2953 = vmatprep.subr.bf16.mxu0 0
    %2954 = vmatpush1.bf16.msra.mxu0 0
    %2955 = vmatprep.subr.bf16.mxu0 0
    %2956 = vmatpush1.bf16.msra.mxu0 0
    %2957 = vmatprep.subr.bf16.mxu0 0
    %2958 = vmatpush1.bf16.msra.mxu0 0
    %2959 = vmatprep.subr.bf16.mxu0 0
    %2960 = vmatpush1.bf16.msra.mxu0 0
    %2961 = vmatprep.subr.bf16.mxu0 0
    %2962 = vmatpush1.bf16.msra.mxu0 0
    %2963 = vmatprep.subr.bf16.mxu0 0
    %2964 = vmatpush1.bf16.msra.mxu0 0
    %2965 = vmatprep.subr.bf16.mxu0 0
    %2966 = vmatpush1.bf16.msra.mxu0 0
    %2967 = vmatprep.subr.bf16.mxu0 0
    %2968 = vmatpush1.bf16.msra.mxu0 0
    %2969 = vmatprep.subr.bf16.mxu0 0
    %2970 = vmatpush1.bf16.msra.mxu0 0
    %2971 = vmatprep.subr.bf16.mxu0 0
    %2972 = vmatpush1.bf16.msra.mxu0 0
    %2973 = vmatprep.subr.bf16.mxu0 0
    %2974 = vmatpush1.bf16.msra.mxu0 0
    %2975 = vmatprep.subr.bf16.mxu0 0
    %2976 = vmatpush1.bf16.msra.mxu0 0
    %2977 = vmatprep.mubr.bf16.mxu0 0
    %2978 = vmatmul.mubr.bf16.gmra.mrb[0].mxu0 %v2940
    %v2979 = vpop.f32.mrb[0].mxu0
    %v2980 = vadd.f32 0.0, %v2979
    %v2981 = vpop.f32.mrb[0].mxu0
    %v2982 = vpop.f32.mrb[0].mxu0
    %v2983 = vadd.f32 0.0, %v2982
    %v2984 = vpop.f32.mrb[0].mxu0
    %2985 = vdwg.mxu0
    %v2986 = vadd.f32 %v2888, %v2980
    %v2987 = vadd.f32 %v2889, %v2983
    %v2988 = vpack.c.bf16 %v2688, %v2687
    %2989 = vrot.lane.b32.xlu0 %v2389, 40
    %v2990 = vpop.permute.xlu0 %2989
    %v2993 = vsel %vm360, %v2988, 0
    %2995 = vmatprep.subr.bf16.mxu0 0
    %2996 = vmatpush1.bf16.msra.mxu0 %v2990
    %2997 = vmatprep.subr.bf16.mxu0 0
    %2998 = vmatpush1.bf16.msra.mxu0 0
    %2999 = vmatprep.subr.bf16.mxu0 0
    %3000 = vmatpush1.bf16.msra.mxu0 0
    %3001 = vmatprep.subr.bf16.mxu0 0
    %3002 = vmatpush1.bf16.msra.mxu0 0
    %3003 = vmatprep.subr.bf16.mxu0 0
    %3004 = vmatpush1.bf16.msra.mxu0 0
    %3005 = vmatprep.subr.bf16.mxu0 0
    %3006 = vmatpush1.bf16.msra.mxu0 0
    %3007 = vmatprep.subr.bf16.mxu0 0
    %3008 = vmatpush1.bf16.msra.mxu0 0
    %3009 = vmatprep.subr.bf16.mxu0 0
    %3010 = vmatpush1.bf16.msra.mxu0 0
    %3011 = vmatprep.subr.bf16.mxu0 0
    %3012 = vmatpush1.bf16.msra.mxu0 0
    %3013 = vmatprep.subr.bf16.mxu0 0
    %3014 = vmatpush1.bf16.msra.mxu0 0
    %3015 = vmatprep.subr.bf16.mxu0 0
    %3016 = vmatpush1.bf16.msra.mxu0 0
    %3017 = vmatprep.subr.bf16.mxu0 0
    %3018 = vmatpush1.bf16.msra.mxu0 0
    %3019 = vmatprep.subr.bf16.mxu0 0
    %3020 = vmatpush1.bf16.msra.mxu0 0
    %3021 = vmatprep.subr.bf16.mxu0 0
    %3022 = vmatpush1.bf16.msra.mxu0 0
    %3023 = vmatprep.subr.bf16.mxu0 0
    %3024 = vmatpush1.bf16.msra.mxu0 0
    %3025 = vmatprep.subr.bf16.mxu0 0
    %3026 = vmatpush1.bf16.msra.mxu0 0
    %3027 = vmatprep.mubr.bf16.mxu0 0
    %3028 = vmatmul.mubr.bf16.gmra.mrb[0].mxu0 %v2993
    %v3029 = vpop.f32.mrb[0].mxu0
    %v3030 = vadd.f32 0.0, %v3029
    %v3031 = vpop.f32.mrb[0].mxu0
    %v3032 = vpop.f32.mrb[0].mxu0
    %v3033 = vadd.f32 0.0, %v3032
    %v3034 = vpop.f32.mrb[0].mxu0
    %3035 = vdwg.mxu0
    %v3036 = vpack.c.bf16 %v3033, %v3030
    %v3038 = vsel %vm151, %v3036, 0
    %v3041 = vsel %vm506, %v2306, 0
    %3043 = vmatprep.subr.bf16.mxu0 0
    %3044 = vmatpush1.bf16.msra.mxu0 %v3041
    %3045 = vmatprep.subr.bf16.mxu0 0
    %3046 = vmatpush1.bf16.msra.mxu0 0
    %3047 = vmatprep.subr.bf16.mxu0 0
    %3048 = vmatpush1.bf16.msra.mxu0 0
    %3049 = vmatprep.subr.bf16.mxu0 0
    %3050 = vmatpush1.bf16.msra.mxu0 0
    %3051 = vmatprep.subr.bf16.mxu0 0
    %3052 = vmatpush1.bf16.msra.mxu0 0
    %3053 = vmatprep.subr.bf16.mxu0 0
    %3054 = vmatpush1.bf16.msra.mxu0 0
    %3055 = vmatprep.subr.bf16.mxu0 0
    %3056 = vmatpush1.bf16.msra.mxu0 0
    %3057 = vmatprep.subr.bf16.mxu0 0
    %3058 = vmatpush1.bf16.msra.mxu0 0
    %3059 = vmatprep.subr.bf16.mxu0 0
    %3060 = vmatpush1.bf16.msra.mxu0 0
    %3061 = vmatprep.subr.bf16.mxu0 0
    %3062 = vmatpush1.bf16.msra.mxu0 0
    %3063 = vmatprep.subr.bf16.mxu0 0
    %3064 = vmatpush1.bf16.msra.mxu0 0
    %3065 = vmatprep.subr.bf16.mxu0 0
    %3066 = vmatpush1.bf16.msra.mxu0 0
    %3067 = vmatprep.subr.bf16.mxu0 0
    %3068 = vmatpush1.bf16.msra.mxu0 0
    %3069 = vmatprep.subr.bf16.mxu0 0
    %3070 = vmatpush1.bf16.msra.mxu0 0
    %3071 = vmatprep.subr.bf16.mxu0 0
    %3072 = vmatpush1.bf16.msra.mxu0 0
    %3073 = vmatprep.subr.bf16.mxu0 0
    %3074 = vmatpush1.bf16.msra.mxu0 0
    %3075 = vmatprep.mubr.bf16.mxu0 0
    %3076 = vmatmul.mubr.bf16.gmra.mrb[0].mxu0 %v3038
    %v3077 = vpop.f32.mrb[0].mxu0
    %v3078 = vadd.f32 0.0, %v3077
    %v3079 = vpop.f32.mrb[0].mxu0
    %v3080 = vpop.f32.mrb[0].mxu0
    %v3081 = vadd.f32 0.0, %v3080
    %v3082 = vpop.f32.mrb[0].mxu0
    %3083 = vdwg.mxu0
    %v3084 = vadd.f32 %v2986, %v3078
    %v3085 = vadd.f32 %v2987, %v3081
    %v3086 = vpack.c.bf16 %v3085, %v3084
    %v3087 = vlaneseq
    %v3088 = vshrl.u32 %v3087, 7
    %v3089 = vsub.s32 5, %v3088
    %v3090 = vrot.slane %v2326, %v3089
    %v3095 = vunpack.c.l.b16 %v2292
    %v3096 = vunpack.c.l.b16 %v2297
    %v3097 = vunpack.c.l.b16 %v2302
    %v3098 = vunpack.c.l.b16 %v2307
    %v3099 = vpack.c.b16 %v3096, %v3095
    %v3100 = vpack.c.b16 %v3098, %v3097
    %v3104 = vsel %vm102, %v3086, 0
    %3106 = vmatprep.subr.bf16.mxu0 0
    %3107 = vmatpush1.bf16.msra.mxu0 %v3099
    %3108 = vmatprep.subr.bf16.mxu0 0
    %3109 = vmatpush1.bf16.msra.mxu0 %v3100
    %3110 = vmatprep.subr.bf16.mxu0 0
    %3111 = vmatpush1.bf16.msra.mxu0 0
    %3112 = vmatprep.subr.bf16.mxu0 0
    %3113 = vmatpush1.bf16.msra.mxu0 0
    %3114 = vmatprep.subr.bf16.mxu0 0
    %3115 = vmatpush1.bf16.msra.mxu0 0
    %3116 = vmatprep.subr.bf16.mxu0 0
    %3117 = vmatpush1.bf16.msra.mxu0 0
    %3118 = vmatprep.subr.bf16.mxu0 0
    %3119 = vmatpush1.bf16.msra.mxu0 0
    %3120 = vmatprep.subr.bf16.mxu0 0
    %3121 = vmatpush1.bf16.msra.mxu0 0
    %3122 = vmatprep.subr.bf16.mxu0 0
    %3123 = vmatpush1.bf16.msra.mxu0 0
    %3124 = vmatprep.subr.bf16.mxu0 0
    %3125 = vmatpush1.bf16.msra.mxu0 0
    %3126 = vmatprep.subr.bf16.mxu0 0
    %3127 = vmatpush1.bf16.msra.mxu0 0
    %3128 = vmatprep.subr.bf16.mxu0 0
    %3129 = vmatpush1.bf16.msra.mxu0 0
    %3130 = vmatprep.subr.bf16.mxu0 0
    %3131 = vmatpush1.bf16.msra.mxu0 0
    %3132 = vmatprep.subr.bf16.mxu0 0
    %3133 = vmatpush1.bf16.msra.mxu0 0
    %3134 = vmatprep.subr.bf16.mxu0 0
    %3135 = vmatpush1.bf16.msra.mxu0 0
    %3136 = vmatprep.subr.bf16.mxu0 0
    %3137 = vmatpush1.bf16.msra.mxu0 0
    %3138 = vmatprep.mubr.bf16.mxu0 0
    %3139 = vmatmul.mubr.bf16.gmra.mrb[0].mxu0 %v3104
    %v3140 = vpop.f32.mrb[0].mxu0
    %v3141 = vadd.f32 %v3090, %v3140
    %v3142 = vpop.f32.mrb[0].mxu0
    %v3143 = vpop.f32.mrb[0].mxu0
    %v3144 = vadd.f32 %v3090, %v3143
    %v3145 = vpop.f32.mrb[0].mxu0
    %3146 = vdwg.mxu0
    %v3147 = vmax.f32 %v3141, 0.0
    %v3148 = vmax.f32 %v3144, 0.0
    %v3149 = vpack.c.bf16 %v3148, %v3147
    %v3150 = vlaneseq
    %v3151 = vshrl.u32 %v3150, 7
    %v3152 = vsub.s32 6, %v3151
    %v3153 = vrot.slane %v2326, %v3152
    %v3156 = vunpack.c.l.b16 %v2318
    %v3157 = vunpack.c.l.b16 %v2319
    %v3158 = vpack.c.b16 %v3157, %v3156
    %v3161 = vsel %vm360, %v3149, 0
    %3163 = vmatprep.subr.bf16.mxu0 0
    %3164 = vmatpush1.bf16.msra.mxu0 %v3158
    %3165 = vmatprep.subr.bf16.mxu0 0
    %3166 = vmatpush1.bf16.msra.mxu0 0
    %3167 = vmatprep.subr.bf16.mxu0 0
    %3168 = vmatpush1.bf16.msra.mxu0 0
    %3169 = vmatprep.subr.bf16.mxu0 0
    %3170 = vmatpush1.bf16.msra.mxu0 0
    %3171 = vmatprep.subr.bf16.mxu0 0
    %3172 = vmatpush1.bf16.msra.mxu0 0
    %3173 = vmatprep.subr.bf16.mxu0 0
    %3174 = vmatpush1.bf16.msra.mxu0 0
    %3175 = vmatprep.subr.bf16.mxu0 0
    %3176 = vmatpush1.bf16.msra.mxu0 0
    %3177 = vmatprep.subr.bf16.mxu0 0
    %3178 = vmatpush1.bf16.msra.mxu0 0
    %3179 = vmatprep.subr.bf16.mxu0 0
    %3180 = vmatpush1.bf16.msra.mxu0 0
    %3181 = vmatprep.subr.bf16.mxu0 0
    %3182 = vmatpush1.bf16.msra.mxu0 0
    %3183 = vmatprep.subr.bf16.mxu0 0
    %3184 = vmatpush1.bf16.msra.mxu0 0
    %3185 = vmatprep.subr.bf16.mxu0 0
    %3186 = vmatpush1.bf16.msra.mxu0 0
    %3187 = vmatprep.subr.bf16.mxu0 0
    %3188 = vmatpush1.bf16.msra.mxu0 0
    %3189 = vmatprep.subr.bf16.mxu0 0
    %3190 = vmatpush1.bf16.msra.mxu0 0
    %3191 = vmatprep.subr.bf16.mxu0 0
    %3192 = vmatpush1.bf16.msra.mxu0 0
    %3193 = vmatprep.subr.bf16.mxu0 0
    %3194 = vmatpush1.bf16.msra.mxu0 0
    %3195 = vmatprep.mubr.bf16.mxu0 0
    %3196 = vmatmul.mubr.bf16.gmra.mrb[0].mxu0 %v3161
    %v3197 = vpop.f32.mrb[0].mxu0
    %v3198 = vadd.f32 %v3153, %v3197
    %v3199 = vpop.f32.mrb[0].mxu0
    %v3200 = vpop.f32.mrb[0].mxu0
    %v3201 = vadd.f32 %v3153, %v3200
    %v3202 = vpop.f32.mrb[0].mxu0
    %3203 = vdwg.mxu0
    %v3204 = vadd.f32 %v3198, %v3084
    %v3205 = vadd.f32 %v3201, %v3085
    %v3206 = vadd.f32 %v2286, %v3204
    %v3207 = vadd.f32 %v2287, %v3205
    %v3208 = vsel %vm102, %v3206, 0.0
    %3209 = vadd.xlane.f32.xlu0 %v3208
    %v3210 = vpop.xlane.xlu0 %3209
    %v3211 = vsel %vm102, %v3207, 0.0
    %3212 = vadd.xlane.f32.xlu0 %v3211
    %v3213 = vpop.xlane.xlu0 %3212
    %v3214 = vmul.f32 %v3210, %v975
    %v3215 = vmul.f32 %v3213, %v975
    %v3216 = vsub.f32 %v3206, %v3214
    %v3217 = vsub.f32 %v3207, %v3215
    %v3218 = vmul.f32 %v3216, %v3216
    %v3219 = vmul.f32 %v3217, %v3217
    %v3220 = vsel %vm102, %v3218, 0.0
    %3221 = vadd.xlane.f32.xlu0 %v3220
    %v3222 = vpop.xlane.xlu0 %3221
    %v3223 = vsel %vm102, %v3219, 0.0
    %3224 = vadd.xlane.f32.xlu0 %v3223
    %v3225 = vpop.xlane.xlu0 %3224
    %v3226 = vmul.f32 %v3222, %v975
    %v3227 = vmul.f32 %v3225, %v975
    %v3228 = vadd.f32 %v3226, 1e-05
    %v3229 = vadd.f32 %v3227, 1e-05
    %v3230 = vrsqrt.pop %v3228
    %v3231 = vrsqrt.pop %v3229
    %v3232 = vmul.f32 %v3216, %v3230
    %v3233 = vmul.f32 %v3217, %v3231
    %v3234 = vlaneseq
    %v3235 = vshrl.u32 %v3234, 7
    %v3236 = vsub.s32 7, %v3235
    %v3237 = vrot.slane %v2325, %v3236
    %v3238 = vmul.f32 %v3232, %v3237
    %v3239 = vmul.f32 %v3233, %v3237
    %v3240 = vlaneseq
    %v3241 = vshrl.u32 %v3240, 7
    %v3242 = vsub.s32 0, %v3241
    %v3243 = vrot.slane %v2326, %v3242
    %v3244 = vadd.f32 %v3238, %v3243
    %v3245 = vadd.f32 %v3239, %v3243
    %v3246 = vpack.c.bf16 %v3245, %v3244
    %v3247 = vlaneseq
    %v3248 = vshrl.u32 %v3247, 7
    %v3249 = vsub.s32 1, %v3248
    %v3250 = vrot.slane %v2325, %v3249
    %v3251 = vunpack.c.h.b16 %v2289
    %v3252 = vunpack.c.h.b16 %v2294
    %v3253 = vunpack.c.h.b16 %v2299
    %v3254 = vunpack.c.h.b16 %v2304
    %v3255 = vpack.c.b16 %v3252, %v3251
    %v3256 = vpack.c.b16 %v3254, %v3253
    %v3260 = vsel %vm102, %v3246, 0
    %3262 = vmatprep.subr.bf16.mxu0 0
    %3263 = vmatpush1.bf16.msra.mxu0 %v3255
    %3264 = vmatprep.subr.bf16.mxu0 0
    %3265 = vmatpush1.bf16.msra.mxu0 %v3256
    %3266 = vmatprep.subr.bf16.mxu0 0
    %3267 = vmatpush1.bf16.msra.mxu0 0
    %3268 = vmatprep.subr.bf16.mxu0 0
    %3269 = vmatpush1.bf16.msra.mxu0 0
    %3270 = vmatprep.subr.bf16.mxu0 0
    %3271 = vmatpush1.bf16.msra.mxu0 0
    %3272 = vmatprep.subr.bf16.mxu0 0
    %3273 = vmatpush1.bf16.msra.mxu0 0
    %3274 = vmatprep.subr.bf16.mxu0 0
    %3275 = vmatpush1.bf16.msra.mxu0 0
    %3276 = vmatprep.subr.bf16.mxu0 0
    %3277 = vmatpush1.bf16.msra.mxu0 0
    %3278 = vmatprep.subr.bf16.mxu0 0
    %3279 = vmatpush1.bf16.msra.mxu0 0
    %3280 = vmatprep.subr.bf16.mxu0 0
    %3281 = vmatpush1.bf16.msra.mxu0 0
    %3282 = vmatprep.subr.bf16.mxu0 0
    %3283 = vmatpush1.bf16.msra.mxu0 0
    %3284 = vmatprep.subr.bf16.mxu0 0
    %3285 = vmatpush1.bf16.msra.mxu0 0
    %3286 = vmatprep.subr.bf16.mxu0 0
    %3287 = vmatpush1.bf16.msra.mxu0 0
    %3288 = vmatprep.subr.bf16.mxu0 0
    %3289 = vmatpush1.bf16.msra.mxu0 0
    %3290 = vmatprep.subr.bf16.mxu0 0
    %3291 = vmatpush1.bf16.msra.mxu0 0
    %3292 = vmatprep.subr.bf16.mxu0 0
    %3293 = vmatpush1.bf16.msra.mxu0 0
    %3294 = vmatprep.mubr.bf16.mxu0 0
    %3295 = vmatmul.mubr.bf16.gmra.mrb[0].mxu0 %v3260
    %v3296 = vpop.f32.mrb[0].mxu0
    %v3297 = vadd.f32 %v3250, %v3296
    %v3298 = vpop.f32.mrb[0].mxu0
    %v3299 = vpop.f32.mrb[0].mxu0
    %v3300 = vadd.f32 %v3250, %v3299
    %v3301 = vpop.f32.mrb[0].mxu0
    %3302 = vdwg.mxu0
    %v3303 = vlaneseq
    %v3304 = vshrl.u32 %v3303, 7
    %v3305 = vsub.s32 2, %v3304
    %v3306 = vrot.slane %v2325, %v3305
    %v3311 = vunpack.c.l.b16 %v2290
    %v3312 = vunpack.c.l.b16 %v2295
    %v3313 = vunpack.c.l.b16 %v2300
    %v3314 = vunpack.c.l.b16 %v2305
    %v3315 = vpack.c.b16 %v3312, %v3311
    %v3316 = vpack.c.b16 %v3314, %v3313
    %3319 = vmatprep.subr.bf16.mxu0 0
    %3320 = vmatpush1.bf16.msra.mxu0 %v3315
    %3321 = vmatprep.subr.bf16.mxu0 0
    %3322 = vmatpush1.bf16.msra.mxu0 %v3316
    %3323 = vmatprep.subr.bf16.mxu0 0
    %3324 = vmatpush1.bf16.msra.mxu0 0
    %3325 = vmatprep.subr.bf16.mxu0 0
    %3326 = vmatpush1.bf16.msra.mxu0 0
    %3327 = vmatprep.subr.bf16.mxu0 0
    %3328 = vmatpush1.bf16.msra.mxu0 0
    %3329 = vmatprep.subr.bf16.mxu0 0
    %3330 = vmatpush1.bf16.msra.mxu0 0
    %3331 = vmatprep.subr.bf16.mxu0 0
    %3332 = vmatpush1.bf16.msra.mxu0 0
    %3333 = vmatprep.subr.bf16.mxu0 0
    %3334 = vmatpush1.bf16.msra.mxu0 0
    %3335 = vmatprep.subr.bf16.mxu0 0
    %3336 = vmatpush1.bf16.msra.mxu0 0
    %3337 = vmatprep.subr.bf16.mxu0 0
    %3338 = vmatpush1.bf16.msra.mxu0 0
    %3339 = vmatprep.subr.bf16.mxu0 0
    %3340 = vmatpush1.bf16.msra.mxu0 0
    %3341 = vmatprep.subr.bf16.mxu0 0
    %3342 = vmatpush1.bf16.msra.mxu0 0
    %3343 = vmatprep.subr.bf16.mxu0 0
    %3344 = vmatpush1.bf16.msra.mxu0 0
    %3345 = vmatprep.subr.bf16.mxu0 0
    %3346 = vmatpush1.bf16.msra.mxu0 0
    %3347 = vmatprep.subr.bf16.mxu0 0
    %3348 = vmatpush1.bf16.msra.mxu0 0
    %3349 = vmatprep.subr.bf16.mxu0 0
    %3350 = vmatpush1.bf16.msra.mxu0 0
    %3351 = vmatprep.mubr.bf16.mxu0 0
    %3352 = vmatmul.mubr.bf16.gmra.mrb[0].mxu0 %v1087
    %v3353 = vpop.f32.mrb[0].mxu0
    %v3354 = vadd.f32 %v3306, %v3353
    %v3355 = vpop.f32.mrb[0].mxu0
    %v3356 = vpop.f32.mrb[0].mxu0
    %v3357 = vadd.f32 %v3306, %v3356
    %v3358 = vpop.f32.mrb[0].mxu0
    %3359 = vdwg.mxu0
    %v3360 = vpack.c.bf16 %v3300, %v3297
    %v3361 = vpack.c.bf16 %v3357, %v3354
    %v3363 = vsel %vm151, %v3360, 0
    %v3366 = vsel %vm151, %v3361, 0
    %3368 = vmatprep.subr.bf16.mxu0 0
    %3369 = vmatpush1.bf16.xpose.msra.mxu0 %v3366
    %3370 = vmatprep.subr.bf16.mxu0 0
    %3371 = vmatpush1.bf16.xpose.msra.mxu0 0
    %3372 = vmatprep.subr.bf16.mxu0 0
    %3373 = vmatpush1.bf16.xpose.msra.mxu0 0
    %3374 = vmatprep.subr.bf16.mxu0 0
    %3375 = vmatpush1.bf16.xpose.msra.mxu0 0
    %3376 = vmatprep.subr.bf16.mxu0 0
    %3377 = vmatpush1.bf16.xpose.msra.mxu0 0
    %3378 = vmatprep.subr.bf16.mxu0 0
    %3379 = vmatpush1.bf16.xpose.msra.mxu0 0
    %3380 = vmatprep.subr.bf16.mxu0 0
    %3381 = vmatpush1.bf16.xpose.msra.mxu0 0
    %3382 = vmatprep.subr.bf16.mxu0 0
    %3383 = vmatpush1.bf16.xpose.msra.mxu0 0
    %3384 = vmatprep.subr.bf16.mxu0 0
    %3385 = vmatpush1.bf16.xpose.msra.mxu0 0
    %3386 = vmatprep.subr.bf16.mxu0 0
    %3387 = vmatpush1.bf16.xpose.msra.mxu0 0
    %3388 = vmatprep.subr.bf16.mxu0 0
    %3389 = vmatpush1.bf16.xpose.msra.mxu0 0
    %3390 = vmatprep.subr.bf16.mxu0 0
    %3391 = vmatpush1.bf16.xpose.msra.mxu0 0
    %3392 = vmatprep.subr.bf16.mxu0 0
    %3393 = vmatpush1.bf16.xpose.msra.mxu0 0
    %3394 = vmatprep.subr.bf16.mxu0 0
    %3395 = vmatpush1.bf16.xpose.msra.mxu0 0
    %3396 = vmatprep.subr.bf16.mxu0 0
    %3397 = vmatpush1.bf16.xpose.msra.mxu0 0
    %3398 = vmatprep.subr.bf16.mxu0 0
    %3399 = vmatpush1.bf16.xpose.msra.mxu0 0
    %3400 = vmatprep.mubr.bf16.mxu0 0
    %3401 = vmatmul.mubr.bf16.gmra.mrb[0].mxu0 %v3363
    %v3402 = vpop.f32.mrb[0].mxu0
    %v3403 = vadd.f32 0.0, %v3402
    %v3404 = vpop.f32.mrb[0].mxu0
    %v3405 = vpop.f32.mrb[0].mxu0
    %v3406 = vadd.f32 0.0, %v3405
    %v3407 = vpop.f32.mrb[0].mxu0
    %3408 = vdwg.mxu0
    %3410 = vrot.lane.b32.xlu0 %v3360, 120
    %v3411 = vpop.permute.xlu0 %3410
    %3413 = vrot.lane.b32.xlu0 %v3361, 120
    %v3414 = vpop.permute.xlu0 %3413
    %v3416 = vsel %vm151, %v3411, 0
    %v3419 = vsel %vm151, %v3414, 0
    %3421 = vmatprep.subr.bf16.mxu0 0
    %3422 = vmatpush1.bf16.xpose.msra.mxu0 %v3419
    %3423 = vmatprep.subr.bf16.mxu0 0
    %3424 = vmatpush1.bf16.xpose.msra.mxu0 0
    %3425 = vmatprep.subr.bf16.mxu0 0
    %3426 = vmatpush1.bf16.xpose.msra.mxu0 0
    %3427 = vmatprep.subr.bf16.mxu0 0
    %3428 = vmatpush1.bf16.xpose.msra.mxu0 0
    %3429 = vmatprep.subr.bf16.mxu0 0
    %3430 = vmatpush1.bf16.xpose.msra.mxu0 0
    %3431 = vmatprep.subr.bf16.mxu0 0
    %3432 = vmatpush1.bf16.xpose.msra.mxu0 0
    %3433 = vmatprep.subr.bf16.mxu0 0
    %3434 = vmatpush1.bf16.xpose.msra.mxu0 0
    %3435 = vmatprep.subr.bf16.mxu0 0
    %3436 = vmatpush1.bf16.xpose.msra.mxu0 0
    %3437 = vmatprep.subr.bf16.mxu0 0
    %3438 = vmatpush1.bf16.xpose.msra.mxu0 0
    %3439 = vmatprep.subr.bf16.mxu0 0
    %3440 = vmatpush1.bf16.xpose.msra.mxu0 0
    %3441 = vmatprep.subr.bf16.mxu0 0
    %3442 = vmatpush1.bf16.xpose.msra.mxu0 0
    %3443 = vmatprep.subr.bf16.mxu0 0
    %3444 = vmatpush1.bf16.xpose.msra.mxu0 0
    %3445 = vmatprep.subr.bf16.mxu0 0
    %3446 = vmatpush1.bf16.xpose.msra.mxu0 0
    %3447 = vmatprep.subr.bf16.mxu0 0
    %3448 = vmatpush1.bf16.xpose.msra.mxu0 0
    %3449 = vmatprep.subr.bf16.mxu0 0
    %3450 = vmatpush1.bf16.xpose.msra.mxu0 0
    %3451 = vmatprep.subr.bf16.mxu0 0
    %3452 = vmatpush1.bf16.xpose.msra.mxu0 0
    %3453 = vmatprep.mubr.bf16.mxu0 0
    %3454 = vmatmul.mubr.bf16.gmra.mrb[0].mxu0 %v3416
    %v3455 = vpop.f32.mrb[0].mxu0
    %v3456 = vadd.f32 0.0, %v3455
    %v3457 = vpop.f32.mrb[0].mxu0
    %v3458 = vpop.f32.mrb[0].mxu0
    %v3459 = vadd.f32 0.0, %v3458
    %v3460 = vpop.f32.mrb[0].mxu0
    %3461 = vdwg.mxu0
    %3462 = vrot.lane.b32.xlu0 %v3360, 112
    %v3463 = vpop.permute.xlu0 %3462
    %3464 = vrot.lane.b32.xlu0 %v3361, 112
    %v3465 = vpop.permute.xlu0 %3464
    %v3467 = vsel %vm151, %v3463, 0
    %v3470 = vsel %vm151, %v3465, 0
    %3472 = vmatprep.subr.bf16.mxu0 0
    %3473 = vmatpush1.bf16.xpose.msra.mxu0 %v3470
    %3474 = vmatprep.subr.bf16.mxu0 0
    %3475 = vmatpush1.bf16.xpose.msra.mxu0 0
    %3476 = vmatprep.subr.bf16.mxu0 0
    %3477 = vmatpush1.bf16.xpose.msra.mxu0 0
    %3478 = vmatprep.subr.bf16.mxu0 0
    %3479 = vmatpush1.bf16.xpose.msra.mxu0 0
    %3480 = vmatprep.subr.bf16.mxu0 0
    %3481 = vmatpush1.bf16.xpose.msra.mxu0 0
    %3482 = vmatprep.subr.bf16.mxu0 0
    %3483 = vmatpush1.bf16.xpose.msra.mxu0 0
    %3484 = vmatprep.subr.bf16.mxu0 0
    %3485 = vmatpush1.bf16.xpose.msra.mxu0 0
    %3486 = vmatprep.subr.bf16.mxu0 0
    %3487 = vmatpush1.bf16.xpose.msra.mxu0 0
    %3488 = vmatprep.subr.bf16.mxu0 0
    %3489 = vmatpush1.bf16.xpose.msra.mxu0 0
    %3490 = vmatprep.subr.bf16.mxu0 0
    %3491 = vmatpush1.bf16.xpose.msra.mxu0 0
    %3492 = vmatprep.subr.bf16.mxu0 0
    %3493 = vmatpush1.bf16.xpose.msra.mxu0 0
    %3494 = vmatprep.subr.bf16.mxu0 0
    %3495 = vmatpush1.bf16.xpose.msra.mxu0 0
    %3496 = vmatprep.subr.bf16.mxu0 0
    %3497 = vmatpush1.bf16.xpose.msra.mxu0 0
    %3498 = vmatprep.subr.bf16.mxu0 0
    %3499 = vmatpush1.bf16.xpose.msra.mxu0 0
    %3500 = vmatprep.subr.bf16.mxu0 0
    %3501 = vmatpush1.bf16.xpose.msra.mxu0 0
    %3502 = vmatprep.subr.bf16.mxu0 0
    %3503 = vmatpush1.bf16.xpose.msra.mxu0 0
    %3504 = vmatprep.mubr.bf16.mxu0 0
    %3505 = vmatmul.mubr.bf16.gmra.mrb[0].mxu0 %v3467
    %v3506 = vpop.f32.mrb[0].mxu0
    %v3507 = vadd.f32 0.0, %v3506
    %v3508 = vpop.f32.mrb[0].mxu0
    %v3509 = vpop.f32.mrb[0].mxu0
    %v3510 = vadd.f32 0.0, %v3509
    %v3511 = vpop.f32.mrb[0].mxu0
    %3512 = vdwg.mxu0
    %3513 = vrot.lane.b32.xlu0 %v3360, 104
    %v3514 = vpop.permute.xlu0 %3513
    %3515 = vrot.lane.b32.xlu0 %v3361, 104
    %v3516 = vpop.permute.xlu0 %3515
    %v3518 = vsel %vm151, %v3514, 0
    %v3521 = vsel %vm151, %v3516, 0
    %3523 = vmatprep.subr.bf16.mxu0 0
    %3524 = vmatpush1.bf16.xpose.msra.mxu0 %v3521
    %3525 = vmatprep.subr.bf16.mxu0 0
    %3526 = vmatpush1.bf16.xpose.msra.mxu0 0
    %3527 = vmatprep.subr.bf16.mxu0 0
    %3528 = vmatpush1.bf16.xpose.msra.mxu0 0
    %3529 = vmatprep.subr.bf16.mxu0 0
    %3530 = vmatpush1.bf16.xpose.msra.mxu0 0
    %3531 = vmatprep.subr.bf16.mxu0 0
    %3532 = vmatpush1.bf16.xpose.msra.mxu0 0
    %3533 = vmatprep.subr.bf16.mxu0 0
    %3534 = vmatpush1.bf16.xpose.msra.mxu0 0
    %3535 = vmatprep.subr.bf16.mxu0 0
    %3536 = vmatpush1.bf16.xpose.msra.mxu0 0
    %3537 = vmatprep.subr.bf16.mxu0 0
    %3538 = vmatpush1.bf16.xpose.msra.mxu0 0
    %3539 = vmatprep.subr.bf16.mxu0 0
    %3540 = vmatpush1.bf16.xpose.msra.mxu0 0
    %3541 = vmatprep.subr.bf16.mxu0 0
    %3542 = vmatpush1.bf16.xpose.msra.mxu0 0
    %3543 = vmatprep.subr.bf16.mxu0 0
    %3544 = vmatpush1.bf16.xpose.msra.mxu0 0
    %3545 = vmatprep.subr.bf16.mxu0 0
    %3546 = vmatpush1.bf16.xpose.msra.mxu0 0
    %3547 = vmatprep.subr.bf16.mxu0 0
    %3548 = vmatpush1.bf16.xpose.msra.mxu0 0
    %3549 = vmatprep.subr.bf16.mxu0 0
    %3550 = vmatpush1.bf16.xpose.msra.mxu0 0
    %3551 = vmatprep.subr.bf16.mxu0 0
    %3552 = vmatpush1.bf16.xpose.msra.mxu0 0
    %3553 = vmatprep.subr.bf16.mxu0 0
    %3554 = vmatpush1.bf16.xpose.msra.mxu0 0
    %3555 = vmatprep.mubr.bf16.mxu0 0
    %3556 = vmatmul.mubr.bf16.gmra.mrb[0].mxu0 %v3518
    %v3557 = vpop.f32.mrb[0].mxu0
    %v3558 = vadd.f32 0.0, %v3557
    %v3559 = vpop.f32.mrb[0].mxu0
    %v3560 = vpop.f32.mrb[0].mxu0
    %v3561 = vadd.f32 0.0, %v3560
    %v3562 = vpop.f32.mrb[0].mxu0
    %3563 = vdwg.mxu0
    %v3564 = vadd.f32 %v3403, %v40
    %v3565 = vadd.f32 %v3406, %v41
    %v3566 = vadd.f32 %v3456, %v42
    %v3567 = vadd.f32 %v3459, %v43
    %v3568 = vadd.f32 %v3507, %v44
    %v3569 = vadd.f32 %v3510, %v45
    %v3570 = vadd.f32 %v3558, %v46
    %v3571 = vadd.f32 %v3561, %v47
    %v3572 = vsel %vm360, %v3564, -inf
    %3573 = vmax.xlane.f32.xlu0 %v3572
    %v3574 = vpop.xlane.xlu0 %3573
    %v3575 = vsel %vm360, %v3565, -inf
    %3576 = vmax.xlane.f32.xlu0 %v3575
    %v3577 = vpop.xlane.xlu0 %3576
    %v3578 = vsel %vm360, %v3566, -inf
    %3579 = vmax.xlane.f32.xlu0 %v3578
    %v3580 = vpop.xlane.xlu0 %3579
    %v3581 = vsel %vm360, %v3567, -inf
    %3582 = vmax.xlane.f32.xlu0 %v3581
    %v3583 = vpop.xlane.xlu0 %3582
    %v3584 = vsel %vm360, %v3568, -inf
    %3585 = vmax.xlane.f32.xlu0 %v3584
    %v3586 = vpop.xlane.xlu0 %3585
    %v3587 = vsel %vm360, %v3569, -inf
    %3588 = vmax.xlane.f32.xlu0 %v3587
    %v3589 = vpop.xlane.xlu0 %3588
    %v3590 = vsel %vm360, %v3570, -inf
    %3591 = vmax.xlane.f32.xlu0 %v3590
    %v3592 = vpop.xlane.xlu0 %3591
    %v3593 = vsel %vm360, %v3571, -inf
    %3594 = vmax.xlane.f32.xlu0 %v3593
    %v3595 = vpop.xlane.xlu0 %3594
    %v3596 = vsub.f32 %v3564, %v3574
    %v3597 = vsub.f32 %v3565, %v3577
    %v3598 = vsub.f32 %v3566, %v3580
    %v3599 = vsub.f32 %v3567, %v3583
    %v3600 = vsub.f32 %v3568, %v3586
    %v3601 = vsub.f32 %v3569, %v3589
    %v3602 = vsub.f32 %v3570, %v3592
    %v3603 = vsub.f32 %v3571, %v3595
    %v3604 = vmul.f32 %v3596, 1.442695
    %v3605 = vpow.pop %v3604
    %v3606 = vmul.f32 %v3597, 1.442695
    %v3607 = vpow.pop %v3606
    %v3608 = vmul.f32 %v3598, 1.442695
    %v3609 = vpow.pop %v3608
    %v3610 = vmul.f32 %v3599, 1.442695
    %v3611 = vpow.pop %v3610
    %v3612 = vmul.f32 %v3600, 1.442695
    %v3613 = vpow.pop %v3612
    %v3614 = vmul.f32 %v3601, 1.442695
    %v3615 = vpow.pop %v3614
    %v3616 = vmul.f32 %v3602, 1.442695
    %v3617 = vpow.pop %v3616
    %v3618 = vmul.f32 %v3603, 1.442695
    %v3619 = vpow.pop %v3618
    %v3620 = vsel %vm360, %v3605, 0.0
    %3621 = vadd.xlane.f32.xlu0 %v3620
    %v3622 = vpop.xlane.xlu0 %3621
    %v3623 = vsel %vm360, %v3607, 0.0
    %3624 = vadd.xlane.f32.xlu0 %v3623
    %v3625 = vpop.xlane.xlu0 %3624
    %v3626 = vsel %vm360, %v3609, 0.0
    %3627 = vadd.xlane.f32.xlu0 %v3626
    %v3628 = vpop.xlane.xlu0 %3627
    %v3629 = vsel %vm360, %v3611, 0.0
    %3630 = vadd.xlane.f32.xlu0 %v3629
    %v3631 = vpop.xlane.xlu0 %3630
    %v3632 = vsel %vm360, %v3613, 0.0
    %3633 = vadd.xlane.f32.xlu0 %v3632
    %v3634 = vpop.xlane.xlu0 %3633
    %v3635 = vsel %vm360, %v3615, 0.0
    %3636 = vadd.xlane.f32.xlu0 %v3635
    %v3637 = vpop.xlane.xlu0 %3636
    %v3638 = vsel %vm360, %v3617, 0.0
    %3639 = vadd.xlane.f32.xlu0 %v3638
    %v3640 = vpop.xlane.xlu0 %3639
    %v3641 = vsel %vm360, %v3619, 0.0
    %3642 = vadd.xlane.f32.xlu0 %v3641
    %v3643 = vpop.xlane.xlu0 %3642
    %v3644 = vrcp.pop %v3622
    %v3645 = vrcp.pop %v3625
    %v3646 = vrcp.pop %v3628
    %v3647 = vrcp.pop %v3631
    %v3648 = vrcp.pop %v3634
    %v3649 = vrcp.pop %v3637
    %v3650 = vrcp.pop %v3640
    %v3651 = vrcp.pop %v3643
    %v3652 = vmul.f32 %v3605, %v3644
    %v3653 = vmul.f32 %v3607, %v3645
    %v3654 = vmul.f32 %v3609, %v3646
    %v3655 = vmul.f32 %v3611, %v3647
    %v3656 = vmul.f32 %v3613, %v3648
    %v3657 = vmul.f32 %v3615, %v3649
    %v3658 = vmul.f32 %v3617, %v3650
    %v3659 = vmul.f32 %v3619, %v3651
    %v3660 = vlaneseq
    %v3661 = vshrl.u32 %v3660, 7
    %v3662 = vsub.s32 5, %v3661
    %v3663 = vrot.slane %v2325, %v3662
    %v3664 = vadd.f32 %v3663, 0.0
    %v3665 = vpack.c.bf16 %v3653, %v3652
    %3666 = vrot.lane.b32.xlu0 %v3361, 96
    %v3667 = vpop.permute.xlu0 %3666
    %v3670 = vsel %vm360, %v3665, 0
    %3672 = vmatprep.subr.bf16.mxu0 0
    %3673 = vmatpush1.bf16.msra.mxu0 %v3667
    %3674 = vmatprep.subr.bf16.mxu0 0
    %3675 = vmatpush1.bf16.msra.mxu0 0
    %3676 = vmatprep.subr.bf16.mxu0 0
    %3677 = vmatpush1.bf16.msra.mxu0 0
    %3678 = vmatprep.subr.bf16.mxu0 0
    %3679 = vmatpush1.bf16.msra.mxu0 0
    %3680 = vmatprep.subr.bf16.mxu0 0
    %3681 = vmatpush1.bf16.msra.mxu0 0
    %3682 = vmatprep.subr.bf16.mxu0 0
    %3683 = vmatpush1.bf16.msra.mxu0 0
    %3684 = vmatprep.subr.bf16.mxu0 0
    %3685 = vmatpush1.bf16.msra.mxu0 0
    %3686 = vmatprep.subr.bf16.mxu0 0
    %3687 = vmatpush1.bf16.msra.mxu0 0
    %3688 = vmatprep.subr.bf16.mxu0 0
    %3689 = vmatpush1.bf16.msra.mxu0 0
    %3690 = vmatprep.subr.bf16.mxu0 0
    %3691 = vmatpush1.bf16.msra.mxu0 0
    %3692 = vmatprep.subr.bf16.mxu0 0
    %3693 = vmatpush1.bf16.msra.mxu0 0
    %3694 = vmatprep.subr.bf16.mxu0 0
    %3695 = vmatpush1.bf16.msra.mxu0 0
    %3696 = vmatprep.subr.bf16.mxu0 0
    %3697 = vmatpush1.bf16.msra.mxu0 0
    %3698 = vmatprep.subr.bf16.mxu0 0
    %3699 = vmatpush1.bf16.msra.mxu0 0
    %3700 = vmatprep.subr.bf16.mxu0 0
    %3701 = vmatpush1.bf16.msra.mxu0 0
    %3702 = vmatprep.subr.bf16.mxu0 0
    %3703 = vmatpush1.bf16.msra.mxu0 0
    %3704 = vmatprep.mubr.bf16.mxu0 0
    %3705 = vmatmul.mubr.bf16.gmra.mrb[0].mxu0 %v3670
    %v3706 = vpop.f32.mrb[0].mxu0
    %v3707 = vadd.f32 0.0, %v3706
    %v3708 = vpop.f32.mrb[0].mxu0
    %v3709 = vpop.f32.mrb[0].mxu0
    %v3710 = vadd.f32 0.0, %v3709
    %v3711 = vpop.f32.mrb[0].mxu0
    %3712 = vdwg.mxu0
    %v3713 = vpack.c.bf16 %v3710, %v3707
    %v3715 = vunpack.c.h.b16 %v2291
    %v3716 = vpack.c.b16 %v3715, %v3715
    %v3718 = vsel %vm151, %v3713, 0
    %v3721 = vsel %vm506, %v3716, 0
    %3723 = vmatprep.subr.bf16.mxu0 0
    %3724 = vmatpush1.bf16.msra.mxu0 %v3721
    %3725 = vmatprep.subr.bf16.mxu0 0
    %3726 = vmatpush1.bf16.msra.mxu0 0
    %3727 = vmatprep.subr.bf16.mxu0 0
    %3728 = vmatpush1.bf16.msra.mxu0 0
    %3729 = vmatprep.subr.bf16.mxu0 0
    %3730 = vmatpush1.bf16.msra.mxu0 0
    %3731 = vmatprep.subr.bf16.mxu0 0
    %3732 = vmatpush1.bf16.msra.mxu0 0
    %3733 = vmatprep.subr.bf16.mxu0 0
    %3734 = vmatpush1.bf16.msra.mxu0 0
    %3735 = vmatprep.subr.bf16.mxu0 0
    %3736 = vmatpush1.bf16.msra.mxu0 0
    %3737 = vmatprep.subr.bf16.mxu0 0
    %3738 = vmatpush1.bf16.msra.mxu0 0
    %3739 = vmatprep.subr.bf16.mxu0 0
    %3740 = vmatpush1.bf16.msra.mxu0 0
    %3741 = vmatprep.subr.bf16.mxu0 0
    %3742 = vmatpush1.bf16.msra.mxu0 0
    %3743 = vmatprep.subr.bf16.mxu0 0
    %3744 = vmatpush1.bf16.msra.mxu0 0
    %3745 = vmatprep.subr.bf16.mxu0 0
    %3746 = vmatpush1.bf16.msra.mxu0 0
    %3747 = vmatprep.subr.bf16.mxu0 0
    %3748 = vmatpush1.bf16.msra.mxu0 0
    %3749 = vmatprep.subr.bf16.mxu0 0
    %3750 = vmatpush1.bf16.msra.mxu0 0
    %3751 = vmatprep.subr.bf16.mxu0 0
    %3752 = vmatpush1.bf16.msra.mxu0 0
    %3753 = vmatprep.subr.bf16.mxu0 0
    %3754 = vmatpush1.bf16.msra.mxu0 0
    %3755 = vmatprep.mubr.bf16.mxu0 0
    %3756 = vmatmul.mubr.bf16.gmra.mrb[0].mxu0 %v3718
    %v3757 = vpop.f32.mrb[0].mxu0
    %v3758 = vadd.f32 0.0, %v3757
    %v3759 = vpop.f32.mrb[0].mxu0
    %v3760 = vpop.f32.mrb[0].mxu0
    %v3761 = vadd.f32 0.0, %v3760
    %v3762 = vpop.f32.mrb[0].mxu0
    %3763 = vdwg.mxu0
    %v3764 = vadd.f32 %v3664, %v3758
    %v3765 = vadd.f32 %v3664, %v3761
    %v3766 = vpack.c.bf16 %v3655, %v3654
    %3767 = vrot.lane.b32.xlu0 %v3361, 88
    %v3768 = vpop.permute.xlu0 %3767
    %v3771 = vsel %vm360, %v3766, 0
    %3773 = vmatprep.subr.bf16.mxu0 0
    %3774 = vmatpush1.bf16.msra.mxu0 %v3768
    %3775 = vmatprep.subr.bf16.mxu0 0
    %3776 = vmatpush1.bf16.msra.mxu0 0
    %3777 = vmatprep.subr.bf16.mxu0 0
    %3778 = vmatpush1.bf16.msra.mxu0 0
    %3779 = vmatprep.subr.bf16.mxu0 0
    %3780 = vmatpush1.bf16.msra.mxu0 0
    %3781 = vmatprep.subr.bf16.mxu0 0
    %3782 = vmatpush1.bf16.msra.mxu0 0
    %3783 = vmatprep.subr.bf16.mxu0 0
    %3784 = vmatpush1.bf16.msra.mxu0 0
    %3785 = vmatprep.subr.bf16.mxu0 0
    %3786 = vmatpush1.bf16.msra.mxu0 0
    %3787 = vmatprep.subr.bf16.mxu0 0
    %3788 = vmatpush1.bf16.msra.mxu0 0
    %3789 = vmatprep.subr.bf16.mxu0 0
    %3790 = vmatpush1.bf16.msra.mxu0 0
    %3791 = vmatprep.subr.bf16.mxu0 0
    %3792 = vmatpush1.bf16.msra.mxu0 0
    %3793 = vmatprep.subr.bf16.mxu0 0
    %3794 = vmatpush1.bf16.msra.mxu0 0
    %3795 = vmatprep.subr.bf16.mxu0 0
    %3796 = vmatpush1.bf16.msra.mxu0 0
    %3797 = vmatprep.subr.bf16.mxu0 0
    %3798 = vmatpush1.bf16.msra.mxu0 0
    %3799 = vmatprep.subr.bf16.mxu0 0
    %3800 = vmatpush1.bf16.msra.mxu0 0
    %3801 = vmatprep.subr.bf16.mxu0 0
    %3802 = vmatpush1.bf16.msra.mxu0 0
    %3803 = vmatprep.subr.bf16.mxu0 0
    %3804 = vmatpush1.bf16.msra.mxu0 0
    %3805 = vmatprep.mubr.bf16.mxu0 0
    %3806 = vmatmul.mubr.bf16.gmra.mrb[0].mxu0 %v3771
    %v3807 = vpop.f32.mrb[0].mxu0
    %v3808 = vadd.f32 0.0, %v3807
    %v3809 = vpop.f32.mrb[0].mxu0
    %v3810 = vpop.f32.mrb[0].mxu0
    %v3811 = vadd.f32 0.0, %v3810
    %v3812 = vpop.f32.mrb[0].mxu0
    %3813 = vdwg.mxu0
    %v3814 = vpack.c.bf16 %v3811, %v3808
    %v3816 = vunpack.c.h.b16 %v2296
    %v3817 = vpack.c.b16 %v3816, %v3816
    %v3819 = vsel %vm151, %v3814, 0
    %v3822 = vsel %vm506, %v3817, 0
    %3824 = vmatprep.subr.bf16.mxu0 0
    %3825 = vmatpush1.bf16.msra.mxu0 %v3822
    %3826 = vmatprep.subr.bf16.mxu0 0
    %3827 = vmatpush1.bf16.msra.mxu0 0
    %3828 = vmatprep.subr.bf16.mxu0 0
    %3829 = vmatpush1.bf16.msra.mxu0 0
    %3830 = vmatprep.subr.bf16.mxu0 0
    %3831 = vmatpush1.bf16.msra.mxu0 0
    %3832 = vmatprep.subr.bf16.mxu0 0
    %3833 = vmatpush1.bf16.msra.mxu0 0
    %3834 = vmatprep.subr.bf16.mxu0 0
    %3835 = vmatpush1.bf16.msra.mxu0 0
    %3836 = vmatprep.subr.bf16.mxu0 0
    %3837 = vmatpush1.bf16.msra.mxu0 0
    %3838 = vmatprep.subr.bf16.mxu0 0
    %3839 = vmatpush1.bf16.msra.mxu0 0
    %3840 = vmatprep.subr.bf16.mxu0 0
    %3841 = vmatpush1.bf16.msra.mxu0 0
    %3842 = vmatprep.subr.bf16.mxu0 0
    %3843 = vmatpush1.bf16.msra.mxu0 0
    %3844 = vmatprep.subr.bf16.mxu0 0
    %3845 = vmatpush1.bf16.msra.mxu0 0
    %3846 = vmatprep.subr.bf16.mxu0 0
    %3847 = vmatpush1.bf16.msra.mxu0 0
    %3848 = vmatprep.subr.bf16.mxu0 0
    %3849 = vmatpush1.bf16.msra.mxu0 0
    %3850 = vmatprep.subr.bf16.mxu0 0
    %3851 = vmatpush1.bf16.msra.mxu0 0
    %3852 = vmatprep.subr.bf16.mxu0 0
    %3853 = vmatpush1.bf16.msra.mxu0 0
    %3854 = vmatprep.subr.bf16.mxu0 0
    %3855 = vmatpush1.bf16.msra.mxu0 0
    %3856 = vmatprep.mubr.bf16.mxu0 0
    %3857 = vmatmul.mubr.bf16.gmra.mrb[0].mxu0 %v3819
    %v3858 = vpop.f32.mrb[0].mxu0
    %v3859 = vadd.f32 0.0, %v3858
    %v3860 = vpop.f32.mrb[0].mxu0
    %v3861 = vpop.f32.mrb[0].mxu0
    %v3862 = vadd.f32 0.0, %v3861
    %v3863 = vpop.f32.mrb[0].mxu0
    %3864 = vdwg.mxu0
    %v3865 = vadd.f32 %v3764, %v3859
    %v3866 = vadd.f32 %v3765, %v3862
    %v3867 = vpack.c.bf16 %v3657, %v3656
    %3868 = vrot.lane.b32.xlu0 %v3361, 80
    %v3869 = vpop.permute.xlu0 %3868
    %v3872 = vsel %vm360, %v3867, 0
    %3874 = vmatprep.subr.bf16.mxu0 0
    %3875 = vmatpush1.bf16.msra.mxu0 %v3869
    %3876 = vmatprep.subr.bf16.mxu0 0
    %3877 = vmatpush1.bf16.msra.mxu0 0
    %3878 = vmatprep.subr.bf16.mxu0 0
    %3879 = vmatpush1.bf16.msra.mxu0 0
    %3880 = vmatprep.subr.bf16.mxu0 0
    %3881 = vmatpush1.bf16.msra.mxu0 0
    %3882 = vmatprep.subr.bf16.mxu0 0
    %3883 = vmatpush1.bf16.msra.mxu0 0
    %3884 = vmatprep.subr.bf16.mxu0 0
    %3885 = vmatpush1.bf16.msra.mxu0 0
    %3886 = vmatprep.subr.bf16.mxu0 0
    %3887 = vmatpush1.bf16.msra.mxu0 0
    %3888 = vmatprep.subr.bf16.mxu0 0
    %3889 = vmatpush1.bf16.msra.mxu0 0
    %3890 = vmatprep.subr.bf16.mxu0 0
    %3891 = vmatpush1.bf16.msra.mxu0 0
    %3892 = vmatprep.subr.bf16.mxu0 0
    %3893 = vmatpush1.bf16.msra.mxu0 0
    %3894 = vmatprep.subr.bf16.mxu0 0
    %3895 = vmatpush1.bf16.msra.mxu0 0
    %3896 = vmatprep.subr.bf16.mxu0 0
    %3897 = vmatpush1.bf16.msra.mxu0 0
    %3898 = vmatprep.subr.bf16.mxu0 0
    %3899 = vmatpush1.bf16.msra.mxu0 0
    %3900 = vmatprep.subr.bf16.mxu0 0
    %3901 = vmatpush1.bf16.msra.mxu0 0
    %3902 = vmatprep.subr.bf16.mxu0 0
    %3903 = vmatpush1.bf16.msra.mxu0 0
    %3904 = vmatprep.subr.bf16.mxu0 0
    %3905 = vmatpush1.bf16.msra.mxu0 0
    %3906 = vmatprep.mubr.bf16.mxu0 0
    %3907 = vmatmul.mubr.bf16.gmra.mrb[0].mxu0 %v3872
    %v3908 = vpop.f32.mrb[0].mxu0
    %v3909 = vadd.f32 0.0, %v3908
    %v3910 = vpop.f32.mrb[0].mxu0
    %v3911 = vpop.f32.mrb[0].mxu0
    %v3912 = vadd.f32 0.0, %v3911
    %v3913 = vpop.f32.mrb[0].mxu0
    %3914 = vdwg.mxu0
    %v3915 = vpack.c.bf16 %v3912, %v3909
    %v3917 = vunpack.c.h.b16 %v2301
    %v3918 = vpack.c.b16 %v3917, %v3917
    %v3920 = vsel %vm151, %v3915, 0
    %v3923 = vsel %vm506, %v3918, 0
    %3925 = vmatprep.subr.bf16.mxu0 0
    %3926 = vmatpush1.bf16.msra.mxu0 %v3923
    %3927 = vmatprep.subr.bf16.mxu0 0
    %3928 = vmatpush1.bf16.msra.mxu0 0
    %3929 = vmatprep.subr.bf16.mxu0 0
    %3930 = vmatpush1.bf16.msra.mxu0 0
    %3931 = vmatprep.subr.bf16.mxu0 0
    %3932 = vmatpush1.bf16.msra.mxu0 0
    %3933 = vmatprep.subr.bf16.mxu0 0
    %3934 = vmatpush1.bf16.msra.mxu0 0
    %3935 = vmatprep.subr.bf16.mxu0 0
    %3936 = vmatpush1.bf16.msra.mxu0 0
    %3937 = vmatprep.subr.bf16.mxu0 0
    %3938 = vmatpush1.bf16.msra.mxu0 0
    %3939 = vmatprep.subr.bf16.mxu0 0
    %3940 = vmatpush1.bf16.msra.mxu0 0
    %3941 = vmatprep.subr.bf16.mxu0 0
    %3942 = vmatpush1.bf16.msra.mxu0 0
    %3943 = vmatprep.subr.bf16.mxu0 0
    %3944 = vmatpush1.bf16.msra.mxu0 0
    %3945 = vmatprep.subr.bf16.mxu0 0
    %3946 = vmatpush1.bf16.msra.mxu0 0
    %3947 = vmatprep.subr.bf16.mxu0 0
    %3948 = vmatpush1.bf16.msra.mxu0 0
    %3949 = vmatprep.subr.bf16.mxu0 0
    %3950 = vmatpush1.bf16.msra.mxu0 0
    %3951 = vmatprep.subr.bf16.mxu0 0
    %3952 = vmatpush1.bf16.msra.mxu0 0
    %3953 = vmatprep.subr.bf16.mxu0 0
    %3954 = vmatpush1.bf16.msra.mxu0 0
    %3955 = vmatprep.subr.bf16.mxu0 0
    %3956 = vmatpush1.bf16.msra.mxu0 0
    %3957 = vmatprep.mubr.bf16.mxu0 0
    %3958 = vmatmul.mubr.bf16.gmra.mrb[0].mxu0 %v3920
    %v3959 = vpop.f32.mrb[0].mxu0
    %v3960 = vadd.f32 0.0, %v3959
    %v3961 = vpop.f32.mrb[0].mxu0
    %v3962 = vpop.f32.mrb[0].mxu0
    %v3963 = vadd.f32 0.0, %v3962
    %v3964 = vpop.f32.mrb[0].mxu0
    %3965 = vdwg.mxu0
    %v3966 = vadd.f32 %v3865, %v3960
    %v3967 = vadd.f32 %v3866, %v3963
    %v3968 = vpack.c.bf16 %v3659, %v3658
    %3969 = vrot.lane.b32.xlu0 %v3361, 72
    %v3970 = vpop.permute.xlu0 %3969
    %v3973 = vsel %vm360, %v3968, 0
    %3975 = vmatprep.subr.bf16.mxu0 0
    %3976 = vmatpush1.bf16.msra.mxu0 %v3970
    %3977 = vmatprep.subr.bf16.mxu0 0
    %3978 = vmatpush1.bf16.msra.mxu0 0
    %3979 = vmatprep.subr.bf16.mxu0 0
    %3980 = vmatpush1.bf16.msra.mxu0 0
    %3981 = vmatprep.subr.bf16.mxu0 0
    %3982 = vmatpush1.bf16.msra.mxu0 0
    %3983 = vmatprep.subr.bf16.mxu0 0
    %3984 = vmatpush1.bf16.msra.mxu0 0
    %3985 = vmatprep.subr.bf16.mxu0 0
    %3986 = vmatpush1.bf16.msra.mxu0 0
    %3987 = vmatprep.subr.bf16.mxu0 0
    %3988 = vmatpush1.bf16.msra.mxu0 0
    %3989 = vmatprep.subr.bf16.mxu0 0
    %3990 = vmatpush1.bf16.msra.mxu0 0
    %3991 = vmatprep.subr.bf16.mxu0 0
    %3992 = vmatpush1.bf16.msra.mxu0 0
    %3993 = vmatprep.subr.bf16.mxu0 0
    %3994 = vmatpush1.bf16.msra.mxu0 0
    %3995 = vmatprep.subr.bf16.mxu0 0
    %3996 = vmatpush1.bf16.msra.mxu0 0
    %3997 = vmatprep.subr.bf16.mxu0 0
    %3998 = vmatpush1.bf16.msra.mxu0 0
    %3999 = vmatprep.subr.bf16.mxu0 0
    %4000 = vmatpush1.bf16.msra.mxu0 0
    %4001 = vmatprep.subr.bf16.mxu0 0
    %4002 = vmatpush1.bf16.msra.mxu0 0
    %4003 = vmatprep.subr.bf16.mxu0 0
    %4004 = vmatpush1.bf16.msra.mxu0 0
    %4005 = vmatprep.subr.bf16.mxu0 0
    %4006 = vmatpush1.bf16.msra.mxu0 0
    %4007 = vmatprep.mubr.bf16.mxu0 0
    %4008 = vmatmul.mubr.bf16.gmra.mrb[0].mxu0 %v3973
    %v4009 = vpop.f32.mrb[0].mxu0
    %v4010 = vadd.f32 0.0, %v4009
    %v4011 = vpop.f32.mrb[0].mxu0
    %v4012 = vpop.f32.mrb[0].mxu0
    %v4013 = vadd.f32 0.0, %v4012
    %v4014 = vpop.f32.mrb[0].mxu0
    %4015 = vdwg.mxu0
    %v4016 = vpack.c.bf16 %v4013, %v4010
    %v4018 = vunpack.c.h.b16 %v2306
    %v4019 = vpack.c.b16 %v4018, %v4018
    %v4021 = vsel %vm151, %v4016, 0
    %v4024 = vsel %vm506, %v4019, 0
    %4026 = vmatprep.subr.bf16.mxu0 0
    %4027 = vmatpush1.bf16.msra.mxu0 %v4024
    %4028 = vmatprep.subr.bf16.mxu0 0
    %4029 = vmatpush1.bf16.msra.mxu0 0
    %4030 = vmatprep.subr.bf16.mxu0 0
    %4031 = vmatpush1.bf16.msra.mxu0 0
    %4032 = vmatprep.subr.bf16.mxu0 0
    %4033 = vmatpush1.bf16.msra.mxu0 0
    %4034 = vmatprep.subr.bf16.mxu0 0
    %4035 = vmatpush1.bf16.msra.mxu0 0
    %4036 = vmatprep.subr.bf16.mxu0 0
    %4037 = vmatpush1.bf16.msra.mxu0 0
    %4038 = vmatprep.subr.bf16.mxu0 0
    %4039 = vmatpush1.bf16.msra.mxu0 0
    %4040 = vmatprep.subr.bf16.mxu0 0
    %4041 = vmatpush1.bf16.msra.mxu0 0
    %4042 = vmatprep.subr.bf16.mxu0 0
    %4043 = vmatpush1.bf16.msra.mxu0 0
    %4044 = vmatprep.subr.bf16.mxu0 0
    %4045 = vmatpush1.bf16.msra.mxu0 0
    %4046 = vmatprep.subr.bf16.mxu0 0
    %4047 = vmatpush1.bf16.msra.mxu0 0
    %4048 = vmatprep.subr.bf16.mxu0 0
    %4049 = vmatpush1.bf16.msra.mxu0 0
    %4050 = vmatprep.subr.bf16.mxu0 0
    %4051 = vmatpush1.bf16.msra.mxu0 0
    %4052 = vmatprep.subr.bf16.mxu0 0
    %4053 = vmatpush1.bf16.msra.mxu0 0
    %4054 = vmatprep.subr.bf16.mxu0 0
    %4055 = vmatpush1.bf16.msra.mxu0 0
    %4056 = vmatprep.subr.bf16.mxu0 0
    %4057 = vmatpush1.bf16.msra.mxu0 0
    %4058 = vmatprep.mubr.bf16.mxu0 0
    %4059 = vmatmul.mubr.bf16.gmra.mrb[0].mxu0 %v4021
    %v4060 = vpop.f32.mrb[0].mxu0
    %v4061 = vadd.f32 0.0, %v4060
    %v4062 = vpop.f32.mrb[0].mxu0
    %v4063 = vpop.f32.mrb[0].mxu0
    %v4064 = vadd.f32 0.0, %v4063
    %v4065 = vpop.f32.mrb[0].mxu0
    %4066 = vdwg.mxu0
    %v4067 = vadd.f32 %v3966, %v4061
    %v4068 = vadd.f32 %v3967, %v4064
    %v4069 = vpack.c.bf16 %v4068, %v4067
    %v4070 = vlaneseq
    %v4071 = vshrl.u32 %v4070, 7
    %v4072 = vsub.s32 7, %v4071
    %v4073 = vrot.slane %v2326, %v4072
    %v4074 = vunpack.c.h.b16 %v2292
    %v4075 = vunpack.c.h.b16 %v2297
    %v4076 = vunpack.c.h.b16 %v2302
    %v4077 = vunpack.c.h.b16 %v2307
    %v4078 = vpack.c.b16 %v4075, %v4074
    %v4079 = vpack.c.b16 %v4077, %v4076
    %v4083 = vsel %vm102, %v4069, 0
    %4085 = vmatprep.subr.bf16.mxu0 0
    %4086 = vmatpush1.bf16.msra.mxu0 %v4078
    %4087 = vmatprep.subr.bf16.mxu0 0
    %4088 = vmatpush1.bf16.msra.mxu0 %v4079
    %4089 = vmatprep.subr.bf16.mxu0 0
    %4090 = vmatpush1.bf16.msra.mxu0 0
    %4091 = vmatprep.subr.bf16.mxu0 0
    %4092 = vmatpush1.bf16.msra.mxu0 0
    %4093 = vmatprep.subr.bf16.mxu0 0
    %4094 = vmatpush1.bf16.msra.mxu0 0
    %4095 = vmatprep.subr.bf16.mxu0 0
    %4096 = vmatpush1.bf16.msra.mxu0 0
    %4097 = vmatprep.subr.bf16.mxu0 0
    %4098 = vmatpush1.bf16.msra.mxu0 0
    %4099 = vmatprep.subr.bf16.mxu0 0
    %4100 = vmatpush1.bf16.msra.mxu0 0
    %4101 = vmatprep.subr.bf16.mxu0 0
    %4102 = vmatpush1.bf16.msra.mxu0 0
    %4103 = vmatprep.subr.bf16.mxu0 0
    %4104 = vmatpush1.bf16.msra.mxu0 0
    %4105 = vmatprep.subr.bf16.mxu0 0
    %4106 = vmatpush1.bf16.msra.mxu0 0
    %4107 = vmatprep.subr.bf16.mxu0 0
    %4108 = vmatpush1.bf16.msra.mxu0 0
    %4109 = vmatprep.subr.bf16.mxu0 0
    %4110 = vmatpush1.bf16.msra.mxu0 0
    %4111 = vmatprep.subr.bf16.mxu0 0
    %4112 = vmatpush1.bf16.msra.mxu0 0
    %4113 = vmatprep.subr.bf16.mxu0 0
    %4114 = vmatpush1.bf16.msra.mxu0 0
    %4115 = vmatprep.subr.bf16.mxu0 0
    %4116 = vmatpush1.bf16.msra.mxu0 0
    %4117 = vmatprep.mubr.bf16.mxu0 0
    %4118 = vmatmul.mubr.bf16.gmra.mrb[0].mxu0 %v4083
    %v4119 = vpop.f32.mrb[0].mxu0
    %v4120 = vadd.f32 %v4073, %v4119
    %v4121 = vpop.f32.mrb[0].mxu0
    %v4122 = vpop.f32.mrb[0].mxu0
    %v4123 = vadd.f32 %v4073, %v4122
    %v4124 = vpop.f32.mrb[0].mxu0
    %4125 = vdwg.mxu0
    %v4126 = vmax.f32 %v4120, 0.0
    %v4127 = vmax.f32 %v4123, 0.0
    %v4128 = vpack.c.bf16 %v4127, %v4126
    %v4129 = vlaneseq
    %v4130 = vshrl.u32 %v4129, 7
    %v4131 = vsub.s32 0, %v4130
    %v4132 = vrot.slane %v2327, %v4131
    %v4135 = vunpack.c.l.b16 %v2320
    %v4136 = vunpack.c.l.b16 %v2321
    %v4137 = vpack.c.b16 %v4136, %v4135
    %v4140 = vsel %vm360, %v4128, 0
    %4142 = vmatprep.subr.bf16.mxu0 0
    %4143 = vmatpush1.bf16.msra.mxu0 %v4137
    %4144 = vmatprep.subr.bf16.mxu0 0
    %4145 = vmatpush1.bf16.msra.mxu0 0
    %4146 = vmatprep.subr.bf16.mxu0 0
    %4147 = vmatpush1.bf16.msra.mxu0 0
    %4148 = vmatprep.subr.bf16.mxu0 0
    %4149 = vmatpush1.bf16.msra.mxu0 0
    %4150 = vmatprep.subr.bf16.mxu0 0
    %4151 = vmatpush1.bf16.msra.mxu0 0
    %4152 = vmatprep.subr.bf16.mxu0 0
    %4153 = vmatpush1.bf16.msra.mxu0 0
    %4154 = vmatprep.subr.bf16.mxu0 0
    %4155 = vmatpush1.bf16.msra.mxu0 0
    %4156 = vmatprep.subr.bf16.mxu0 0
    %4157 = vmatpush1.bf16.msra.mxu0 0
    %4158 = vmatprep.subr.bf16.mxu0 0
    %4159 = vmatpush1.bf16.msra.mxu0 0
    %4160 = vmatprep.subr.bf16.mxu0 0
    %4161 = vmatpush1.bf16.msra.mxu0 0
    %4162 = vmatprep.subr.bf16.mxu0 0
    %4163 = vmatpush1.bf16.msra.mxu0 0
    %4164 = vmatprep.subr.bf16.mxu0 0
    %4165 = vmatpush1.bf16.msra.mxu0 0
    %4166 = vmatprep.subr.bf16.mxu0 0
    %4167 = vmatpush1.bf16.msra.mxu0 0
    %4168 = vmatprep.subr.bf16.mxu0 0
    %4169 = vmatpush1.bf16.msra.mxu0 0
    %4170 = vmatprep.subr.bf16.mxu0 0
    %4171 = vmatpush1.bf16.msra.mxu0 0
    %4172 = vmatprep.subr.bf16.mxu0 0
    %4173 = vmatpush1.bf16.msra.mxu0 0
    %4174 = vmatprep.mubr.bf16.mxu0 0
    %4175 = vmatmul.mubr.bf16.gmra.mrb[0].mxu0 %v4140
    %v4176 = vpop.f32.mrb[0].mxu0
    %v4177 = vadd.f32 %v4132, %v4176
    %v4178 = vpop.f32.mrb[0].mxu0
    %v4179 = vpop.f32.mrb[0].mxu0
    %v4180 = vadd.f32 %v4132, %v4179
    %v4181 = vpop.f32.mrb[0].mxu0
    %4182 = vdwg.mxu0
    %v4183 = vadd.f32 %v4177, %v4067
    %v4184 = vadd.f32 %v4180, %v4068
    %v4185 = vadd.f32 %v3244, %v4183
    %v4186 = vadd.f32 %v3245, %v4184
    %v4187 = vsel %vm102, %v4185, 0.0
    %4188 = vadd.xlane.f32.xlu0 %v4187
    %v4189 = vpop.xlane.xlu0 %4188
    %v4190 = vsel %vm102, %v4186, 0.0
    %4191 = vadd.xlane.f32.xlu0 %v4190
    %v4192 = vpop.xlane.xlu0 %4191
    %v4193 = vmul.f32 %v4189, %v975
    %v4194 = vmul.f32 %v4192, %v975
    %v4195 = vsub.f32 %v4185, %v4193
    %v4196 = vsub.f32 %v4186, %v4194
    %v4197 = vmul.f32 %v4195, %v4195
    %v4198 = vmul.f32 %v4196, %v4196
    %v4199 = vsel %vm102, %v4197, 0.0
    %4200 = vadd.xlane.f32.xlu0 %v4199
    %v4201 = vpop.xlane.xlu0 %4200
    %v4202 = vsel %vm102, %v4198, 0.0
    %4203 = vadd.xlane.f32.xlu0 %v4202
    %v4204 = vpop.xlane.xlu0 %4203
    %v4205 = vmul.f32 %v4201, %v975
    %v4206 = vmul.f32 %v4204, %v975
    %v4207 = vadd.f32 %v4205, 1e-05
    %v4208 = vadd.f32 %v4206, 1e-05
    %v4209 = vrsqrt.pop %v4207
    %v4210 = vrsqrt.pop %v4208
    %v4211 = vmul.f32 %v4195, %v4209
    %v4212 = vmul.f32 %v4196, %v4210
    %v4213 = vlaneseq
    %v4214 = vshrl.u32 %v4213, 7
    %v4215 = vsub.s32 1, %v4214
    %v4216 = vrot.slane %v2326, %v4215
    %v4217 = vmul.f32 %v4211, %v4216
    %v4218 = vmul.f32 %v4212, %v4216
    %v4219 = vlaneseq
    %v4220 = vshrl.u32 %v4219, 7
    %v4221 = vsub.s32 2, %v4220
    %v4222 = vrot.slane %v2326, %v4221
    %v4223 = vadd.f32 %v4217, %v4222
    %v4224 = vadd.f32 %v4218, %v4222
    %v4225 = vpack.c.bf16 %v4224, %v4223
    %v4226 = vlaneseq
    %v4227 = vshrl.u32 %v4226, 7
    %v4228 = vsub.s32 3, %v4227
    %v4229 = vrot.slane %v2325, %v4228
    %v4230 = vunpack.c.h.b16 %v2290
    %v4231 = vunpack.c.h.b16 %v2295
    %v4232 = vunpack.c.h.b16 %v2300
    %v4233 = vunpack.c.h.b16 %v2305
    %v4234 = vpack.c.b16 %v4231, %v4230
    %v4235 = vpack.c.b16 %v4233, %v4232
    %v4239 = vsel %vm102, %v4225, 0
    %4241 = vmatprep.subr.bf16.mxu0 0
    %4242 = vmatpush1.bf16.msra.mxu0 %v4234
    %4243 = vmatprep.subr.bf16.mxu0 0
    %4244 = vmatpush1.bf16.msra.mxu0 %v4235
    %4245 = vmatprep.subr.bf16.mxu0 0
    %4246 = vmatpush1.bf16.msra.mxu0 0
    %4247 = vmatprep.subr.bf16.mxu0 0
    %4248 = vmatpush1.bf16.msra.mxu0 0
    %4249 = vmatprep.subr.bf16.mxu0 0
    %4250 = vmatpush1.bf16.msra.mxu0 0
    %4251 = vmatprep.subr.bf16.mxu0 0
    %4252 = vmatpush1.bf16.msra.mxu0 0
    %4253 = vmatprep.subr.bf16.mxu0 0
    %4254 = vmatpush1.bf16.msra.mxu0 0
    %4255 = vmatprep.subr.bf16.mxu0 0
    %4256 = vmatpush1.bf16.msra.mxu0 0
    %4257 = vmatprep.subr.bf16.mxu0 0
    %4258 = vmatpush1.bf16.msra.mxu0 0
    %4259 = vmatprep.subr.bf16.mxu0 0
    %4260 = vmatpush1.bf16.msra.mxu0 0
    %4261 = vmatprep.subr.bf16.mxu0 0
    %4262 = vmatpush1.bf16.msra.mxu0 0
    %4263 = vmatprep.subr.bf16.mxu0 0
    %4264 = vmatpush1.bf16.msra.mxu0 0
    %4265 = vmatprep.subr.bf16.mxu0 0
    %4266 = vmatpush1.bf16.msra.mxu0 0
    %4267 = vmatprep.subr.bf16.mxu0 0
    %4268 = vmatpush1.bf16.msra.mxu0 0
    %4269 = vmatprep.subr.bf16.mxu0 0
    %4270 = vmatpush1.bf16.msra.mxu0 0
    %4271 = vmatprep.subr.bf16.mxu0 0
    %4272 = vmatpush1.bf16.msra.mxu0 0
    %4273 = vmatprep.mubr.bf16.mxu0 0
    %4274 = vmatmul.mubr.bf16.gmra.mrb[0].mxu0 %v4239
    %v4275 = vpop.f32.mrb[0].mxu0
    %v4276 = vadd.f32 %v4229, %v4275
    %v4277 = vpop.f32.mrb[0].mxu0
    %v4278 = vpop.f32.mrb[0].mxu0
    %v4279 = vadd.f32 %v4229, %v4278
    %v4280 = vpop.f32.mrb[0].mxu0
    %4281 = vdwg.mxu0
    %v4282 = vmax.f32 %v4276, 0.0
    %v4283 = vmax.f32 %v4279, 0.0
    %v4284 = vpack.c.bf16 %v4283, %v4282
    %v4285 = vlaneseq
    %v4286 = vshrl.u32 %v4285, 7
    %v4287 = vsub.s32 6, %v4286
    %v4288 = vrot.slane %v2325, %v4287
    %v4297 = vunpack.c.l.b16 %v2310
    %v4298 = vunpack.c.l.b16 %v2311
    %v4299 = vunpack.c.l.b16 %v2312
    %v4300 = vunpack.c.l.b16 %v2313
    %v4301 = vunpack.c.l.b16 %v2314
    %v4302 = vunpack.c.l.b16 %v2315
    %v4303 = vunpack.c.l.b16 %v2316
    %v4304 = vunpack.c.l.b16 %v2317
    %v4305 = vpack.c.b16 %v4298, %v4297
    %v4306 = vpack.c.b16 %v4300, %v4299
    %v4307 = vpack.c.b16 %v4302, %v4301
    %v4308 = vpack.c.b16 %v4304, %v4303
    %v4314 = vsel %vm2083, %v4284, 0
    %4316 = vmatprep.subr.bf16.mxu0 0
    %4317 = vmatpush1.bf16.msra.mxu0 %v4305
    %4318 = vmatprep.subr.bf16.mxu0 0
    %4319 = vmatpush1.bf16.msra.mxu0 %v4306
    %4320 = vmatprep.subr.bf16.mxu0 0
    %4321 = vmatpush1.bf16.msra.mxu0 %v4307
    %4322 = vmatprep.subr.bf16.mxu0 0
    %4323 = vmatpush1.bf16.msra.mxu0 %v4308
    %4324 = vmatprep.subr.bf16.mxu0 0
    %4325 = vmatpush1.bf16.msra.mxu0 0
    %4326 = vmatprep.subr.bf16.mxu0 0
    %4327 = vmatpush1.bf16.msra.mxu0 0
    %4328 = vmatprep.subr.bf16.mxu0 0
    %4329 = vmatpush1.bf16.msra.mxu0 0
    %4330 = vmatprep.subr.bf16.mxu0 0
    %4331 = vmatpush1.bf16.msra.mxu0 0
    %4332 = vmatprep.subr.bf16.mxu0 0
    %4333 = vmatpush1.bf16.msra.mxu0 0
    %4334 = vmatprep.subr.bf16.mxu0 0
    %4335 = vmatpush1.bf16.msra.mxu0 0
    %4336 = vmatprep.subr.bf16.mxu0 0
    %4337 = vmatpush1.bf16.msra.mxu0 0
    %4338 = vmatprep.subr.bf16.mxu0 0
    %4339 = vmatpush1.bf16.msra.mxu0 0
    %4340 = vmatprep.subr.bf16.mxu0 0
    %4341 = vmatpush1.bf16.msra.mxu0 0
    %4342 = vmatprep.subr.bf16.mxu0 0
    %4343 = vmatpush1.bf16.msra.mxu0 0
    %4344 = vmatprep.subr.bf16.mxu0 0
    %4345 = vmatpush1.bf16.msra.mxu0 0
    %4346 = vmatprep.subr.bf16.mxu0 0
    %4347 = vmatpush1.bf16.msra.mxu0 0
    %4348 = vmatprep.mubr.bf16.mxu0 0
    %4349 = vmatmul.mubr.bf16.gmra.mrb[0].mxu0 %v4314
    %v4350 = vpop.f32.mrb[0].mxu0
    %v4351 = vadd.f32 %v4288, %v4350
    %v4352 = vpop.f32.mrb[0].mxu0
    %v4353 = vpop.f32.mrb[0].mxu0
    %v4354 = vadd.f32 %v4288, %v4353
    %v4355 = vpop.f32.mrb[0].mxu0
    %4356 = vdwg.mxu0
    %v4357 = vpack.c.bf16 %v4354, %v4351
    %v4358 = vlaneseq
    %v4359 = vshrl.u32 %v4358, 7
    %v4360 = vsub.s32 1, %v4359
    %v4361 = vrot.slane %v2327, %v4360
    %v4366 = vunpack.c.l.b16 %v2293
    %v4367 = vunpack.c.l.b16 %v2298
    %v4368 = vunpack.c.l.b16 %v2303
    %v4369 = vunpack.c.l.b16 %v2308
    %v4370 = vpack.c.b16 %v4367, %v4366
    %v4371 = vpack.c.b16 %v4369, %v4368
    %v4375 = vsel %vm102, %v4357, 0
    %4377 = vmatprep.subr.bf16.mxu0 0
    %4378 = vmatpush1.bf16.msra.mxu0 %v4370
    %4379 = vmatprep.subr.bf16.mxu0 0
    %4380 = vmatpush1.bf16.msra.mxu0 %v4371
    %4381 = vmatprep.subr.bf16.mxu0 0
    %4382 = vmatpush1.bf16.msra.mxu0 0
    %4383 = vmatprep.subr.bf16.mxu0 0
    %4384 = vmatpush1.bf16.msra.mxu0 0
    %4385 = vmatprep.subr.bf16.mxu0 0
    %4386 = vmatpush1.bf16.msra.mxu0 0
    %4387 = vmatprep.subr.bf16.mxu0 0
    %4388 = vmatpush1.bf16.msra.mxu0 0
    %4389 = vmatprep.subr.bf16.mxu0 0
    %4390 = vmatpush1.bf16.msra.mxu0 0
    %4391 = vmatprep.subr.bf16.mxu0 0
    %4392 = vmatpush1.bf16.msra.mxu0 0
    %4393 = vmatprep.subr.bf16.mxu0 0
    %4394 = vmatpush1.bf16.msra.mxu0 0
    %4395 = vmatprep.subr.bf16.mxu0 0
    %4396 = vmatpush1.bf16.msra.mxu0 0
    %4397 = vmatprep.subr.bf16.mxu0 0
    %4398 = vmatpush1.bf16.msra.mxu0 0
    %4399 = vmatprep.subr.bf16.mxu0 0
    %4400 = vmatpush1.bf16.msra.mxu0 0
    %4401 = vmatprep.subr.bf16.mxu0 0
    %4402 = vmatpush1.bf16.msra.mxu0 0
    %4403 = vmatprep.subr.bf16.mxu0 0
    %4404 = vmatpush1.bf16.msra.mxu0 0
    %4405 = vmatprep.subr.bf16.mxu0 0
    %4406 = vmatpush1.bf16.msra.mxu0 0
    %4407 = vmatprep.subr.bf16.mxu0 0
    %4408 = vmatpush1.bf16.msra.mxu0 0
    %4409 = vmatprep.mubr.bf16.mxu0 0
    %4410 = vmatmul.mubr.bf16.gmra.mrb[0].mxu0 %v4375
    %v4411 = vpop.f32.mrb[0].mxu0
    %v4412 = vadd.f32 %v4361, %v4411
    %v4413 = vpop.f32.mrb[0].mxu0
    %v4414 = vpop.f32.mrb[0].mxu0
    %v4415 = vadd.f32 %v4361, %v4414
    %v4416 = vpop.f32.mrb[0].mxu0
    %4417 = vdwg.mxu0
    %v4418 = vmax.f32 %v4412, 0.0
    %v4419 = vmax.f32 %v4415, 0.0
    %v4420 = vpack.c.bf16 %v4419, %v4418
    %v4421 = vlaneseq
    %v4422 = vshrl.u32 %v4421, 7
    %v4423 = vsub.s32 2, %v4422
    %v4424 = vrot.slane %v2327, %v4423
    %v4427 = vunpack.c.l.b16 %v2322
    %v4428 = vunpack.c.l.b16 %v2323
    %v4429 = vpack.c.b16 %v4428, %v4427
    %v4432 = vsel %vm360, %v4420, 0
    %4434 = vmatprep.subr.bf16.mxu0 0
    %4435 = vmatpush1.bf16.msra.mxu0 %v4429
    %4436 = vmatprep.subr.bf16.mxu0 0
    %4437 = vmatpush1.bf16.msra.mxu0 0
    %4438 = vmatprep.subr.bf16.mxu0 0
    %4439 = vmatpush1.bf16.msra.mxu0 0
    %4440 = vmatprep.subr.bf16.mxu0 0
    %4441 = vmatpush1.bf16.msra.mxu0 0
    %4442 = vmatprep.subr.bf16.mxu0 0
    %4443 = vmatpush1.bf16.msra.mxu0 0
    %4444 = vmatprep.subr.bf16.mxu0 0
    %4445 = vmatpush1.bf16.msra.mxu0 0
    %4446 = vmatprep.subr.bf16.mxu0 0
    %4447 = vmatpush1.bf16.msra.mxu0 0
    %4448 = vmatprep.subr.bf16.mxu0 0
    %4449 = vmatpush1.bf16.msra.mxu0 0
    %4450 = vmatprep.subr.bf16.mxu0 0
    %4451 = vmatpush1.bf16.msra.mxu0 0
    %4452 = vmatprep.subr.bf16.mxu0 0
    %4453 = vmatpush1.bf16.msra.mxu0 0
    %4454 = vmatprep.subr.bf16.mxu0 0
    %4455 = vmatpush1.bf16.msra.mxu0 0
    %4456 = vmatprep.subr.bf16.mxu0 0
    %4457 = vmatpush1.bf16.msra.mxu0 0
    %4458 = vmatprep.subr.bf16.mxu0 0
    %4459 = vmatpush1.bf16.msra.mxu0 0
    %4460 = vmatprep.subr.bf16.mxu0 0
    %4461 = vmatpush1.bf16.msra.mxu0 0
    %4462 = vmatprep.subr.bf16.mxu0 0
    %4463 = vmatpush1.bf16.msra.mxu0 0
    %4464 = vmatprep.subr.bf16.mxu0 0
    %4465 = vmatpush1.bf16.msra.mxu0 0
    %4466 = vmatprep.mubr.bf16.mxu0 0
    %4467 = vmatmul.mubr.bf16.gmra.mrb[0].mxu0 %v4432
    %v4468 = vpop.f32.mrb[0].mxu0
    %v4469 = vadd.f32 %v4424, %v4468
    %v4470 = vpop.f32.mrb[0].mxu0
    %v4471 = vpop.f32.mrb[0].mxu0
    %v4472 = vadd.f32 %v4424, %v4471
    %v4473 = vpop.f32.mrb[0].mxu0
    %4474 = vdwg.mxu0
    %v4475 = vadd.f32 %v4469, %v4351
    %v4476 = vadd.f32 %v4472, %v4354
    %v4477 = vadd.f32 %v4223, %v4475
    %v4478 = vadd.f32 %v4224, %v4476
    %v4479 = vsel %vm102, %v4477, 0.0
    %4480 = vadd.xlane.f32.xlu0 %v4479
    %v4481 = vpop.xlane.xlu0 %4480
    %v4482 = vsel %vm102, %v4478, 0.0
    %4483 = vadd.xlane.f32.xlu0 %v4482
    %v4484 = vpop.xlane.xlu0 %4483
    %v4485 = vmul.f32 %v4481, %v975
    %v4486 = vmul.f32 %v4484, %v975
    %v4487 = vsub.f32 %v4477, %v4485
    %v4488 = vsub.f32 %v4478, %v4486
    %v4489 = vmul.f32 %v4487, %v4487
    %v4490 = vmul.f32 %v4488, %v4488
    %v4491 = vsel %vm102, %v4489, 0.0
    %4492 = vadd.xlane.f32.xlu0 %v4491
    %v4493 = vpop.xlane.xlu0 %4492
    %v4494 = vsel %vm102, %v4490, 0.0
    %4495 = vadd.xlane.f32.xlu0 %v4494
    %v4496 = vpop.xlane.xlu0 %4495
    %v4497 = vmul.f32 %v4493, %v975
    %v4498 = vmul.f32 %v4496, %v975
    %v4499 = vadd.f32 %v4497, 1e-05
    %v4500 = vadd.f32 %v4498, 1e-05
    %v4501 = vrsqrt.pop %v4499
    %v4502 = vrsqrt.pop %v4500
    %v4503 = vmul.f32 %v4487, %v4501
    %v4504 = vmul.f32 %v4488, %v4502
    %v4505 = vlaneseq
    %v4506 = vshrl.u32 %v4505, 7
    %v4507 = vsub.s32 3, %v4506
    %v4508 = vrot.slane %v2326, %v4507
    %v4509 = vmul.f32 %v4503, %v4508
    %v4510 = vmul.f32 %v4504, %v4508
    %v4511 = vlaneseq
    %v4512 = vshrl.u32 %v4511, 7
    %v4513 = vsub.s32 4, %v4512
    %v4514 = vrot.slane %v2326, %v4513
    %v4515 = vadd.f32 %v4509, %v4514
    %v4516 = vadd.f32 %v4510, %v4514
    %4517 = vst.msk [vmem:[#allocation2] sm:$0xff] %vm102, %v4515
    %4518 = vst.msk [vmem:[#allocation2 + $0x8] sm:$0xff] %vm102, %v4516
    // Predicated region
    $region30: #{decoder_with_adapter.1} parent=1 // pred_check
      _
    $region31: #{decoder_with_adapter.1} parent=1 // pred_check_branch
      %4520 = sbr.rel (0) target = $region33
    $region32: #{decoder_with_adapter.1} parent=1 // pred_region
      %s4522 = ssub.s32 256, 256
      %4523 = vsyncadd [#allocation3], %s4522
      %s4524 = sshll.u32 [#allocation2], 4
      %s4525 = int_to_ptr.vmem [resolvable:$true] %s4524
      %4530 = dma.vmem_to_hbm [thread:$0]  %s4525, 256, %s7, [#allocation3], 128, 128, 8
    $region33: #{decoder_with_adapter.1} parent=1 // pred_fallthru
      _
    // Predicated region
    $region34: #{decoder_with_adapter.1} parent=1 // pred_check
      _
    $region35: #{decoder_with_adapter.1} parent=1 // pred_check_branch
      %4532 = sbr.rel (0) target = $region37
    $region36: #{decoder_with_adapter.1} parent=1 // pred_region
      %4533 = dma.done [#allocation3], 256
    $region37: #{decoder_with_adapter.1} parent=1 // pred_fallthru
      _
    %4534 = vsyncpa [#allocation3], 1

</llo_original>
